<compile_context>
chip_gen: v7x
topology: tpu7x:2x2x1
jax: 0.10.0
libtpu: 0.0.40
codegen_flags: <defaults>
</compile_context>

<pallas_src>
import functools

import numpy as np
import jax
import jax.numpy as jnp
from jax.experimental import pallas as pl
from jax.experimental.pallas import tpu as pltpu


# ----------------------------------------------------------------------------
# Host-side plan: fold each conv / conv-transpose into ONE dense matrix acting
# on the (C,H,W)-flattened activation:  y_flat = x_flat @ M^T + b_flat
# ----------------------------------------------------------------------------
def _conv_matrix(w, c_in, h_in, w_in, stride, pad):
    """Dense [Dout, Din] matrix of a Conv2d over a flattened (C,H,W) input."""
    c_out, c_in_w, kh, kw = w.shape
    assert c_in_w == c_in
    h_out = (h_in + 2 * pad - kh) // stride + 1
    w_out = (w_in + 2 * pad - kw) // stride + 1
    m = np.zeros((c_out, h_out, w_out, c_in, h_in, w_in), np.float32)
    for oh in range(h_out):
        for ky in range(kh):
            ih = oh * stride + ky - pad
            if not 0 <= ih < h_in:
                continue
            for ow in range(w_out):
                for kx in range(kw):
                    iw = ow * stride + kx - pad
                    if not 0 <= iw < w_in:
                        continue
                    m[:, oh, ow, :, ih, iw] += w[:, :, ky, kx]
    return (m.reshape(c_out * h_out * w_out, c_in * h_in * w_in),
            c_out, h_out, w_out)


def _convT_matrix(w, c_in, h_in, w_in, stride, pad, out_pad):
    """Dense [Dout, Din] matrix of a ConvTranspose2d (PyTorch semantics)."""
    c_in_w, c_out, kh, kw = w.shape
    assert c_in_w == c_in
    h_out = (h_in - 1) * stride - 2 * pad + kh + out_pad
    w_out = (w_in - 1) * stride - 2 * pad + kw + out_pad
    m = np.zeros((c_out, h_out, w_out, c_in, h_in, w_in), np.float32)
    for ih in range(h_in):
        for ky in range(kh):
            oh = ih * stride - pad + ky
            if not 0 <= oh < h_out:
                continue
            for iw in range(w_in):
                for kx in range(kw):
                    ow = iw * stride - pad + kx
                    if not 0 <= ow < w_out:
                        continue
                    m[:, oh, ow, :, ih, iw] += w[:, :, ky, kx].T  # [cout, cin]
    return (m.reshape(c_out * h_out * w_out, c_in * h_in * w_in),
            c_out, h_out, w_out)


def build_plan(params, in_shape=(3, 16, 16)):
    # (kind, name, stride, pad, output_padding, relu)
    layer_defs = [
        ("conv",  "enc1", 2, 1, 0, True),
        ("conv",  "enc2", 2, 1, 0, True),
        ("convT", "dec1", 2, 1, 1, True),
        ("convT", "dec2", 2, 1, 1, True),
        ("conv",  "out",  1, 1, 0, False),
    ]
    c, h, w = in_shape
    weights, dims, bias_rows = [], [], []
    for kind, name, s, p, op, relu in layer_defs:
        w_arr, b_arr = params[name]
        w_np = np.asarray(w_arr, np.float32)
        b_np = np.asarray(b_arr, np.float32)
        if kind == "conv":
            m, c, h_o, w_o = _conv_matrix(w_np, c, h, w, s, p)
        else:
            m, c, h_o, w_o = _convT_matrix(w_np, c, h, w, s, p, op)
        h, w = h_o, w_o
        weights.append(jnp.asarray(m.T, jnp.bfloat16))   # [Din, Dout], bf16 MXU operand
        bias_rows.append(np.repeat(b_np, h * w))          # bias per flat output index
        dims.append((c * h * w, relu))
    d_max = max(d for d, _ in dims)
    bias_slab = np.zeros((len(layer_defs), d_max), np.float32)   # one packed slab
    for l, row in enumerate(bias_rows):
        bias_slab[l, :row.shape[0]] = row
    return {
        "weights": tuple(weights),
        "bias": jnp.asarray(bias_slab),          # f32: bias add / ReLU stay in f32
        "dims": tuple(dims),
        "d_in": int(np.prod(in_shape)),
        "out_chw": (c, h, w),
    }


# ----------------------------------------------------------------------------
# Fused Pallas kernel: the whole 5-layer autoencoder in one invocation
# ----------------------------------------------------------------------------
def _fused_kernel(x_ref, w1_ref, w2_ref, w3_ref, w4_ref, w5_ref, b_ref, out_ref,
                  *, dims):
    w_refs = (w1_ref, w2_ref, w3_ref, w4_ref, w5_ref)
    x = x_ref[...]                                   # [N, 768] bf16
    acc = None
    for l, (d_out, relu) in enumerate(dims):         # 5 lane-dense MXU dots total
        acc = jnp.dot(x, w_refs[l][...], preferred_element_type=jnp.float32)
        acc = acc + b_ref[l:l + 1, 0:d_out]          # f32 bias, [1, d_out] broadcast
        if relu:
            acc = jnp.maximum(acc, 0.0)              # ReLU in f32 (safe on v5e VPU)
        if l + 1 < len(dims):
            x = acc.astype(jnp.bfloat16)             # bf16 operand for next MXU dot
    out_ref[...] = acc.astype(out_ref.dtype)         # final store: 768 lanes, unmasked


def autoencoder_forward(plan, x_nchw):
    n = x_nchw.shape[0]
    d_in = plan["d_in"]
    co, ho, wo = plan["out_chw"]
    d_out = co * ho * wo

    # NCHW -> [N, C*H*W] is a free, contiguous reshape; cast once to bf16.
    x2 = x_nchw.reshape(n, d_in).astype(jnp.bfloat16)

    operands = [x2, *plan["weights"], plan["bias"]]
    in_specs = [pl.BlockSpec((n, d_in), lambda i: (0, 0))]
    in_specs += [pl.BlockSpec(w.shape, lambda i: (0, 0)) for w in plan["weights"]]
    in_specs += [pl.BlockSpec(plan["bias"].shape, lambda i: (0, 0))]

    out = pl.pallas_call(
        functools.partial(_fused_kernel, dims=plan["dims"]),
        out_shape=jax.ShapeDtypeStruct((n, d_out), jnp.float32),
        grid=(1,),                                   # single step: no per-step overhead
        in_specs=in_specs,
        out_specs=pl.BlockSpec((n, d_out), lambda i: (0, 0)),
        compiler_params=pltpu.CompilerParams(
            dimension_semantics=("arbitrary",)),
    )(*operands)
    return out.reshape(n, co, ho, wo)                # free reshape back to NCHW


# ----------------------------------------------------------------------------
# Deterministic parameter construction (PyTorch-like fan-in uniform init)
# ----------------------------------------------------------------------------
def _init_conv(key, cout, cin, k):
    kw, kb = jax.random.split(key)
    fan_in = cin * k * k
    bound = 1.0 / jnp.sqrt(fan_in)
    w = jax.random.uniform(kw, (cout, cin, k, k), jnp.float32, -bound, bound)
    b = jax.random.uniform(kb, (cout,), jnp.float32, -bound, bound)
    return w, b


def _init_convT(key, cin, cout, k):
    kw, kb = jax.random.split(key)
    fan_in = cout * k * k
    bound = 1.0 / jnp.sqrt(fan_in)
    w = jax.random.uniform(kw, (cin, cout, k, k), jnp.float32, -bound, bound)
    b = jax.random.uniform(kb, (cout,), jnp.float32, -bound, bound)
    return w, b


def make_params(key):
    keys = jax.random.split(key, 5)
    params = {}
    # TODO(synk): the encoder is an arbitrary user module in the original code;
    # a fixed synthetic encoder (conv 3->8 s2 + ReLU, conv 8->16 s2 + ReLU) is
    # instantiated so that create_decoder(16, 4, 16) applies.
    params["enc1"] = _init_conv(keys[0], 8, 3, 3)
    params["enc2"] = _init_conv(keys[1], 16, 8, 3)
    # decoder from create_decoder(in_channels=16, input_size=4, output_size=16)
    params["dec1"] = _init_convT(keys[2], 16, 8, 3)
    params["dec2"] = _init_convT(keys[3], 8, 3, 3)
    params["out"] = _init_conv(keys[4], 3, 3, 3)
    return params


# ----------------------------------------------------------------------------
# Pure-JAX f32 reference (same math as the previously verified implementation)
# ----------------------------------------------------------------------------
def _im2col_ref(x_nhwc, k, stride, pad):
    N, H, W, C = x_nhwc.shape
    xp = jnp.pad(x_nhwc, ((0, 0), (pad, pad), (pad, pad), (0, 0)))
    Ho = (H + 2 * pad - k) // stride + 1
    Wo = (W + 2 * pad - k) // stride + 1
    cols = []
    for ky in range(k):
        for kx in range(k):
            cols.append(xp[:, ky:ky + stride * Ho:stride,
                           kx:kx + stride * Wo:stride, :])
    patches = jnp.concatenate(cols, axis=-1)
    return patches.reshape(N * Ho * Wo, k * k * C), (N, Ho, Wo)


def _conv2d_ref(x_nhwc, w_oihw, b, stride, pad, relu):
    Cout, Cin, kH, kW = w_oihw.shape
    patches, (N, Ho, Wo) = _im2col_ref(x_nhwc, kH, stride, pad)
    wmat = jnp.transpose(w_oihw, (2, 3, 1, 0)).reshape(kH * kW * Cin, Cout)
    y = patches @ wmat + b
    if relu:
        y = jnp.maximum(y, 0.0)
    return y.reshape(N, Ho, Wo, Cout)


def _conv_transpose2d_ref(x_nhwc, w_iohw, b, stride, pad, out_pad, relu):
    N, H, W, Cin = x_nhwc.shape
    _, Cout, kH, kW = w_iohw.shape
    Hd, Wd = (H - 1) * stride + 1, (W - 1) * stride + 1
    xd = jnp.zeros((N, Hd, Wd, Cin), x_nhwc.dtype)
    xd = xd.at[:, ::stride, ::stride, :].set(x_nhwc)
    p_lo = kH - 1 - pad
    p_hi = kH - 1 - pad + out_pad
    xp = jnp.pad(xd, ((0, 0), (p_lo, p_hi), (p_lo, p_hi), (0, 0)))
    w_conv = jnp.transpose(w_iohw[:, :, ::-1, ::-1], (1, 0, 2, 3))
    return _conv2d_ref(xp, w_conv, b, 1, 0, relu)


def autoencoder_reference(params, x_nchw):
    x = jnp.transpose(x_nchw, (0, 2, 3, 1))
    x = _conv2d_ref(x, *params["enc1"], 2, 1, True)
    x = _conv2d_ref(x, *params["enc2"], 2, 1, True)
    x = _conv_transpose2d_ref(x, *params["dec1"], 2, 1, 1, True)
    x = _conv_transpose2d_ref(x, *params["dec2"], 2, 1, 1, True)
    x = _conv2d_ref(x, *params["out"], 1, 1, False)
    return jnp.transpose(x, (0, 3, 1, 2))


if __name__ == "__main__":
    key = jax.random.PRNGKey(0)
    kparams, kdata = jax.random.split(key)
    params = make_params(kparams)
    plan = build_plan(params, in_shape=(3, 16, 16))

    x = jax.random.normal(kdata, (2, 3, 16, 16), jnp.float32)  # NCHW

    fwd = jax.jit(functools.partial(autoencoder_forward, plan))
    y = jax.block_until_ready(fwd(x))

    assert y.shape == (2, 3, 16, 16), y.shape
    assert bool(jnp.all(jnp.isfinite(y)))

    y_ref = autoencoder_reference(params, x)
    err = float(jnp.max(jnp.abs(y - y_ref)))
    assert err < 5e-2, f"max abs err vs reference: {err}"  # loose only because of bf16 MXU operands

    print("KERNEL_OK")
</pallas_src>

<mosaic_0001>
module attributes {stable_mosaic.version = 11 : i64} {
  func.func @_fused_kernel(%arg0: i32, %arg1: memref<2x768xbf16, #tpu.memory_space<vmem>>, %arg2: memref<768x512xbf16, #tpu.memory_space<vmem>>, %arg3: memref<512x256xbf16, #tpu.memory_space<vmem>>, %arg4: memref<256x512xbf16, #tpu.memory_space<vmem>>, %arg5: memref<512x768xbf16, #tpu.memory_space<vmem>>, %arg6: memref<768x768xbf16, #tpu.memory_space<vmem>>, %arg7: memref<5x768xf32, #tpu.memory_space<vmem>>, %arg8: memref<2x768xf32, #tpu.memory_space<vmem>>) attributes {dimension_semantics = [#tpu.dimension_semantics<arbitrary>], iteration_bounds = array<i64: 1>, scalar_prefetch = 0 : i64, scratch_operands = 0 : i64, tpu.core_type = #tpu.core_type<tc>, window_params = [{pipeline_mode = #tpu.pipeline_mode<synchronous>, transform_indices = @transform_0, window_bounds = array<i64: 2, 768>}, {pipeline_mode = #tpu.pipeline_mode<synchronous>, transform_indices = @transform_1, window_bounds = array<i64: 768, 512>}, {pipeline_mode = #tpu.pipeline_mode<synchronous>, transform_indices = @transform_2, window_bounds = array<i64: 512, 256>}, {pipeline_mode = #tpu.pipeline_mode<synchronous>, transform_indices = @transform_3, window_bounds = array<i64: 256, 512>}, {pipeline_mode = #tpu.pipeline_mode<synchronous>, transform_indices = @transform_4, window_bounds = array<i64: 512, 768>}, {pipeline_mode = #tpu.pipeline_mode<synchronous>, transform_indices = @transform_5, window_bounds = array<i64: 768, 768>}, {pipeline_mode = #tpu.pipeline_mode<synchronous>, transform_indices = @transform_6, window_bounds = array<i64: 5, 768>}, {pipeline_mode = #tpu.pipeline_mode<synchronous>, transform_indices = @transform_7, window_bounds = array<i64: 2, 768>}]} {
    %c0 = arith.constant 0 : index
    %c0_0 = arith.constant 0 : index
    %0 = vector.load %arg1[%c0, %c0_0] : memref<2x768xbf16, #tpu.memory_space<vmem>>, vector<2x768xbf16>
    %c0_1 = arith.constant 0 : index
    %c0_2 = arith.constant 0 : index
    %1 = vector.load %arg2[%c0_1, %c0_2] : memref<768x512xbf16, #tpu.memory_space<vmem>>, vector<768x512xbf16>
    %cst = arith.constant dense<0.000000e+00> : vector<2x512xf32>
    %2 = tpu.matmul %0, %1, %cst {dimension_numbers = #tpu.dot_dimension_numbers<[1], [0], [0], [1], [0, 0, 1, 1], [], []>} : vector<2x768xbf16>, vector<768x512xbf16>, vector<2x512xf32> -> vector<2x512xf32>
    %c0_3 = arith.constant 0 : index
    %c0_4 = arith.constant 0 : index
    %3 = vector.load %arg7[%c0_3, %c0_4] : memref<5x768xf32, #tpu.memory_space<vmem>>, vector<1x512xf32>
    %4 = vector.broadcast %3 : vector<1x512xf32> to vector<2x512xf32>
    %5 = arith.addf %2, %4 : vector<2x512xf32>
    %cst_5 = arith.constant 0.000000e+00 : f32
    %6 = vector.broadcast %cst_5 : f32 to vector<2x512xf32>
    %7 = arith.maximumf %5, %6 : vector<2x512xf32>
    %8 = arith.truncf %7 : vector<2x512xf32> to vector<2x512xbf16>
    %c0_6 = arith.constant 0 : index
    %c0_7 = arith.constant 0 : index
    %9 = vector.load %arg3[%c0_6, %c0_7] : memref<512x256xbf16, #tpu.memory_space<vmem>>, vector<512x256xbf16>
    %cst_8 = arith.constant dense<0.000000e+00> : vector<2x256xf32>
    %10 = tpu.matmul %8, %9, %cst_8 {dimension_numbers = #tpu.dot_dimension_numbers<[1], [0], [0], [1], [0, 0, 1, 1], [], []>} : vector<2x512xbf16>, vector<512x256xbf16>, vector<2x256xf32> -> vector<2x256xf32>
    %c1 = arith.constant 1 : index
    %c0_9 = arith.constant 0 : index
    %11 = vector.load %arg7[%c1, %c0_9] : memref<5x768xf32, #tpu.memory_space<vmem>>, vector<1x256xf32>
    %12 = vector.broadcast %11 : vector<1x256xf32> to vector<2x256xf32>
    %13 = arith.addf %10, %12 : vector<2x256xf32>
    %cst_10 = arith.constant 0.000000e+00 : f32
    %14 = vector.broadcast %cst_10 : f32 to vector<2x256xf32>
    %15 = arith.maximumf %13, %14 : vector<2x256xf32>
    %16 = arith.truncf %15 : vector<2x256xf32> to vector<2x256xbf16>
    %c0_11 = arith.constant 0 : index
    %c0_12 = arith.constant 0 : index
    %17 = vector.load %arg4[%c0_11, %c0_12] : memref<256x512xbf16, #tpu.memory_space<vmem>>, vector<256x512xbf16>
    %cst_13 = arith.constant dense<0.000000e+00> : vector<2x512xf32>
    %18 = tpu.matmul %16, %17, %cst_13 {dimension_numbers = #tpu.dot_dimension_numbers<[1], [0], [0], [1], [0, 0, 1, 1], [], []>} : vector<2x256xbf16>, vector<256x512xbf16>, vector<2x512xf32> -> vector<2x512xf32>
    %c2 = arith.constant 2 : index
    %c0_14 = arith.constant 0 : index
    %19 = vector.load %arg7[%c2, %c0_14] : memref<5x768xf32, #tpu.memory_space<vmem>>, vector<1x512xf32>
    %20 = vector.broadcast %19 : vector<1x512xf32> to vector<2x512xf32>
    %21 = arith.addf %18, %20 : vector<2x512xf32>
    %cst_15 = arith.constant 0.000000e+00 : f32
    %22 = vector.broadcast %cst_15 : f32 to vector<2x512xf32>
    %23 = arith.maximumf %21, %22 : vector<2x512xf32>
    %24 = arith.truncf %23 : vector<2x512xf32> to vector<2x512xbf16>
    %c0_16 = arith.constant 0 : index
    %c0_17 = arith.constant 0 : index
    %25 = vector.load %arg5[%c0_16, %c0_17] : memref<512x768xbf16, #tpu.memory_space<vmem>>, vector<512x768xbf16>
    %cst_18 = arith.constant dense<0.000000e+00> : vector<2x768xf32>
    %26 = tpu.matmul %24, %25, %cst_18 {dimension_numbers = #tpu.dot_dimension_numbers<[1], [0], [0], [1], [0, 0, 1, 1], [], []>} : vector<2x512xbf16>, vector<512x768xbf16>, vector<2x768xf32> -> vector<2x768xf32>
    %c3 = arith.constant 3 : index
    %c0_19 = arith.constant 0 : index
    %27 = vector.load %arg7[%c3, %c0_19] : memref<5x768xf32, #tpu.memory_space<vmem>>, vector<1x768xf32>
    %28 = vector.broadcast %27 : vector<1x768xf32> to vector<2x768xf32>
    %29 = arith.addf %26, %28 : vector<2x768xf32>
    %cst_20 = arith.constant 0.000000e+00 : f32
    %30 = vector.broadcast %cst_20 : f32 to vector<2x768xf32>
    %31 = arith.maximumf %29, %30 : vector<2x768xf32>
    %32 = arith.truncf %31 : vector<2x768xf32> to vector<2x768xbf16>
    %c0_21 = arith.constant 0 : index
    %c0_22 = arith.constant 0 : index
    %33 = vector.load %arg6[%c0_21, %c0_22] : memref<768x768xbf16, #tpu.memory_space<vmem>>, vector<768x768xbf16>
    %cst_23 = arith.constant dense<0.000000e+00> : vector<2x768xf32>
    %34 = tpu.matmul %32, %33, %cst_23 {dimension_numbers = #tpu.dot_dimension_numbers<[1], [0], [0], [1], [0, 0, 1, 1], [], []>} : vector<2x768xbf16>, vector<768x768xbf16>, vector<2x768xf32> -> vector<2x768xf32>
    %c4 = arith.constant 4 : index
    %c0_24 = arith.constant 0 : index
    %35 = vector.load %arg7[%c4, %c0_24] : memref<5x768xf32, #tpu.memory_space<vmem>>, vector<1x768xf32>
    %36 = vector.broadcast %35 : vector<1x768xf32> to vector<2x768xf32>
    %37 = arith.addf %34, %36 : vector<2x768xf32>
    %c0_25 = arith.constant 0 : index
    %c0_26 = arith.constant 0 : index
    %38 = vector.load %arg8[%c0_25, %c0_26] : memref<2x768xf32, #tpu.memory_space<vmem>>, vector<2x768xf32>
    tpu.vector_store %arg8[%c0_25, %c0_26], %37 {strides = array<i32>} : memref<2x768xf32, #tpu.memory_space<vmem>>, vector<2x768xf32>,
    return
  }
  func.func @transform_0(%arg0: i32) -> (i32, i32) {
    %c0_i32 = arith.constant 0 : i32
    %c0_i32_0 = arith.constant 0 : i32
    %c0_i32_1 = arith.constant 0 : i32
    return %c0_i32, %c0_i32_0 : i32, i32
  }
  func.func @transform_1(%arg0: i32) -> (i32, i32) {
    %c0_i32 = arith.constant 0 : i32
    %c0_i32_0 = arith.constant 0 : i32
    %c0_i32_1 = arith.constant 0 : i32
    return %c0_i32, %c0_i32_0 : i32, i32
  }
  func.func @transform_2(%arg0: i32) -> (i32, i32) {
    %c0_i32 = arith.constant 0 : i32
    %c0_i32_0 = arith.constant 0 : i32
    %c0_i32_1 = arith.constant 0 : i32
    return %c0_i32, %c0_i32_0 : i32, i32
  }
  func.func @transform_3(%arg0: i32) -> (i32, i32) {
    %c0_i32 = arith.constant 0 : i32
    %c0_i32_0 = arith.constant 0 : i32
    %c0_i32_1 = arith.constant 0 : i32
    return %c0_i32, %c0_i32_0 : i32, i32
  }
  func.func @transform_4(%arg0: i32) -> (i32, i32) {
    %c0_i32 = arith.constant 0 : i32
    %c0_i32_0 = arith.constant 0 : i32
    %c0_i32_1 = arith.constant 0 : i32
    return %c0_i32, %c0_i32_0 : i32, i32
  }
  func.func @transform_5(%arg0: i32) -> (i32, i32) {
    %c0_i32 = arith.constant 0 : i32
    %c0_i32_0 = arith.constant 0 : i32
    %c0_i32_1 = arith.constant 0 : i32
    return %c0_i32, %c0_i32_0 : i32, i32
  }
  func.func @transform_6(%arg0: i32) -> (i32, i32) {
    %c0_i32 = arith.constant 0 : i32
    %c0_i32_0 = arith.constant 0 : i32
    %c0_i32_1 = arith.constant 0 : i32
    return %c0_i32, %c0_i32_0 : i32, i32
  }
  func.func @transform_7(%arg0: i32) -> (i32, i32) {
    %c0_i32 = arith.constant 0 : i32
    %c0_i32_0 = arith.constant 0 : i32
    %c0_i32_1 = arith.constant 0 : i32
    return %c0_i32, %c0_i32_0 : i32, i32
  }
}

</mosaic_0001>

<llo_original>
// kernel: autoencoder_forward.1
$region0: #{autoencoder_forward.1}
  #allocation0 [shape = 'u32[]', space=smem, size = 0x4, offset = 0x4, fixed_abs, tag = 'smem constant byte address 0x4 - core index']
  #allocation1 [shape = 'u32[144,128]{1,0:T(1,128)}', space=vmem, size = 0x12000, scoped, tag = 'internal scratch']
  %s0 = inlined_call_operand.vmem [shape: bf16[2,768], index: 0, kind: input, shape index: {}]
  %s1 = inlined_call_operand.vmem [shape: bf16[768,512], index: 1, kind: input, shape index: {}]
  %s2 = inlined_call_operand.vmem [shape: bf16[512,256], index: 2, kind: input, shape index: {}]
  %s3 = inlined_call_operand.vmem [shape: bf16[256,512], index: 3, kind: input, shape index: {}]
  %s4 = inlined_call_operand.vmem [shape: bf16[512,768], index: 4, kind: input, shape index: {}]
  %s5 = inlined_call_operand.vmem [shape: bf16[768,768], index: 5, kind: input, shape index: {}]
  %s6 = inlined_call_operand.vmem [shape: f32[5,768], index: 6, kind: input, shape index: {}]
  %s7 = inlined_call_operand.vmem [shape: f32[2,768], index: 7, kind: output, shape index: {}]
  %s8 = sld [smem:[#allocation0]]
  $region38: #{autoencoder_forward.1} parent=0
    _
  %s10 = ssub.s32 1, %s8
  %s11 = scalar_select 0, %s10, %s8
  // Predicated region
  $region2: #{autoencoder_forward.1} parent=0 // pred_check
    _
  $region3: #{autoencoder_forward.1} parent=0 // pred_check_branch
    %13 = sbr.rel (0) target = $region5
  $region4: #{autoencoder_forward.1} parent=0 // pred_region
    _
  $region5: #{autoencoder_forward.1} parent=0 // pred_fallthru
    _
  // Predicated region
  $region6: #{autoencoder_forward.1} parent=0 // pred_check
    _
  $region7: #{autoencoder_forward.1} parent=0 // pred_check_branch
    %15 = sbr.rel (0) target = $region9
  $region8: #{autoencoder_forward.1} parent=0 // pred_region
    _
  $region9: #{autoencoder_forward.1} parent=0 // pred_fallthru
    _
  // Predicated region
  $region10: #{autoencoder_forward.1} parent=0 // pred_check
    _
  $region11: #{autoencoder_forward.1} parent=0 // pred_check_branch
    %17 = sbr.rel (0) target = $region13
  $region12: #{autoencoder_forward.1} parent=0 // pred_region
    _
  $region13: #{autoencoder_forward.1} parent=0 // pred_fallthru
    _
  // Predicated region
  $region14: #{autoencoder_forward.1} parent=0 // pred_check
    _
  $region15: #{autoencoder_forward.1} parent=0 // pred_check_branch
    %19 = sbr.rel (0) target = $region17
  $region16: #{autoencoder_forward.1} parent=0 // pred_region
    _
  $region17: #{autoencoder_forward.1} parent=0 // pred_fallthru
    _
  // Predicated region
  $region18: #{autoencoder_forward.1} parent=0 // pred_check
    _
  $region19: #{autoencoder_forward.1} parent=0 // pred_check_branch
    %21 = sbr.rel (0) target = $region21
  $region20: #{autoencoder_forward.1} parent=0 // pred_region
    _
  $region21: #{autoencoder_forward.1} parent=0 // pred_fallthru
    _
  // Predicated region
  $region22: #{autoencoder_forward.1} parent=0 // pred_check
    _
  $region23: #{autoencoder_forward.1} parent=0 // pred_check_branch
    %23 = sbr.rel (0) target = $region25
  $region24: #{autoencoder_forward.1} parent=0 // pred_region
    _
  $region25: #{autoencoder_forward.1} parent=0 // pred_fallthru
    _
  // Predicated region
  $region26: #{autoencoder_forward.1} parent=0 // pred_check
    _
  $region27: #{autoencoder_forward.1} parent=0 // pred_check_branch
    %25 = sbr.rel (0) target = $region29
  $region28: #{autoencoder_forward.1} parent=0 // pred_region
    _
  $region29: #{autoencoder_forward.1} parent=0 // pred_fallthru
    _
  %v26 = vld [vmem:[%s0] sm:$0x3f]
  %v27 = vld [vmem:[%s1] sm:$0xff]
  %v28 = vld [vmem:[%s1 + $0x8] sm:$0xff]
  %v29 = vld [vmem:[%s1 + $0x10] sm:$0xff]
  %v30 = vld [vmem:[%s1 + $0x18] sm:$0xff]
  %v31 = vld [vmem:[%s1 + $0x20] sm:$0xff]
  %v32 = vld [vmem:[%s1 + $0x28] sm:$0xff]
  %v33 = vld [vmem:[%s1 + $0x30] sm:$0xff]
  %v34 = vld [vmem:[%s1 + $0x38] sm:$0xff]
  %v35 = vld [vmem:[%s1 + $0x40] sm:$0xff]
  %v36 = vld [vmem:[%s1 + $0x48] sm:$0xff]
  %v37 = vld [vmem:[%s1 + $0x50] sm:$0xff]
  %v38 = vld [vmem:[%s1 + $0x58] sm:$0xff]
  %v39 = vld [vmem:[%s1 + $0x60] sm:$0xff]
  %v40 = vld [vmem:[%s1 + $0x68] sm:$0xff]
  %v41 = vld [vmem:[%s1 + $0x70] sm:$0xff]
  %v42 = vld [vmem:[%s1 + $0x78] sm:$0xff]
  %v43 = vld [vmem:[%s1 + $0x80] sm:$0xff]
  %v44 = vld [vmem:[%s1 + $0x88] sm:$0xff]
  %v45 = vld [vmem:[%s1 + $0x90] sm:$0xff]
  %v46 = vld [vmem:[%s1 + $0x98] sm:$0xff]
  %v47 = vld [vmem:[%s1 + $0xa0] sm:$0xff]
  %v48 = vld [vmem:[%s1 + $0xa8] sm:$0xff]
  %v49 = vld [vmem:[%s1 + $0xb0] sm:$0xff]
  %v50 = vld [vmem:[%s1 + $0xb8] sm:$0xff]
  %v51 = vld [vmem:[%s1 + $0xc0] sm:$0xff]
  %v52 = vld [vmem:[%s1 + $0xc8] sm:$0xff]
  %v53 = vld [vmem:[%s1 + $0xd0] sm:$0xff]
  %v54 = vld [vmem:[%s1 + $0xd8] sm:$0xff]
  %v55 = vld [vmem:[%s1 + $0xe0] sm:$0xff]
  %v56 = vld [vmem:[%s1 + $0xe8] sm:$0xff]
  %v57 = vld [vmem:[%s1 + $0xf0] sm:$0xff]
  %v58 = vld [vmem:[%s1 + $0xf8] sm:$0xff]
  %v59 = vld [vmem:[%s1 + $0x100] sm:$0xff]
  %v60 = vld [vmem:[%s1 + $0x108] sm:$0xff]
  %v61 = vld [vmem:[%s1 + $0x110] sm:$0xff]
  %v62 = vld [vmem:[%s1 + $0x118] sm:$0xff]
  %v63 = vld [vmem:[%s1 + $0x120] sm:$0xff]
  %v64 = vld [vmem:[%s1 + $0x128] sm:$0xff]
  %v65 = vld [vmem:[%s1 + $0x130] sm:$0xff]
  %v66 = vld [vmem:[%s1 + $0x138] sm:$0xff]
  %v67 = vld [vmem:[%s1 + $0x140] sm:$0xff]
  %v68 = vld [vmem:[%s1 + $0x148] sm:$0xff]
  %v69 = vld [vmem:[%s1 + $0x150] sm:$0xff]
  %v70 = vld [vmem:[%s1 + $0x158] sm:$0xff]
  %v71 = vld [vmem:[%s1 + $0x160] sm:$0xff]
  %v72 = vld [vmem:[%s1 + $0x168] sm:$0xff]
  %v73 = vld [vmem:[%s1 + $0x170] sm:$0xff]
  %v74 = vld [vmem:[%s1 + $0x178] sm:$0xff]
  %v75 = vld [vmem:[%s1 + $0x180] sm:$0xff]
  %v76 = vld [vmem:[%s1 + $0x188] sm:$0xff]
  %v77 = vld [vmem:[%s1 + $0x190] sm:$0xff]
  %v78 = vld [vmem:[%s1 + $0x198] sm:$0xff]
  %v79 = vld [vmem:[%s1 + $0x1a0] sm:$0xff]
  %v80 = vld [vmem:[%s1 + $0x1a8] sm:$0xff]
  %v81 = vld [vmem:[%s1 + $0x1b0] sm:$0xff]
  %v82 = vld [vmem:[%s1 + $0x1b8] sm:$0xff]
  %v83 = vld [vmem:[%s1 + $0x1c0] sm:$0xff]
  %v84 = vld [vmem:[%s1 + $0x1c8] sm:$0xff]
  %v85 = vld [vmem:[%s1 + $0x1d0] sm:$0xff]
  %v86 = vld [vmem:[%s1 + $0x1d8] sm:$0xff]
  %v87 = vld [vmem:[%s1 + $0x1e0] sm:$0xff]
  %v88 = vld [vmem:[%s1 + $0x1e8] sm:$0xff]
  %v89 = vld [vmem:[%s1 + $0x1f0] sm:$0xff]
  %v90 = vld [vmem:[%s1 + $0x1f8] sm:$0xff]
  %v91 = vld [vmem:[%s1 + $0x200] sm:$0xff]
  %v92 = vld [vmem:[%s1 + $0x208] sm:$0xff]
  %v93 = vld [vmem:[%s1 + $0x210] sm:$0xff]
  %v94 = vld [vmem:[%s1 + $0x218] sm:$0xff]
  %v95 = vld [vmem:[%s1 + $0x220] sm:$0xff]
  %v96 = vld [vmem:[%s1 + $0x228] sm:$0xff]
  %v97 = vld [vmem:[%s1 + $0x230] sm:$0xff]
  %v98 = vld [vmem:[%s1 + $0x238] sm:$0xff]
  %v99 = vld [vmem:[%s1 + $0x240] sm:$0xff]
  %v100 = vld [vmem:[%s1 + $0x248] sm:$0xff]
  %v101 = vld [vmem:[%s1 + $0x250] sm:$0xff]
  %v102 = vld [vmem:[%s1 + $0x258] sm:$0xff]
  %v103 = vld [vmem:[%s1 + $0x260] sm:$0xff]
  %v104 = vld [vmem:[%s1 + $0x268] sm:$0xff]
  %v105 = vld [vmem:[%s1 + $0x270] sm:$0xff]
  %v106 = vld [vmem:[%s1 + $0x278] sm:$0xff]
  %v107 = vld [vmem:[%s1 + $0x280] sm:$0xff]
  %v108 = vld [vmem:[%s1 + $0x288] sm:$0xff]
  %v109 = vld [vmem:[%s1 + $0x290] sm:$0xff]
  %v110 = vld [vmem:[%s1 + $0x298] sm:$0xff]
  %v111 = vld [vmem:[%s1 + $0x2a0] sm:$0xff]
  %v112 = vld [vmem:[%s1 + $0x2a8] sm:$0xff]
  %v113 = vld [vmem:[%s1 + $0x2b0] sm:$0xff]
  %v114 = vld [vmem:[%s1 + $0x2b8] sm:$0xff]
  %v115 = vld [vmem:[%s1 + $0x2c0] sm:$0xff]
  %v116 = vld [vmem:[%s1 + $0x2c8] sm:$0xff]
  %v117 = vld [vmem:[%s1 + $0x2d0] sm:$0xff]
  %v118 = vld [vmem:[%s1 + $0x2d8] sm:$0xff]
  %v119 = vld [vmem:[%s1 + $0x2e0] sm:$0xff]
  %v120 = vld [vmem:[%s1 + $0x2e8] sm:$0xff]
  %v121 = vld [vmem:[%s1 + $0x2f0] sm:$0xff]
  %v122 = vld [vmem:[%s1 + $0x2f8] sm:$0xff]
  %v123 = vld [vmem:[%s1 + $0x300] sm:$0xff]
  %v124 = vld [vmem:[%s1 + $0x308] sm:$0xff]
  %v125 = vld [vmem:[%s1 + $0x310] sm:$0xff]
  %v126 = vld [vmem:[%s1 + $0x318] sm:$0xff]
  %v127 = vld [vmem:[%s1 + $0x320] sm:$0xff]
  %v128 = vld [vmem:[%s1 + $0x328] sm:$0xff]
  %v129 = vld [vmem:[%s1 + $0x330] sm:$0xff]
  %v130 = vld [vmem:[%s1 + $0x338] sm:$0xff]
  %v131 = vld [vmem:[%s1 + $0x340] sm:$0xff]
  %v132 = vld [vmem:[%s1 + $0x348] sm:$0xff]
  %v133 = vld [vmem:[%s1 + $0x350] sm:$0xff]
  %v134 = vld [vmem:[%s1 + $0x358] sm:$0xff]
  %v135 = vld [vmem:[%s1 + $0x360] sm:$0xff]
  %v136 = vld [vmem:[%s1 + $0x368] sm:$0xff]
  %v137 = vld [vmem:[%s1 + $0x370] sm:$0xff]
  %v138 = vld [vmem:[%s1 + $0x378] sm:$0xff]
  %v139 = vld [vmem:[%s1 + $0x380] sm:$0xff]
  %v140 = vld [vmem:[%s1 + $0x388] sm:$0xff]
  %v141 = vld [vmem:[%s1 + $0x390] sm:$0xff]
  %v142 = vld [vmem:[%s1 + $0x398] sm:$0xff]
  %v143 = vld [vmem:[%s1 + $0x3a0] sm:$0xff]
  %v144 = vld [vmem:[%s1 + $0x3a8] sm:$0xff]
  %v145 = vld [vmem:[%s1 + $0x3b0] sm:$0xff]
  %v146 = vld [vmem:[%s1 + $0x3b8] sm:$0xff]
  %v147 = vld [vmem:[%s1 + $0x3c0] sm:$0xff]
  %v148 = vld [vmem:[%s1 + $0x3c8] sm:$0xff]
  %v149 = vld [vmem:[%s1 + $0x3d0] sm:$0xff]
  %v150 = vld [vmem:[%s1 + $0x3d8] sm:$0xff]
  %v151 = vld [vmem:[%s1 + $0x3e0] sm:$0xff]
  %v152 = vld [vmem:[%s1 + $0x3e8] sm:$0xff]
  %v153 = vld [vmem:[%s1 + $0x3f0] sm:$0xff]
  %v154 = vld [vmem:[%s1 + $0x3f8] sm:$0xff]
  %v155 = vld [vmem:[%s1 + $0x400] sm:$0xff]
  %v156 = vld [vmem:[%s1 + $0x408] sm:$0xff]
  %v157 = vld [vmem:[%s1 + $0x410] sm:$0xff]
  %v158 = vld [vmem:[%s1 + $0x418] sm:$0xff]
  %v159 = vld [vmem:[%s1 + $0x420] sm:$0xff]
  %v160 = vld [vmem:[%s1 + $0x428] sm:$0xff]
  %v161 = vld [vmem:[%s1 + $0x430] sm:$0xff]
  %v162 = vld [vmem:[%s1 + $0x438] sm:$0xff]
  %v163 = vld [vmem:[%s1 + $0x440] sm:$0xff]
  %v164 = vld [vmem:[%s1 + $0x448] sm:$0xff]
  %v165 = vld [vmem:[%s1 + $0x450] sm:$0xff]
  %v166 = vld [vmem:[%s1 + $0x458] sm:$0xff]
  %v167 = vld [vmem:[%s1 + $0x460] sm:$0xff]
  %v168 = vld [vmem:[%s1 + $0x468] sm:$0xff]
  %v169 = vld [vmem:[%s1 + $0x470] sm:$0xff]
  %v170 = vld [vmem:[%s1 + $0x478] sm:$0xff]
  %v171 = vld [vmem:[%s1 + $0x480] sm:$0xff]
  %v172 = vld [vmem:[%s1 + $0x488] sm:$0xff]
  %v173 = vld [vmem:[%s1 + $0x490] sm:$0xff]
  %v174 = vld [vmem:[%s1 + $0x498] sm:$0xff]
  %v175 = vld [vmem:[%s1 + $0x4a0] sm:$0xff]
  %v176 = vld [vmem:[%s1 + $0x4a8] sm:$0xff]
  %v177 = vld [vmem:[%s1 + $0x4b0] sm:$0xff]
  %v178 = vld [vmem:[%s1 + $0x4b8] sm:$0xff]
  %v179 = vld [vmem:[%s1 + $0x4c0] sm:$0xff]
  %v180 = vld [vmem:[%s1 + $0x4c8] sm:$0xff]
  %v181 = vld [vmem:[%s1 + $0x4d0] sm:$0xff]
  %v182 = vld [vmem:[%s1 + $0x4d8] sm:$0xff]
  %v183 = vld [vmem:[%s1 + $0x4e0] sm:$0xff]
  %v184 = vld [vmem:[%s1 + $0x4e8] sm:$0xff]
  %v185 = vld [vmem:[%s1 + $0x4f0] sm:$0xff]
  %v186 = vld [vmem:[%s1 + $0x4f8] sm:$0xff]
  %v187 = vld [vmem:[%s1 + $0x500] sm:$0xff]
  %v188 = vld [vmem:[%s1 + $0x508] sm:$0xff]
  %v189 = vld [vmem:[%s1 + $0x510] sm:$0xff]
  %v190 = vld [vmem:[%s1 + $0x518] sm:$0xff]
  %v191 = vld [vmem:[%s1 + $0x520] sm:$0xff]
  %v192 = vld [vmem:[%s1 + $0x528] sm:$0xff]
  %v193 = vld [vmem:[%s1 + $0x530] sm:$0xff]
  %v194 = vld [vmem:[%s1 + $0x538] sm:$0xff]
  %v195 = vld [vmem:[%s1 + $0x540] sm:$0xff]
  %v196 = vld [vmem:[%s1 + $0x548] sm:$0xff]
  %v197 = vld [vmem:[%s1 + $0x550] sm:$0xff]
  %v198 = vld [vmem:[%s1 + $0x558] sm:$0xff]
  %v199 = vld [vmem:[%s1 + $0x560] sm:$0xff]
  %v200 = vld [vmem:[%s1 + $0x568] sm:$0xff]
  %v201 = vld [vmem:[%s1 + $0x570] sm:$0xff]
  %v202 = vld [vmem:[%s1 + $0x578] sm:$0xff]
  %v203 = vld [vmem:[%s1 + $0x580] sm:$0xff]
  %v204 = vld [vmem:[%s1 + $0x588] sm:$0xff]
  %v205 = vld [vmem:[%s1 + $0x590] sm:$0xff]
  %v206 = vld [vmem:[%s1 + $0x598] sm:$0xff]
  %v207 = vld [vmem:[%s1 + $0x5a0] sm:$0xff]
  %v208 = vld [vmem:[%s1 + $0x5a8] sm:$0xff]
  %v209 = vld [vmem:[%s1 + $0x5b0] sm:$0xff]
  %v210 = vld [vmem:[%s1 + $0x5b8] sm:$0xff]
  %v211 = vld [vmem:[%s1 + $0x5c0] sm:$0xff]
  %v212 = vld [vmem:[%s1 + $0x5c8] sm:$0xff]
  %v213 = vld [vmem:[%s1 + $0x5d0] sm:$0xff]
  %v214 = vld [vmem:[%s1 + $0x5d8] sm:$0xff]
  %v215 = vld [vmem:[%s1 + $0x5e0] sm:$0xff]
  %v216 = vld [vmem:[%s1 + $0x5e8] sm:$0xff]
  %v217 = vld [vmem:[%s1 + $0x5f0] sm:$0xff]
  %v218 = vld [vmem:[%s1 + $0x5f8] sm:$0xff]
  %v219 = vld [vmem:[%s6] ss:$8 sm:$0xf]
  %v221 = vlaneseq
  %v222 = vshrl.u32 %v221, 7
  %v223 = vsub.s32 0, %v222
  %v224 = vrot.slane %v219, %v223
  %v225 = vlaneseq
  %v226 = vshrl.u32 %v225, 7
  %v227 = vsub.s32 1, %v226
  %v228 = vrot.slane %v219, %v227
  %v229 = vlaneseq
  %v230 = vshrl.u32 %v229, 7
  %v231 = vsub.s32 2, %v230
  %v232 = vrot.slane %v219, %v231
  %v233 = vlaneseq
  %v234 = vshrl.u32 %v233, 7
  %v235 = vsub.s32 3, %v234
  %v236 = vrot.slane %v219, %v235
  %v242 = vcombine.high %v26, %v26
  %v244 = vunpack.c.l.s4 1966171168
  %v245 = vunpack.c.0.s8 %v244
  %v246 = vlaneseq
  %v247 = vshrl.u32 %v246, 7
  %v248 = vsub.s32 %v245, %v247
  %v249 = vrot.slane %v26, %v248
  %v251 = vunpack.c.l.s4 1966171168
  %v252 = vunpack.c.0.s8 %v251
  %v253 = vlaneseq
  %v254 = vshrl.u32 %v253, 7
  %v255 = vsub.s32 %v252, %v254
  %v256 = vrot.slane %v242, %v255
  %v257 = vcombine.high %v249, %v249
  %v258 = vcombine.high %v256, %v256
  %v260 = vunpack.c.l.s4 1966171168
  %v261 = vunpack.c.0.s8 %v260
  %v262 = vlaneseq
  %v263 = vshrl.u32 %v262, 7
  %v264 = vsub.s32 %v261, %v263
  %v265 = vrot.slane %v249, %v264
  %v267 = vunpack.c.l.s4 1966171168
  %v268 = vunpack.c.0.s8 %v267
  %v269 = vlaneseq
  %v270 = vshrl.u32 %v269, 7
  %v271 = vsub.s32 %v268, %v270
  %v272 = vrot.slane %v256, %v271
  %v274 = vunpack.c.l.s4 1966171168
  %v275 = vunpack.c.0.s8 %v274
  %v276 = vlaneseq
  %v277 = vshrl.u32 %v276, 7
  %v278 = vsub.s32 %v275, %v277
  %v279 = vrot.slane %v257, %v278
  %v281 = vunpack.c.l.s4 1966171168
  %v282 = vunpack.c.0.s8 %v281
  %v283 = vlaneseq
  %v284 = vshrl.u32 %v283, 7
  %v285 = vsub.s32 %v282, %v284
  %v286 = vrot.slane %v258, %v285
  %v287 = vcombine.high %v265, %v265
  %v288 = vcombine.high %v279, %v279
  %v487 = vunpack.c.l.b16 %v27
  %v488 = vunpack.c.h.b16 %v27
  %v489 = vunpack.c.l.b16 %v28
  %v490 = vunpack.c.h.b16 %v28
  %v491 = vunpack.c.l.b16 %v29
  %v492 = vunpack.c.h.b16 %v29
  %v493 = vunpack.c.l.b16 %v30
  %v494 = vunpack.c.h.b16 %v30
  %v495 = vunpack.c.l.b16 %v31
  %v496 = vunpack.c.h.b16 %v31
  %v497 = vunpack.c.l.b16 %v32
  %v498 = vunpack.c.h.b16 %v32
  %v499 = vunpack.c.l.b16 %v33
  %v500 = vunpack.c.h.b16 %v33
  %v501 = vunpack.c.l.b16 %v34
  %v502 = vunpack.c.h.b16 %v34
  %v503 = vunpack.c.l.b16 %v35
  %v504 = vunpack.c.h.b16 %v35
  %v505 = vunpack.c.l.b16 %v36
  %v506 = vunpack.c.h.b16 %v36
  %v507 = vunpack.c.l.b16 %v37
  %v508 = vunpack.c.h.b16 %v37
  %v509 = vunpack.c.l.b16 %v38
  %v510 = vunpack.c.h.b16 %v38
  %v511 = vunpack.c.l.b16 %v39
  %v512 = vunpack.c.h.b16 %v39
  %v513 = vunpack.c.l.b16 %v40
  %v514 = vunpack.c.h.b16 %v40
  %v515 = vunpack.c.l.b16 %v41
  %v516 = vunpack.c.h.b16 %v41
  %v517 = vunpack.c.l.b16 %v42
  %v518 = vunpack.c.h.b16 %v42
  %v519 = vunpack.c.l.b16 %v43
  %v520 = vunpack.c.h.b16 %v43
  %v521 = vunpack.c.l.b16 %v44
  %v522 = vunpack.c.h.b16 %v44
  %v523 = vunpack.c.l.b16 %v45
  %v524 = vunpack.c.h.b16 %v45
  %v525 = vunpack.c.l.b16 %v46
  %v526 = vunpack.c.h.b16 %v46
  %v527 = vunpack.c.l.b16 %v47
  %v528 = vunpack.c.h.b16 %v47
  %v529 = vunpack.c.l.b16 %v48
  %v530 = vunpack.c.h.b16 %v48
  %v531 = vunpack.c.l.b16 %v49
  %v532 = vunpack.c.h.b16 %v49
  %v533 = vunpack.c.l.b16 %v50
  %v534 = vunpack.c.h.b16 %v50
  %v535 = vunpack.c.l.b16 %v51
  %v536 = vunpack.c.h.b16 %v51
  %v537 = vunpack.c.l.b16 %v52
  %v538 = vunpack.c.h.b16 %v52
  %v539 = vunpack.c.l.b16 %v53
  %v540 = vunpack.c.h.b16 %v53
  %v541 = vunpack.c.l.b16 %v54
  %v542 = vunpack.c.h.b16 %v54
  %v543 = vunpack.c.l.b16 %v55
  %v544 = vunpack.c.h.b16 %v55
  %v545 = vunpack.c.l.b16 %v56
  %v546 = vunpack.c.h.b16 %v56
  %v547 = vunpack.c.l.b16 %v57
  %v548 = vunpack.c.h.b16 %v57
  %v549 = vunpack.c.l.b16 %v58
  %v550 = vunpack.c.h.b16 %v58
  %v551 = vunpack.c.l.b16 %v59
  %v552 = vunpack.c.h.b16 %v59
  %v553 = vunpack.c.l.b16 %v60
  %v554 = vunpack.c.h.b16 %v60
  %v555 = vunpack.c.l.b16 %v61
  %v556 = vunpack.c.h.b16 %v61
  %v557 = vunpack.c.l.b16 %v62
  %v558 = vunpack.c.h.b16 %v62
  %v559 = vunpack.c.l.b16 %v63
  %v560 = vunpack.c.h.b16 %v63
  %v561 = vunpack.c.l.b16 %v64
  %v562 = vunpack.c.h.b16 %v64
  %v563 = vunpack.c.l.b16 %v65
  %v564 = vunpack.c.h.b16 %v65
  %v565 = vunpack.c.l.b16 %v66
  %v566 = vunpack.c.h.b16 %v66
  %v567 = vunpack.c.l.b16 %v67
  %v568 = vunpack.c.h.b16 %v67
  %v569 = vunpack.c.l.b16 %v68
  %v570 = vunpack.c.h.b16 %v68
  %v571 = vunpack.c.l.b16 %v69
  %v572 = vunpack.c.h.b16 %v69
  %v573 = vunpack.c.l.b16 %v70
  %v574 = vunpack.c.h.b16 %v70
  %v575 = vunpack.c.l.b16 %v71
  %v576 = vunpack.c.h.b16 %v71
  %v577 = vunpack.c.l.b16 %v72
  %v578 = vunpack.c.h.b16 %v72
  %v579 = vunpack.c.l.b16 %v73
  %v580 = vunpack.c.h.b16 %v73
  %v581 = vunpack.c.l.b16 %v74
  %v582 = vunpack.c.h.b16 %v74
  %v583 = vunpack.c.l.b16 %v75
  %v584 = vunpack.c.h.b16 %v75
  %v585 = vunpack.c.l.b16 %v76
  %v586 = vunpack.c.h.b16 %v76
  %v587 = vunpack.c.l.b16 %v77
  %v588 = vunpack.c.h.b16 %v77
  %v589 = vunpack.c.l.b16 %v78
  %v590 = vunpack.c.h.b16 %v78
  %v591 = vunpack.c.l.b16 %v79
  %v592 = vunpack.c.h.b16 %v79
  %v593 = vunpack.c.l.b16 %v80
  %v594 = vunpack.c.h.b16 %v80
  %v595 = vunpack.c.l.b16 %v81
  %v596 = vunpack.c.h.b16 %v81
  %v597 = vunpack.c.l.b16 %v82
  %v598 = vunpack.c.h.b16 %v82
  %v599 = vunpack.c.l.b16 %v83
  %v600 = vunpack.c.h.b16 %v83
  %v601 = vunpack.c.l.b16 %v84
  %v602 = vunpack.c.h.b16 %v84
  %v603 = vunpack.c.l.b16 %v85
  %v604 = vunpack.c.h.b16 %v85
  %v605 = vunpack.c.l.b16 %v86
  %v606 = vunpack.c.h.b16 %v86
  %v607 = vunpack.c.l.b16 %v87
  %v608 = vunpack.c.h.b16 %v87
  %v609 = vunpack.c.l.b16 %v88
  %v610 = vunpack.c.h.b16 %v88
  %v611 = vunpack.c.l.b16 %v89
  %v612 = vunpack.c.h.b16 %v89
  %v613 = vunpack.c.l.b16 %v90
  %v614 = vunpack.c.h.b16 %v90
  %v615 = vunpack.c.l.b16 %v91
  %v616 = vunpack.c.h.b16 %v91
  %v617 = vunpack.c.l.b16 %v92
  %v618 = vunpack.c.h.b16 %v92
  %v619 = vunpack.c.l.b16 %v93
  %v620 = vunpack.c.h.b16 %v93
  %v621 = vunpack.c.l.b16 %v94
  %v622 = vunpack.c.h.b16 %v94
  %v623 = vunpack.c.l.b16 %v95
  %v624 = vunpack.c.h.b16 %v95
  %v625 = vunpack.c.l.b16 %v96
  %v626 = vunpack.c.h.b16 %v96
  %v627 = vunpack.c.l.b16 %v97
  %v628 = vunpack.c.h.b16 %v97
  %v629 = vunpack.c.l.b16 %v98
  %v630 = vunpack.c.h.b16 %v98
  %v631 = vunpack.c.l.b16 %v99
  %v632 = vunpack.c.h.b16 %v99
  %v633 = vunpack.c.l.b16 %v100
  %v634 = vunpack.c.h.b16 %v100
  %v635 = vunpack.c.l.b16 %v101
  %v636 = vunpack.c.h.b16 %v101
  %v637 = vunpack.c.l.b16 %v102
  %v638 = vunpack.c.h.b16 %v102
  %v639 = vunpack.c.l.b16 %v103
  %v640 = vunpack.c.h.b16 %v103
  %v641 = vunpack.c.l.b16 %v104
  %v642 = vunpack.c.h.b16 %v104
  %v643 = vunpack.c.l.b16 %v105
  %v644 = vunpack.c.h.b16 %v105
  %v645 = vunpack.c.l.b16 %v106
  %v646 = vunpack.c.h.b16 %v106
  %v647 = vunpack.c.l.b16 %v107
  %v648 = vunpack.c.h.b16 %v107
  %v649 = vunpack.c.l.b16 %v108
  %v650 = vunpack.c.h.b16 %v108
  %v651 = vunpack.c.l.b16 %v109
  %v652 = vunpack.c.h.b16 %v109
  %v653 = vunpack.c.l.b16 %v110
  %v654 = vunpack.c.h.b16 %v110
  %v655 = vunpack.c.l.b16 %v111
  %v656 = vunpack.c.h.b16 %v111
  %v657 = vunpack.c.l.b16 %v112
  %v658 = vunpack.c.h.b16 %v112
  %v659 = vunpack.c.l.b16 %v113
  %v660 = vunpack.c.h.b16 %v113
  %v661 = vunpack.c.l.b16 %v114
  %v662 = vunpack.c.h.b16 %v114
  %v663 = vunpack.c.l.b16 %v115
  %v664 = vunpack.c.h.b16 %v115
  %v665 = vunpack.c.l.b16 %v116
  %v666 = vunpack.c.h.b16 %v116
  %v667 = vunpack.c.l.b16 %v117
  %v668 = vunpack.c.h.b16 %v117
  %v669 = vunpack.c.l.b16 %v118
  %v670 = vunpack.c.h.b16 %v118
  %v671 = vunpack.c.l.b16 %v119
  %v672 = vunpack.c.h.b16 %v119
  %v673 = vunpack.c.l.b16 %v120
  %v674 = vunpack.c.h.b16 %v120
  %v675 = vunpack.c.l.b16 %v121
  %v676 = vunpack.c.h.b16 %v121
  %v677 = vunpack.c.l.b16 %v122
  %v678 = vunpack.c.h.b16 %v122
  %v679 = vunpack.c.l.b16 %v123
  %v680 = vunpack.c.h.b16 %v123
  %v681 = vunpack.c.l.b16 %v124
  %v682 = vunpack.c.h.b16 %v124
  %v683 = vunpack.c.l.b16 %v125
  %v684 = vunpack.c.h.b16 %v125
  %v685 = vunpack.c.l.b16 %v126
  %v686 = vunpack.c.h.b16 %v126
  %v687 = vunpack.c.l.b16 %v127
  %v688 = vunpack.c.h.b16 %v127
  %v689 = vunpack.c.l.b16 %v128
  %v690 = vunpack.c.h.b16 %v128
  %v691 = vunpack.c.l.b16 %v129
  %v692 = vunpack.c.h.b16 %v129
  %v693 = vunpack.c.l.b16 %v130
  %v694 = vunpack.c.h.b16 %v130
  %v695 = vunpack.c.l.b16 %v131
  %v696 = vunpack.c.h.b16 %v131
  %v697 = vunpack.c.l.b16 %v132
  %v698 = vunpack.c.h.b16 %v132
  %v699 = vunpack.c.l.b16 %v133
  %v700 = vunpack.c.h.b16 %v133
  %v701 = vunpack.c.l.b16 %v134
  %v702 = vunpack.c.h.b16 %v134
  %v703 = vunpack.c.l.b16 %v135
  %v704 = vunpack.c.h.b16 %v135
  %v705 = vunpack.c.l.b16 %v136
  %v706 = vunpack.c.h.b16 %v136
  %v707 = vunpack.c.l.b16 %v137
  %v708 = vunpack.c.h.b16 %v137
  %v709 = vunpack.c.l.b16 %v138
  %v710 = vunpack.c.h.b16 %v138
  %v711 = vunpack.c.l.b16 %v139
  %v712 = vunpack.c.h.b16 %v139
  %v713 = vunpack.c.l.b16 %v140
  %v714 = vunpack.c.h.b16 %v140
  %v715 = vunpack.c.l.b16 %v141
  %v716 = vunpack.c.h.b16 %v141
  %v717 = vunpack.c.l.b16 %v142
  %v718 = vunpack.c.h.b16 %v142
  %v719 = vunpack.c.l.b16 %v143
  %v720 = vunpack.c.h.b16 %v143
  %v721 = vunpack.c.l.b16 %v144
  %v722 = vunpack.c.h.b16 %v144
  %v723 = vunpack.c.l.b16 %v145
  %v724 = vunpack.c.h.b16 %v145
  %v725 = vunpack.c.l.b16 %v146
  %v726 = vunpack.c.h.b16 %v146
  %v727 = vunpack.c.l.b16 %v147
  %v728 = vunpack.c.h.b16 %v147
  %v729 = vunpack.c.l.b16 %v148
  %v730 = vunpack.c.h.b16 %v148
  %v731 = vunpack.c.l.b16 %v149
  %v732 = vunpack.c.h.b16 %v149
  %v733 = vunpack.c.l.b16 %v150
  %v734 = vunpack.c.h.b16 %v150
  %v735 = vunpack.c.l.b16 %v151
  %v736 = vunpack.c.h.b16 %v151
  %v737 = vunpack.c.l.b16 %v152
  %v738 = vunpack.c.h.b16 %v152
  %v739 = vunpack.c.l.b16 %v153
  %v740 = vunpack.c.h.b16 %v153
  %v741 = vunpack.c.l.b16 %v154
  %v742 = vunpack.c.h.b16 %v154
  %v743 = vunpack.c.l.b16 %v155
  %v744 = vunpack.c.h.b16 %v155
  %v745 = vunpack.c.l.b16 %v156
  %v746 = vunpack.c.h.b16 %v156
  %v747 = vunpack.c.l.b16 %v157
  %v748 = vunpack.c.h.b16 %v157
  %v749 = vunpack.c.l.b16 %v158
  %v750 = vunpack.c.h.b16 %v158
  %v751 = vunpack.c.l.b16 %v159
  %v752 = vunpack.c.h.b16 %v159
  %v753 = vunpack.c.l.b16 %v160
  %v754 = vunpack.c.h.b16 %v160
  %v755 = vunpack.c.l.b16 %v161
  %v756 = vunpack.c.h.b16 %v161
  %v757 = vunpack.c.l.b16 %v162
  %v758 = vunpack.c.h.b16 %v162
  %v759 = vunpack.c.l.b16 %v163
  %v760 = vunpack.c.h.b16 %v163
  %v761 = vunpack.c.l.b16 %v164
  %v762 = vunpack.c.h.b16 %v164
  %v763 = vunpack.c.l.b16 %v165
  %v764 = vunpack.c.h.b16 %v165
  %v765 = vunpack.c.l.b16 %v166
  %v766 = vunpack.c.h.b16 %v166
  %v767 = vunpack.c.l.b16 %v167
  %v768 = vunpack.c.h.b16 %v167
  %v769 = vunpack.c.l.b16 %v168
  %v770 = vunpack.c.h.b16 %v168
  %v771 = vunpack.c.l.b16 %v169
  %v772 = vunpack.c.h.b16 %v169
  %v773 = vunpack.c.l.b16 %v170
  %v774 = vunpack.c.h.b16 %v170
  %v775 = vunpack.c.l.b16 %v171
  %v776 = vunpack.c.h.b16 %v171
  %v777 = vunpack.c.l.b16 %v172
  %v778 = vunpack.c.h.b16 %v172
  %v779 = vunpack.c.l.b16 %v173
  %v780 = vunpack.c.h.b16 %v173
  %v781 = vunpack.c.l.b16 %v174
  %v782 = vunpack.c.h.b16 %v174
  %v783 = vunpack.c.l.b16 %v175
  %v784 = vunpack.c.h.b16 %v175
  %v785 = vunpack.c.l.b16 %v176
  %v786 = vunpack.c.h.b16 %v176
  %v787 = vunpack.c.l.b16 %v177
  %v788 = vunpack.c.h.b16 %v177
  %v789 = vunpack.c.l.b16 %v178
  %v790 = vunpack.c.h.b16 %v178
  %v791 = vunpack.c.l.b16 %v179
  %v792 = vunpack.c.h.b16 %v179
  %v793 = vunpack.c.l.b16 %v180
  %v794 = vunpack.c.h.b16 %v180
  %v795 = vunpack.c.l.b16 %v181
  %v796 = vunpack.c.h.b16 %v181
  %v797 = vunpack.c.l.b16 %v182
  %v798 = vunpack.c.h.b16 %v182
  %v799 = vunpack.c.l.b16 %v183
  %v800 = vunpack.c.h.b16 %v183
  %v801 = vunpack.c.l.b16 %v184
  %v802 = vunpack.c.h.b16 %v184
  %v803 = vunpack.c.l.b16 %v185
  %v804 = vunpack.c.h.b16 %v185
  %v805 = vunpack.c.l.b16 %v186
  %v806 = vunpack.c.h.b16 %v186
  %v807 = vunpack.c.l.b16 %v187
  %v808 = vunpack.c.h.b16 %v187
  %v809 = vunpack.c.l.b16 %v188
  %v810 = vunpack.c.h.b16 %v188
  %v811 = vunpack.c.l.b16 %v189
  %v812 = vunpack.c.h.b16 %v189
  %v813 = vunpack.c.l.b16 %v190
  %v814 = vunpack.c.h.b16 %v190
  %v815 = vunpack.c.l.b16 %v191
  %v816 = vunpack.c.h.b16 %v191
  %v817 = vunpack.c.l.b16 %v192
  %v818 = vunpack.c.h.b16 %v192
  %v819 = vunpack.c.l.b16 %v193
  %v820 = vunpack.c.h.b16 %v193
  %v821 = vunpack.c.l.b16 %v194
  %v822 = vunpack.c.h.b16 %v194
  %v823 = vunpack.c.l.b16 %v195
  %v824 = vunpack.c.h.b16 %v195
  %v825 = vunpack.c.l.b16 %v196
  %v826 = vunpack.c.h.b16 %v196
  %v827 = vunpack.c.l.b16 %v197
  %v828 = vunpack.c.h.b16 %v197
  %v829 = vunpack.c.l.b16 %v198
  %v830 = vunpack.c.h.b16 %v198
  %v831 = vunpack.c.l.b16 %v199
  %v832 = vunpack.c.h.b16 %v199
  %v833 = vunpack.c.l.b16 %v200
  %v834 = vunpack.c.h.b16 %v200
  %v835 = vunpack.c.l.b16 %v201
  %v836 = vunpack.c.h.b16 %v201
  %v837 = vunpack.c.l.b16 %v202
  %v838 = vunpack.c.h.b16 %v202
  %v839 = vunpack.c.l.b16 %v203
  %v840 = vunpack.c.h.b16 %v203
  %v841 = vunpack.c.l.b16 %v204
  %v842 = vunpack.c.h.b16 %v204
  %v843 = vunpack.c.l.b16 %v205
  %v844 = vunpack.c.h.b16 %v205
  %v845 = vunpack.c.l.b16 %v206
  %v846 = vunpack.c.h.b16 %v206
  %v847 = vunpack.c.l.b16 %v207
  %v848 = vunpack.c.h.b16 %v207
  %v849 = vunpack.c.l.b16 %v208
  %v850 = vunpack.c.h.b16 %v208
  %v851 = vunpack.c.l.b16 %v209
  %v852 = vunpack.c.h.b16 %v209
  %v853 = vunpack.c.l.b16 %v210
  %v854 = vunpack.c.h.b16 %v210
  %v855 = vunpack.c.l.b16 %v211
  %v856 = vunpack.c.h.b16 %v211
  %v857 = vunpack.c.l.b16 %v212
  %v858 = vunpack.c.h.b16 %v212
  %v859 = vunpack.c.l.b16 %v213
  %v860 = vunpack.c.h.b16 %v213
  %v861 = vunpack.c.l.b16 %v214
  %v862 = vunpack.c.h.b16 %v214
  %v863 = vunpack.c.l.b16 %v215
  %v864 = vunpack.c.h.b16 %v215
  %v865 = vunpack.c.l.b16 %v216
  %v866 = vunpack.c.h.b16 %v216
  %v867 = vunpack.c.l.b16 %v217
  %v868 = vunpack.c.h.b16 %v217
  %v869 = vunpack.c.l.b16 %v218
  %v870 = vunpack.c.h.b16 %v218
  %v871 = vpack.c.b16 %v491, %v487
  %v872 = vpack.c.b16 %v492, %v488
  %v873 = vpack.c.b16 %v493, %v489
  %v874 = vpack.c.b16 %v494, %v490
  %v875 = vpack.c.b16 %v499, %v495
  %v876 = vpack.c.b16 %v500, %v496
  %v877 = vpack.c.b16 %v501, %v497
  %v878 = vpack.c.b16 %v502, %v498
  %v879 = vpack.c.b16 %v507, %v503
  %v880 = vpack.c.b16 %v508, %v504
  %v881 = vpack.c.b16 %v509, %v505
  %v882 = vpack.c.b16 %v510, %v506
  %v883 = vpack.c.b16 %v515, %v511
  %v884 = vpack.c.b16 %v516, %v512
  %v885 = vpack.c.b16 %v517, %v513
  %v886 = vpack.c.b16 %v518, %v514
  %v887 = vpack.c.b16 %v523, %v519
  %v888 = vpack.c.b16 %v524, %v520
  %v889 = vpack.c.b16 %v525, %v521
  %v890 = vpack.c.b16 %v526, %v522
  %v891 = vpack.c.b16 %v531, %v527
  %v892 = vpack.c.b16 %v532, %v528
  %v893 = vpack.c.b16 %v533, %v529
  %v894 = vpack.c.b16 %v534, %v530
  %v895 = vpack.c.b16 %v539, %v535
  %v896 = vpack.c.b16 %v540, %v536
  %v897 = vpack.c.b16 %v541, %v537
  %v898 = vpack.c.b16 %v542, %v538
  %v899 = vpack.c.b16 %v547, %v543
  %v900 = vpack.c.b16 %v548, %v544
  %v901 = vpack.c.b16 %v549, %v545
  %v902 = vpack.c.b16 %v550, %v546
  %v903 = vpack.c.b16 %v555, %v551
  %v904 = vpack.c.b16 %v556, %v552
  %v905 = vpack.c.b16 %v557, %v553
  %v906 = vpack.c.b16 %v558, %v554
  %v907 = vpack.c.b16 %v563, %v559
  %v908 = vpack.c.b16 %v564, %v560
  %v909 = vpack.c.b16 %v565, %v561
  %v910 = vpack.c.b16 %v566, %v562
  %v911 = vpack.c.b16 %v571, %v567
  %v912 = vpack.c.b16 %v572, %v568
  %v913 = vpack.c.b16 %v573, %v569
  %v914 = vpack.c.b16 %v574, %v570
  %v915 = vpack.c.b16 %v579, %v575
  %v916 = vpack.c.b16 %v580, %v576
  %v917 = vpack.c.b16 %v581, %v577
  %v918 = vpack.c.b16 %v582, %v578
  %v919 = vpack.c.b16 %v587, %v583
  %v920 = vpack.c.b16 %v588, %v584
  %v921 = vpack.c.b16 %v589, %v585
  %v922 = vpack.c.b16 %v590, %v586
  %v923 = vpack.c.b16 %v595, %v591
  %v924 = vpack.c.b16 %v596, %v592
  %v925 = vpack.c.b16 %v597, %v593
  %v926 = vpack.c.b16 %v598, %v594
  %v927 = vpack.c.b16 %v603, %v599
  %v928 = vpack.c.b16 %v604, %v600
  %v929 = vpack.c.b16 %v605, %v601
  %v930 = vpack.c.b16 %v606, %v602
  %v931 = vpack.c.b16 %v611, %v607
  %v932 = vpack.c.b16 %v612, %v608
  %v933 = vpack.c.b16 %v613, %v609
  %v934 = vpack.c.b16 %v614, %v610
  %v935 = vpack.c.b16 %v619, %v615
  %v936 = vpack.c.b16 %v620, %v616
  %v937 = vpack.c.b16 %v621, %v617
  %v938 = vpack.c.b16 %v622, %v618
  %v939 = vpack.c.b16 %v627, %v623
  %v940 = vpack.c.b16 %v628, %v624
  %v941 = vpack.c.b16 %v629, %v625
  %v942 = vpack.c.b16 %v630, %v626
  %v943 = vpack.c.b16 %v635, %v631
  %v944 = vpack.c.b16 %v636, %v632
  %v945 = vpack.c.b16 %v637, %v633
  %v946 = vpack.c.b16 %v638, %v634
  %v947 = vpack.c.b16 %v643, %v639
  %v948 = vpack.c.b16 %v644, %v640
  %v949 = vpack.c.b16 %v645, %v641
  %v950 = vpack.c.b16 %v646, %v642
  %v951 = vpack.c.b16 %v651, %v647
  %v952 = vpack.c.b16 %v652, %v648
  %v953 = vpack.c.b16 %v653, %v649
  %v954 = vpack.c.b16 %v654, %v650
  %v955 = vpack.c.b16 %v659, %v655
  %v956 = vpack.c.b16 %v660, %v656
  %v957 = vpack.c.b16 %v661, %v657
  %v958 = vpack.c.b16 %v662, %v658
  %v959 = vpack.c.b16 %v667, %v663
  %v960 = vpack.c.b16 %v668, %v664
  %v961 = vpack.c.b16 %v669, %v665
  %v962 = vpack.c.b16 %v670, %v666
  %v963 = vpack.c.b16 %v675, %v671
  %v964 = vpack.c.b16 %v676, %v672
  %v965 = vpack.c.b16 %v677, %v673
  %v966 = vpack.c.b16 %v678, %v674
  %v967 = vpack.c.b16 %v683, %v679
  %v968 = vpack.c.b16 %v684, %v680
  %v969 = vpack.c.b16 %v685, %v681
  %v970 = vpack.c.b16 %v686, %v682
  %v971 = vpack.c.b16 %v691, %v687
  %v972 = vpack.c.b16 %v692, %v688
  %v973 = vpack.c.b16 %v693, %v689
  %v974 = vpack.c.b16 %v694, %v690
  %v975 = vpack.c.b16 %v699, %v695
  %v976 = vpack.c.b16 %v700, %v696
  %v977 = vpack.c.b16 %v701, %v697
  %v978 = vpack.c.b16 %v702, %v698
  %v979 = vpack.c.b16 %v707, %v703
  %v980 = vpack.c.b16 %v708, %v704
  %v981 = vpack.c.b16 %v709, %v705
  %v982 = vpack.c.b16 %v710, %v706
  %v983 = vpack.c.b16 %v715, %v711
  %v984 = vpack.c.b16 %v716, %v712
  %v985 = vpack.c.b16 %v717, %v713
  %v986 = vpack.c.b16 %v718, %v714
  %v987 = vpack.c.b16 %v723, %v719
  %v988 = vpack.c.b16 %v724, %v720
  %v989 = vpack.c.b16 %v725, %v721
  %v990 = vpack.c.b16 %v726, %v722
  %v991 = vpack.c.b16 %v731, %v727
  %v992 = vpack.c.b16 %v732, %v728
  %v993 = vpack.c.b16 %v733, %v729
  %v994 = vpack.c.b16 %v734, %v730
  %v995 = vpack.c.b16 %v739, %v735
  %v996 = vpack.c.b16 %v740, %v736
  %v997 = vpack.c.b16 %v741, %v737
  %v998 = vpack.c.b16 %v742, %v738
  %v999 = vpack.c.b16 %v747, %v743
  %v1000 = vpack.c.b16 %v748, %v744
  %v1001 = vpack.c.b16 %v749, %v745
  %v1002 = vpack.c.b16 %v750, %v746
  %v1003 = vpack.c.b16 %v755, %v751
  %v1004 = vpack.c.b16 %v756, %v752
  %v1005 = vpack.c.b16 %v757, %v753
  %v1006 = vpack.c.b16 %v758, %v754
  %v1007 = vpack.c.b16 %v763, %v759
  %v1008 = vpack.c.b16 %v764, %v760
  %v1009 = vpack.c.b16 %v765, %v761
  %v1010 = vpack.c.b16 %v766, %v762
  %v1011 = vpack.c.b16 %v771, %v767
  %v1012 = vpack.c.b16 %v772, %v768
  %v1013 = vpack.c.b16 %v773, %v769
  %v1014 = vpack.c.b16 %v774, %v770
  %v1015 = vpack.c.b16 %v779, %v775
  %v1016 = vpack.c.b16 %v780, %v776
  %v1017 = vpack.c.b16 %v781, %v777
  %v1018 = vpack.c.b16 %v782, %v778
  %v1019 = vpack.c.b16 %v787, %v783
  %v1020 = vpack.c.b16 %v788, %v784
  %v1021 = vpack.c.b16 %v789, %v785
  %v1022 = vpack.c.b16 %v790, %v786
  %v1023 = vpack.c.b16 %v795, %v791
  %v1024 = vpack.c.b16 %v796, %v792
  %v1025 = vpack.c.b16 %v797, %v793
  %v1026 = vpack.c.b16 %v798, %v794
  %v1027 = vpack.c.b16 %v803, %v799
  %v1028 = vpack.c.b16 %v804, %v800
  %v1029 = vpack.c.b16 %v805, %v801
  %v1030 = vpack.c.b16 %v806, %v802
  %v1031 = vpack.c.b16 %v811, %v807
  %v1032 = vpack.c.b16 %v812, %v808
  %v1033 = vpack.c.b16 %v813, %v809
  %v1034 = vpack.c.b16 %v814, %v810
  %v1035 = vpack.c.b16 %v819, %v815
  %v1036 = vpack.c.b16 %v820, %v816
  %v1037 = vpack.c.b16 %v821, %v817
  %v1038 = vpack.c.b16 %v822, %v818
  %v1039 = vpack.c.b16 %v827, %v823
  %v1040 = vpack.c.b16 %v828, %v824
  %v1041 = vpack.c.b16 %v829, %v825
  %v1042 = vpack.c.b16 %v830, %v826
  %v1043 = vpack.c.b16 %v835, %v831
  %v1044 = vpack.c.b16 %v836, %v832
  %v1045 = vpack.c.b16 %v837, %v833
  %v1046 = vpack.c.b16 %v838, %v834
  %v1047 = vpack.c.b16 %v843, %v839
  %v1048 = vpack.c.b16 %v844, %v840
  %v1049 = vpack.c.b16 %v845, %v841
  %v1050 = vpack.c.b16 %v846, %v842
  %v1051 = vpack.c.b16 %v851, %v847
  %v1052 = vpack.c.b16 %v852, %v848
  %v1053 = vpack.c.b16 %v853, %v849
  %v1054 = vpack.c.b16 %v854, %v850
  %v1055 = vpack.c.b16 %v859, %v855
  %v1056 = vpack.c.b16 %v860, %v856
  %v1057 = vpack.c.b16 %v861, %v857
  %v1058 = vpack.c.b16 %v862, %v858
  %v1059 = vpack.c.b16 %v867, %v863
  %v1060 = vpack.c.b16 %v868, %v864
  %v1061 = vpack.c.b16 %v869, %v865
  %v1062 = vpack.c.b16 %v870, %v866
  %1255 = vmatprep.subr.bf16.mxu0 %v872
  %1256 = vmatpush1.bf16.msra.mxu0 %v871
  %1257 = vmatprep.subr.bf16.mxu0 %v876
  %1258 = vmatpush1.bf16.msra.mxu0 %v875
  %1259 = vmatprep.subr.bf16.mxu0 %v880
  %1260 = vmatpush1.bf16.msra.mxu0 %v879
  %1261 = vmatprep.subr.bf16.mxu0 %v884
  %1262 = vmatpush1.bf16.msra.mxu0 %v883
  %1263 = vmatprep.subr.bf16.mxu0 %v888
  %1264 = vmatpush1.bf16.msra.mxu0 %v887
  %1265 = vmatprep.subr.bf16.mxu0 %v892
  %1266 = vmatpush1.bf16.msra.mxu0 %v891
  %1267 = vmatprep.subr.bf16.mxu0 %v896
  %1268 = vmatpush1.bf16.msra.mxu0 %v895
  %1269 = vmatprep.subr.bf16.mxu0 %v900
  %1270 = vmatpush1.bf16.msra.mxu0 %v899
  %1271 = vmatprep.subr.bf16.mxu0 %v904
  %1272 = vmatpush1.bf16.msra.mxu0 %v903
  %1273 = vmatprep.subr.bf16.mxu0 %v908
  %1274 = vmatpush1.bf16.msra.mxu0 %v907
  %1275 = vmatprep.subr.bf16.mxu0 %v912
  %1276 = vmatpush1.bf16.msra.mxu0 %v911
  %1277 = vmatprep.subr.bf16.mxu0 %v916
  %1278 = vmatpush1.bf16.msra.mxu0 %v915
  %1279 = vmatprep.subr.bf16.mxu0 %v920
  %1280 = vmatpush1.bf16.msra.mxu0 %v919
  %1281 = vmatprep.subr.bf16.mxu0 %v924
  %1282 = vmatpush1.bf16.msra.mxu0 %v923
  %1283 = vmatprep.subr.bf16.mxu0 %v928
  %1284 = vmatpush1.bf16.msra.mxu0 %v927
  %1285 = vmatprep.subr.bf16.mxu0 %v932
  %1286 = vmatpush1.bf16.msra.mxu0 %v931
  %1287 = vmatprep.mubr.bf16.mxu0 %v279
  %1288 = vmatmul.mubr.bf16.gmra.mrb[0].mxu0 %v265
  %v1289 = vpop.f32.mrb[0].mxu0
  %v1290 = vadd.f32 %v224, %v1289
  %v1291 = vpop.f32.mrb[0].mxu0
  %v1292 = vadd.f32 %v228, %v1291
  %v1293 = vpop.f32.mrb[0].mxu0
  %v1294 = vpop.f32.mrb[0].mxu0
  %1295 = vdwg.mxu0
  %1296 = vmatprep.subr.bf16.mxu0 %v936
  %1297 = vmatpush1.bf16.msra.mxu0 %v935
  %1298 = vmatprep.subr.bf16.mxu0 %v940
  %1299 = vmatpush1.bf16.msra.mxu0 %v939
  %1300 = vmatprep.subr.bf16.mxu0 %v944
  %1301 = vmatpush1.bf16.msra.mxu0 %v943
  %1302 = vmatprep.subr.bf16.mxu0 %v948
  %1303 = vmatpush1.bf16.msra.mxu0 %v947
  %1304 = vmatprep.subr.bf16.mxu0 %v952
  %1305 = vmatpush1.bf16.msra.mxu0 %v951
  %1306 = vmatprep.subr.bf16.mxu0 %v956
  %1307 = vmatpush1.bf16.msra.mxu0 %v955
  %1308 = vmatprep.subr.bf16.mxu0 %v960
  %1309 = vmatpush1.bf16.msra.mxu0 %v959
  %1310 = vmatprep.subr.bf16.mxu0 %v964
  %1311 = vmatpush1.bf16.msra.mxu0 %v963
  %1312 = vmatprep.subr.bf16.mxu0 %v968
  %1313 = vmatpush1.bf16.msra.mxu0 %v967
  %1314 = vmatprep.subr.bf16.mxu0 %v972
  %1315 = vmatpush1.bf16.msra.mxu0 %v971
  %1316 = vmatprep.subr.bf16.mxu0 %v976
  %1317 = vmatpush1.bf16.msra.mxu0 %v975
  %1318 = vmatprep.subr.bf16.mxu0 %v980
  %1319 = vmatpush1.bf16.msra.mxu0 %v979
  %1320 = vmatprep.subr.bf16.mxu0 %v984
  %1321 = vmatpush1.bf16.msra.mxu0 %v983
  %1322 = vmatprep.subr.bf16.mxu0 %v988
  %1323 = vmatpush1.bf16.msra.mxu0 %v987
  %1324 = vmatprep.subr.bf16.mxu0 %v992
  %1325 = vmatpush1.bf16.msra.mxu0 %v991
  %1326 = vmatprep.subr.bf16.mxu0 %v996
  %1327 = vmatpush1.bf16.msra.mxu0 %v995
  %1328 = vmatprep.mubr.bf16.mxu0 %v288
  %1329 = vmatmul.mubr.bf16.gmra.mrb[0].mxu0 %v287
  %v1330 = vpop.f32.mrb[0].mxu0
  %v1331 = vadd.f32 %v1290, %v1330
  %v1332 = vpop.f32.mrb[0].mxu0
  %v1333 = vadd.f32 %v1292, %v1332
  %v1334 = vpop.f32.mrb[0].mxu0
  %v1335 = vpop.f32.mrb[0].mxu0
  %1336 = vdwg.mxu0
  %1337 = vmatprep.subr.bf16.mxu0 %v1000
  %1338 = vmatpush1.bf16.msra.mxu0 %v999
  %1339 = vmatprep.subr.bf16.mxu0 %v1004
  %1340 = vmatpush1.bf16.msra.mxu0 %v1003
  %1341 = vmatprep.subr.bf16.mxu0 %v1008
  %1342 = vmatpush1.bf16.msra.mxu0 %v1007
  %1343 = vmatprep.subr.bf16.mxu0 %v1012
  %1344 = vmatpush1.bf16.msra.mxu0 %v1011
  %1345 = vmatprep.subr.bf16.mxu0 %v1016
  %1346 = vmatpush1.bf16.msra.mxu0 %v1015
  %1347 = vmatprep.subr.bf16.mxu0 %v1020
  %1348 = vmatpush1.bf16.msra.mxu0 %v1019
  %1349 = vmatprep.subr.bf16.mxu0 %v1024
  %1350 = vmatpush1.bf16.msra.mxu0 %v1023
  %1351 = vmatprep.subr.bf16.mxu0 %v1028
  %1352 = vmatpush1.bf16.msra.mxu0 %v1027
  %1353 = vmatprep.subr.bf16.mxu0 %v1032
  %1354 = vmatpush1.bf16.msra.mxu0 %v1031
  %1355 = vmatprep.subr.bf16.mxu0 %v1036
  %1356 = vmatpush1.bf16.msra.mxu0 %v1035
  %1357 = vmatprep.subr.bf16.mxu0 %v1040
  %1358 = vmatpush1.bf16.msra.mxu0 %v1039
  %1359 = vmatprep.subr.bf16.mxu0 %v1044
  %1360 = vmatpush1.bf16.msra.mxu0 %v1043
  %1361 = vmatprep.subr.bf16.mxu0 %v1048
  %1362 = vmatpush1.bf16.msra.mxu0 %v1047
  %1363 = vmatprep.subr.bf16.mxu0 %v1052
  %1364 = vmatpush1.bf16.msra.mxu0 %v1051
  %1365 = vmatprep.subr.bf16.mxu0 %v1056
  %1366 = vmatpush1.bf16.msra.mxu0 %v1055
  %1367 = vmatprep.subr.bf16.mxu0 %v1060
  %1368 = vmatpush1.bf16.msra.mxu0 %v1059
  %1369 = vmatprep.mubr.bf16.mxu0 %v286
  %1370 = vmatmul.mubr.bf16.gmra.mrb[0].mxu0 %v272
  %v1371 = vpop.f32.mrb[0].mxu0
  %v1372 = vadd.f32 %v1331, %v1371
  %v1373 = vpop.f32.mrb[0].mxu0
  %v1374 = vadd.f32 %v1333, %v1373
  %v1375 = vpop.f32.mrb[0].mxu0
  %v1376 = vpop.f32.mrb[0].mxu0
  %1377 = vdwg.mxu0
  %1378 = vmatprep.subr.bf16.mxu0 %v874
  %1379 = vmatpush1.bf16.msra.mxu0 %v873
  %1380 = vmatprep.subr.bf16.mxu0 %v878
  %1381 = vmatpush1.bf16.msra.mxu0 %v877
  %1382 = vmatprep.subr.bf16.mxu0 %v882
  %1383 = vmatpush1.bf16.msra.mxu0 %v881
  %1384 = vmatprep.subr.bf16.mxu0 %v886
  %1385 = vmatpush1.bf16.msra.mxu0 %v885
  %1386 = vmatprep.subr.bf16.mxu0 %v890
  %1387 = vmatpush1.bf16.msra.mxu0 %v889
  %1388 = vmatprep.subr.bf16.mxu0 %v894
  %1389 = vmatpush1.bf16.msra.mxu0 %v893
  %1390 = vmatprep.subr.bf16.mxu0 %v898
  %1391 = vmatpush1.bf16.msra.mxu0 %v897
  %1392 = vmatprep.subr.bf16.mxu0 %v902
  %1393 = vmatpush1.bf16.msra.mxu0 %v901
  %1394 = vmatprep.subr.bf16.mxu0 %v906
  %1395 = vmatpush1.bf16.msra.mxu0 %v905
  %1396 = vmatprep.subr.bf16.mxu0 %v910
  %1397 = vmatpush1.bf16.msra.mxu0 %v909
  %1398 = vmatprep.subr.bf16.mxu0 %v914
  %1399 = vmatpush1.bf16.msra.mxu0 %v913
  %1400 = vmatprep.subr.bf16.mxu0 %v918
  %1401 = vmatpush1.bf16.msra.mxu0 %v917
  %1402 = vmatprep.subr.bf16.mxu0 %v922
  %1403 = vmatpush1.bf16.msra.mxu0 %v921
  %1404 = vmatprep.subr.bf16.mxu0 %v926
  %1405 = vmatpush1.bf16.msra.mxu0 %v925
  %1406 = vmatprep.subr.bf16.mxu0 %v930
  %1407 = vmatpush1.bf16.msra.mxu0 %v929
  %1408 = vmatprep.subr.bf16.mxu0 %v934
  %1409 = vmatpush1.bf16.msra.mxu0 %v933
  %1410 = vmatprep.mubr.bf16.mxu0 %v279
  %1411 = vmatmul.mubr.bf16.gmra.mrb[0].mxu0 %v265
  %v1412 = vpop.f32.mrb[0].mxu0
  %v1413 = vadd.f32 %v232, %v1412
  %v1414 = vpop.f32.mrb[0].mxu0
  %v1415 = vadd.f32 %v236, %v1414
  %v1416 = vpop.f32.mrb[0].mxu0
  %v1417 = vpop.f32.mrb[0].mxu0
  %1418 = vdwg.mxu0
  %1419 = vmatprep.subr.bf16.mxu0 %v938
  %1420 = vmatpush1.bf16.msra.mxu0 %v937
  %1421 = vmatprep.subr.bf16.mxu0 %v942
  %1422 = vmatpush1.bf16.msra.mxu0 %v941
  %1423 = vmatprep.subr.bf16.mxu0 %v946
  %1424 = vmatpush1.bf16.msra.mxu0 %v945
  %1425 = vmatprep.subr.bf16.mxu0 %v950
  %1426 = vmatpush1.bf16.msra.mxu0 %v949
  %1427 = vmatprep.subr.bf16.mxu0 %v954
  %1428 = vmatpush1.bf16.msra.mxu0 %v953
  %1429 = vmatprep.subr.bf16.mxu0 %v958
  %1430 = vmatpush1.bf16.msra.mxu0 %v957
  %1431 = vmatprep.subr.bf16.mxu0 %v962
  %1432 = vmatpush1.bf16.msra.mxu0 %v961
  %1433 = vmatprep.subr.bf16.mxu0 %v966
  %1434 = vmatpush1.bf16.msra.mxu0 %v965
  %1435 = vmatprep.subr.bf16.mxu0 %v970
  %1436 = vmatpush1.bf16.msra.mxu0 %v969
  %1437 = vmatprep.subr.bf16.mxu0 %v974
  %1438 = vmatpush1.bf16.msra.mxu0 %v973
  %1439 = vmatprep.subr.bf16.mxu0 %v978
  %1440 = vmatpush1.bf16.msra.mxu0 %v977
  %1441 = vmatprep.subr.bf16.mxu0 %v982
  %1442 = vmatpush1.bf16.msra.mxu0 %v981
  %1443 = vmatprep.subr.bf16.mxu0 %v986
  %1444 = vmatpush1.bf16.msra.mxu0 %v985
  %1445 = vmatprep.subr.bf16.mxu0 %v990
  %1446 = vmatpush1.bf16.msra.mxu0 %v989
  %1447 = vmatprep.subr.bf16.mxu0 %v994
  %1448 = vmatpush1.bf16.msra.mxu0 %v993
  %1449 = vmatprep.subr.bf16.mxu0 %v998
  %1450 = vmatpush1.bf16.msra.mxu0 %v997
  %1451 = vmatprep.mubr.bf16.mxu0 %v288
  %1452 = vmatmul.mubr.bf16.gmra.mrb[0].mxu0 %v287
  %v1453 = vpop.f32.mrb[0].mxu0
  %v1454 = vadd.f32 %v1413, %v1453
  %v1455 = vpop.f32.mrb[0].mxu0
  %v1456 = vadd.f32 %v1415, %v1455
  %v1457 = vpop.f32.mrb[0].mxu0
  %v1458 = vpop.f32.mrb[0].mxu0
  %1459 = vdwg.mxu0
  %1460 = vmatprep.subr.bf16.mxu0 %v1002
  %1461 = vmatpush1.bf16.msra.mxu0 %v1001
  %1462 = vmatprep.subr.bf16.mxu0 %v1006
  %1463 = vmatpush1.bf16.msra.mxu0 %v1005
  %1464 = vmatprep.subr.bf16.mxu0 %v1010
  %1465 = vmatpush1.bf16.msra.mxu0 %v1009
  %1466 = vmatprep.subr.bf16.mxu0 %v1014
  %1467 = vmatpush1.bf16.msra.mxu0 %v1013
  %1468 = vmatprep.subr.bf16.mxu0 %v1018
  %1469 = vmatpush1.bf16.msra.mxu0 %v1017
  %1470 = vmatprep.subr.bf16.mxu0 %v1022
  %1471 = vmatpush1.bf16.msra.mxu0 %v1021
  %1472 = vmatprep.subr.bf16.mxu0 %v1026
  %1473 = vmatpush1.bf16.msra.mxu0 %v1025
  %1474 = vmatprep.subr.bf16.mxu0 %v1030
  %1475 = vmatpush1.bf16.msra.mxu0 %v1029
  %1476 = vmatprep.subr.bf16.mxu0 %v1034
  %1477 = vmatpush1.bf16.msra.mxu0 %v1033
  %1478 = vmatprep.subr.bf16.mxu0 %v1038
  %1479 = vmatpush1.bf16.msra.mxu0 %v1037
  %1480 = vmatprep.subr.bf16.mxu0 %v1042
  %1481 = vmatpush1.bf16.msra.mxu0 %v1041
  %1482 = vmatprep.subr.bf16.mxu0 %v1046
  %1483 = vmatpush1.bf16.msra.mxu0 %v1045
  %1484 = vmatprep.subr.bf16.mxu0 %v1050
  %1485 = vmatpush1.bf16.msra.mxu0 %v1049
  %1486 = vmatprep.subr.bf16.mxu0 %v1054
  %1487 = vmatpush1.bf16.msra.mxu0 %v1053
  %1488 = vmatprep.subr.bf16.mxu0 %v1058
  %1489 = vmatpush1.bf16.msra.mxu0 %v1057
  %1490 = vmatprep.subr.bf16.mxu0 %v1062
  %1491 = vmatpush1.bf16.msra.mxu0 %v1061
  %1492 = vmatprep.mubr.bf16.mxu0 %v286
  %1493 = vmatmul.mubr.bf16.gmra.mrb[0].mxu0 %v272
  %v1494 = vpop.f32.mrb[0].mxu0
  %v1495 = vadd.f32 %v1454, %v1494
  %v1496 = vpop.f32.mrb[0].mxu0
  %v1497 = vadd.f32 %v1456, %v1496
  %v1498 = vpop.f32.mrb[0].mxu0
  %v1499 = vpop.f32.mrb[0].mxu0
  %1500 = vdwg.mxu0
  %v1501 = vmax.f32 %v1372, 0.0
  %v1502 = vmax.f32 %v1374, 0.0
  %v1503 = vmax.f32 %v1495, 0.0
  %v1504 = vmax.f32 %v1497, 0.0
  %v1505 = vpack.c.bf16 %v1501, %v1501
  %v1506 = vpack.c.bf16 %v1502, %v1502
  %v1507 = vpack.c.bf16 %v1503, %v1503
  %v1508 = vpack.c.bf16 %v1504, %v1504
  %v1509 = vld [vmem:[%s2] sm:$0xff]
  %v1510 = vld [vmem:[%s2 + $0x8] sm:$0xff]
  %v1511 = vld [vmem:[%s2 + $0x10] sm:$0xff]
  %v1512 = vld [vmem:[%s2 + $0x18] sm:$0xff]
  %v1513 = vld [vmem:[%s2 + $0x20] sm:$0xff]
  %v1514 = vld [vmem:[%s2 + $0x28] sm:$0xff]
  %v1515 = vld [vmem:[%s2 + $0x30] sm:$0xff]
  %v1516 = vld [vmem:[%s2 + $0x38] sm:$0xff]
  %v1517 = vld [vmem:[%s2 + $0x40] sm:$0xff]
  %v1518 = vld [vmem:[%s2 + $0x48] sm:$0xff]
  %v1519 = vld [vmem:[%s2 + $0x50] sm:$0xff]
  %v1520 = vld [vmem:[%s2 + $0x58] sm:$0xff]
  %v1521 = vld [vmem:[%s2 + $0x60] sm:$0xff]
  %v1522 = vld [vmem:[%s2 + $0x68] sm:$0xff]
  %v1523 = vld [vmem:[%s2 + $0x70] sm:$0xff]
  %v1524 = vld [vmem:[%s2 + $0x78] sm:$0xff]
  %v1525 = vld [vmem:[%s2 + $0x80] sm:$0xff]
  %v1526 = vld [vmem:[%s2 + $0x88] sm:$0xff]
  %v1527 = vld [vmem:[%s2 + $0x90] sm:$0xff]
  %v1528 = vld [vmem:[%s2 + $0x98] sm:$0xff]
  %v1529 = vld [vmem:[%s2 + $0xa0] sm:$0xff]
  %v1530 = vld [vmem:[%s2 + $0xa8] sm:$0xff]
  %v1531 = vld [vmem:[%s2 + $0xb0] sm:$0xff]
  %v1532 = vld [vmem:[%s2 + $0xb8] sm:$0xff]
  %v1533 = vld [vmem:[%s2 + $0xc0] sm:$0xff]
  %v1534 = vld [vmem:[%s2 + $0xc8] sm:$0xff]
  %v1535 = vld [vmem:[%s2 + $0xd0] sm:$0xff]
  %v1536 = vld [vmem:[%s2 + $0xd8] sm:$0xff]
  %v1537 = vld [vmem:[%s2 + $0xe0] sm:$0xff]
  %v1538 = vld [vmem:[%s2 + $0xe8] sm:$0xff]
  %v1539 = vld [vmem:[%s2 + $0xf0] sm:$0xff]
  %v1540 = vld [vmem:[%s2 + $0xf8] sm:$0xff]
  %v1541 = vld [vmem:[%s2 + $0x100] sm:$0xff]
  %v1542 = vld [vmem:[%s2 + $0x108] sm:$0xff]
  %v1543 = vld [vmem:[%s2 + $0x110] sm:$0xff]
  %v1544 = vld [vmem:[%s2 + $0x118] sm:$0xff]
  %v1545 = vld [vmem:[%s2 + $0x120] sm:$0xff]
  %v1546 = vld [vmem:[%s2 + $0x128] sm:$0xff]
  %v1547 = vld [vmem:[%s2 + $0x130] sm:$0xff]
  %v1548 = vld [vmem:[%s2 + $0x138] sm:$0xff]
  %v1549 = vld [vmem:[%s2 + $0x140] sm:$0xff]
  %v1550 = vld [vmem:[%s2 + $0x148] sm:$0xff]
  %v1551 = vld [vmem:[%s2 + $0x150] sm:$0xff]
  %v1552 = vld [vmem:[%s2 + $0x158] sm:$0xff]
  %v1553 = vld [vmem:[%s2 + $0x160] sm:$0xff]
  %v1554 = vld [vmem:[%s2 + $0x168] sm:$0xff]
  %v1555 = vld [vmem:[%s2 + $0x170] sm:$0xff]
  %v1556 = vld [vmem:[%s2 + $0x178] sm:$0xff]
  %v1557 = vld [vmem:[%s2 + $0x180] sm:$0xff]
  %v1558 = vld [vmem:[%s2 + $0x188] sm:$0xff]
  %v1559 = vld [vmem:[%s2 + $0x190] sm:$0xff]
  %v1560 = vld [vmem:[%s2 + $0x198] sm:$0xff]
  %v1561 = vld [vmem:[%s2 + $0x1a0] sm:$0xff]
  %v1562 = vld [vmem:[%s2 + $0x1a8] sm:$0xff]
  %v1563 = vld [vmem:[%s2 + $0x1b0] sm:$0xff]
  %v1564 = vld [vmem:[%s2 + $0x1b8] sm:$0xff]
  %v1565 = vld [vmem:[%s2 + $0x1c0] sm:$0xff]
  %v1566 = vld [vmem:[%s2 + $0x1c8] sm:$0xff]
  %v1567 = vld [vmem:[%s2 + $0x1d0] sm:$0xff]
  %v1568 = vld [vmem:[%s2 + $0x1d8] sm:$0xff]
  %v1569 = vld [vmem:[%s2 + $0x1e0] sm:$0xff]
  %v1570 = vld [vmem:[%s2 + $0x1e8] sm:$0xff]
  %v1571 = vld [vmem:[%s2 + $0x1f0] sm:$0xff]
  %v1572 = vld [vmem:[%s2 + $0x1f8] sm:$0xff]
  %s1573 = scalar_lea.vmem %s6, 1
  %v1574 = vld [vmem:[%s1573] ss:$8 sm:$0x3]
  %v1576 = vlaneseq
  %v1577 = vshrl.u32 %v1576, 7
  %v1578 = vsub.s32 0, %v1577
  %v1579 = vrot.slane %v1574, %v1578
  %v1580 = vlaneseq
  %v1581 = vshrl.u32 %v1580, 7
  %v1582 = vsub.s32 1, %v1581
  %v1583 = vrot.slane %v1574, %v1582
  %v1650 = vunpack.c.l.b16 %v1509
  %v1651 = vunpack.c.h.b16 %v1509
  %v1652 = vunpack.c.l.b16 %v1510
  %v1653 = vunpack.c.h.b16 %v1510
  %v1654 = vunpack.c.l.b16 %v1511
  %v1655 = vunpack.c.h.b16 %v1511
  %v1656 = vunpack.c.l.b16 %v1512
  %v1657 = vunpack.c.h.b16 %v1512
  %v1658 = vunpack.c.l.b16 %v1513
  %v1659 = vunpack.c.h.b16 %v1513
  %v1660 = vunpack.c.l.b16 %v1514
  %v1661 = vunpack.c.h.b16 %v1514
  %v1662 = vunpack.c.l.b16 %v1515
  %v1663 = vunpack.c.h.b16 %v1515
  %v1664 = vunpack.c.l.b16 %v1516
  %v1665 = vunpack.c.h.b16 %v1516
  %v1666 = vunpack.c.l.b16 %v1517
  %v1667 = vunpack.c.h.b16 %v1517
  %v1668 = vunpack.c.l.b16 %v1518
  %v1669 = vunpack.c.h.b16 %v1518
  %v1670 = vunpack.c.l.b16 %v1519
  %v1671 = vunpack.c.h.b16 %v1519
  %v1672 = vunpack.c.l.b16 %v1520
  %v1673 = vunpack.c.h.b16 %v1520
  %v1674 = vunpack.c.l.b16 %v1521
  %v1675 = vunpack.c.h.b16 %v1521
  %v1676 = vunpack.c.l.b16 %v1522
  %v1677 = vunpack.c.h.b16 %v1522
  %v1678 = vunpack.c.l.b16 %v1523
  %v1679 = vunpack.c.h.b16 %v1523
  %v1680 = vunpack.c.l.b16 %v1524
  %v1681 = vunpack.c.h.b16 %v1524
  %v1682 = vunpack.c.l.b16 %v1525
  %v1683 = vunpack.c.h.b16 %v1525
  %v1684 = vunpack.c.l.b16 %v1526
  %v1685 = vunpack.c.h.b16 %v1526
  %v1686 = vunpack.c.l.b16 %v1527
  %v1687 = vunpack.c.h.b16 %v1527
  %v1688 = vunpack.c.l.b16 %v1528
  %v1689 = vunpack.c.h.b16 %v1528
  %v1690 = vunpack.c.l.b16 %v1529
  %v1691 = vunpack.c.h.b16 %v1529
  %v1692 = vunpack.c.l.b16 %v1530
  %v1693 = vunpack.c.h.b16 %v1530
  %v1694 = vunpack.c.l.b16 %v1531
  %v1695 = vunpack.c.h.b16 %v1531
  %v1696 = vunpack.c.l.b16 %v1532
  %v1697 = vunpack.c.h.b16 %v1532
  %v1698 = vunpack.c.l.b16 %v1533
  %v1699 = vunpack.c.h.b16 %v1533
  %v1700 = vunpack.c.l.b16 %v1534
  %v1701 = vunpack.c.h.b16 %v1534
  %v1702 = vunpack.c.l.b16 %v1535
  %v1703 = vunpack.c.h.b16 %v1535
  %v1704 = vunpack.c.l.b16 %v1536
  %v1705 = vunpack.c.h.b16 %v1536
  %v1706 = vunpack.c.l.b16 %v1537
  %v1707 = vunpack.c.h.b16 %v1537
  %v1708 = vunpack.c.l.b16 %v1538
  %v1709 = vunpack.c.h.b16 %v1538
  %v1710 = vunpack.c.l.b16 %v1539
  %v1711 = vunpack.c.h.b16 %v1539
  %v1712 = vunpack.c.l.b16 %v1540
  %v1713 = vunpack.c.h.b16 %v1540
  %v1714 = vunpack.c.l.b16 %v1541
  %v1715 = vunpack.c.h.b16 %v1541
  %v1716 = vunpack.c.l.b16 %v1542
  %v1717 = vunpack.c.h.b16 %v1542
  %v1718 = vunpack.c.l.b16 %v1543
  %v1719 = vunpack.c.h.b16 %v1543
  %v1720 = vunpack.c.l.b16 %v1544
  %v1721 = vunpack.c.h.b16 %v1544
  %v1722 = vunpack.c.l.b16 %v1545
  %v1723 = vunpack.c.h.b16 %v1545
  %v1724 = vunpack.c.l.b16 %v1546
  %v1725 = vunpack.c.h.b16 %v1546
  %v1726 = vunpack.c.l.b16 %v1547
  %v1727 = vunpack.c.h.b16 %v1547
  %v1728 = vunpack.c.l.b16 %v1548
  %v1729 = vunpack.c.h.b16 %v1548
  %v1730 = vunpack.c.l.b16 %v1549
  %v1731 = vunpack.c.h.b16 %v1549
  %v1732 = vunpack.c.l.b16 %v1550
  %v1733 = vunpack.c.h.b16 %v1550
  %v1734 = vunpack.c.l.b16 %v1551
  %v1735 = vunpack.c.h.b16 %v1551
  %v1736 = vunpack.c.l.b16 %v1552
  %v1737 = vunpack.c.h.b16 %v1552
  %v1738 = vunpack.c.l.b16 %v1553
  %v1739 = vunpack.c.h.b16 %v1553
  %v1740 = vunpack.c.l.b16 %v1554
  %v1741 = vunpack.c.h.b16 %v1554
  %v1742 = vunpack.c.l.b16 %v1555
  %v1743 = vunpack.c.h.b16 %v1555
  %v1744 = vunpack.c.l.b16 %v1556
  %v1745 = vunpack.c.h.b16 %v1556
  %v1746 = vunpack.c.l.b16 %v1557
  %v1747 = vunpack.c.h.b16 %v1557
  %v1748 = vunpack.c.l.b16 %v1558
  %v1749 = vunpack.c.h.b16 %v1558
  %v1750 = vunpack.c.l.b16 %v1559
  %v1751 = vunpack.c.h.b16 %v1559
  %v1752 = vunpack.c.l.b16 %v1560
  %v1753 = vunpack.c.h.b16 %v1560
  %v1754 = vunpack.c.l.b16 %v1561
  %v1755 = vunpack.c.h.b16 %v1561
  %v1756 = vunpack.c.l.b16 %v1562
  %v1757 = vunpack.c.h.b16 %v1562
  %v1758 = vunpack.c.l.b16 %v1563
  %v1759 = vunpack.c.h.b16 %v1563
  %v1760 = vunpack.c.l.b16 %v1564
  %v1761 = vunpack.c.h.b16 %v1564
  %v1762 = vunpack.c.l.b16 %v1565
  %v1763 = vunpack.c.h.b16 %v1565
  %v1764 = vunpack.c.l.b16 %v1566
  %v1765 = vunpack.c.h.b16 %v1566
  %v1766 = vunpack.c.l.b16 %v1567
  %v1767 = vunpack.c.h.b16 %v1567
  %v1768 = vunpack.c.l.b16 %v1568
  %v1769 = vunpack.c.h.b16 %v1568
  %v1770 = vunpack.c.l.b16 %v1569
  %v1771 = vunpack.c.h.b16 %v1569
  %v1772 = vunpack.c.l.b16 %v1570
  %v1773 = vunpack.c.h.b16 %v1570
  %v1774 = vunpack.c.l.b16 %v1571
  %v1775 = vunpack.c.h.b16 %v1571
  %v1776 = vunpack.c.l.b16 %v1572
  %v1777 = vunpack.c.h.b16 %v1572
  %v1778 = vpack.c.b16 %v1652, %v1650
  %v1779 = vpack.c.b16 %v1653, %v1651
  %v1780 = vpack.c.b16 %v1656, %v1654
  %v1781 = vpack.c.b16 %v1657, %v1655
  %v1782 = vpack.c.b16 %v1660, %v1658
  %v1783 = vpack.c.b16 %v1661, %v1659
  %v1784 = vpack.c.b16 %v1664, %v1662
  %v1785 = vpack.c.b16 %v1665, %v1663
  %v1786 = vpack.c.b16 %v1668, %v1666
  %v1787 = vpack.c.b16 %v1669, %v1667
  %v1788 = vpack.c.b16 %v1672, %v1670
  %v1789 = vpack.c.b16 %v1673, %v1671
  %v1790 = vpack.c.b16 %v1676, %v1674
  %v1791 = vpack.c.b16 %v1677, %v1675
  %v1792 = vpack.c.b16 %v1680, %v1678
  %v1793 = vpack.c.b16 %v1681, %v1679
  %v1794 = vpack.c.b16 %v1684, %v1682
  %v1795 = vpack.c.b16 %v1685, %v1683
  %v1796 = vpack.c.b16 %v1688, %v1686
  %v1797 = vpack.c.b16 %v1689, %v1687
  %v1798 = vpack.c.b16 %v1692, %v1690
  %v1799 = vpack.c.b16 %v1693, %v1691
  %v1800 = vpack.c.b16 %v1696, %v1694
  %v1801 = vpack.c.b16 %v1697, %v1695
  %v1802 = vpack.c.b16 %v1700, %v1698
  %v1803 = vpack.c.b16 %v1701, %v1699
  %v1804 = vpack.c.b16 %v1704, %v1702
  %v1805 = vpack.c.b16 %v1705, %v1703
  %v1806 = vpack.c.b16 %v1708, %v1706
  %v1807 = vpack.c.b16 %v1709, %v1707
  %v1808 = vpack.c.b16 %v1712, %v1710
  %v1809 = vpack.c.b16 %v1713, %v1711
  %v1810 = vpack.c.b16 %v1716, %v1714
  %v1811 = vpack.c.b16 %v1717, %v1715
  %v1812 = vpack.c.b16 %v1720, %v1718
  %v1813 = vpack.c.b16 %v1721, %v1719
  %v1814 = vpack.c.b16 %v1724, %v1722
  %v1815 = vpack.c.b16 %v1725, %v1723
  %v1816 = vpack.c.b16 %v1728, %v1726
  %v1817 = vpack.c.b16 %v1729, %v1727
  %v1818 = vpack.c.b16 %v1732, %v1730
  %v1819 = vpack.c.b16 %v1733, %v1731
  %v1820 = vpack.c.b16 %v1736, %v1734
  %v1821 = vpack.c.b16 %v1737, %v1735
  %v1822 = vpack.c.b16 %v1740, %v1738
  %v1823 = vpack.c.b16 %v1741, %v1739
  %v1824 = vpack.c.b16 %v1744, %v1742
  %v1825 = vpack.c.b16 %v1745, %v1743
  %v1826 = vpack.c.b16 %v1748, %v1746
  %v1827 = vpack.c.b16 %v1749, %v1747
  %v1828 = vpack.c.b16 %v1752, %v1750
  %v1829 = vpack.c.b16 %v1753, %v1751
  %v1830 = vpack.c.b16 %v1756, %v1754
  %v1831 = vpack.c.b16 %v1757, %v1755
  %v1832 = vpack.c.b16 %v1760, %v1758
  %v1833 = vpack.c.b16 %v1761, %v1759
  %v1834 = vpack.c.b16 %v1764, %v1762
  %v1835 = vpack.c.b16 %v1765, %v1763
  %v1836 = vpack.c.b16 %v1768, %v1766
  %v1837 = vpack.c.b16 %v1769, %v1767
  %v1838 = vpack.c.b16 %v1772, %v1770
  %v1839 = vpack.c.b16 %v1773, %v1771
  %v1840 = vpack.c.b16 %v1776, %v1774
  %v1841 = vpack.c.b16 %v1777, %v1775
  %1906 = vmatprep.subr.bf16.mxu0 %v1779
  %1907 = vmatpush1.bf16.msra.mxu0 %v1778
  %1908 = vmatprep.subr.bf16.mxu0 %v1781
  %1909 = vmatpush1.bf16.msra.mxu0 %v1780
  %1910 = vmatprep.subr.bf16.mxu0 %v1783
  %1911 = vmatpush1.bf16.msra.mxu0 %v1782
  %1912 = vmatprep.subr.bf16.mxu0 %v1785
  %1913 = vmatpush1.bf16.msra.mxu0 %v1784
  %1914 = vmatprep.subr.bf16.mxu0 %v1787
  %1915 = vmatpush1.bf16.msra.mxu0 %v1786
  %1916 = vmatprep.subr.bf16.mxu0 %v1789
  %1917 = vmatpush1.bf16.msra.mxu0 %v1788
  %1918 = vmatprep.subr.bf16.mxu0 %v1791
  %1919 = vmatpush1.bf16.msra.mxu0 %v1790
  %1920 = vmatprep.subr.bf16.mxu0 %v1793
  %1921 = vmatpush1.bf16.msra.mxu0 %v1792
  %1922 = vmatprep.subr.bf16.mxu0 %v1795
  %1923 = vmatpush1.bf16.msra.mxu0 %v1794
  %1924 = vmatprep.subr.bf16.mxu0 %v1797
  %1925 = vmatpush1.bf16.msra.mxu0 %v1796
  %1926 = vmatprep.subr.bf16.mxu0 %v1799
  %1927 = vmatpush1.bf16.msra.mxu0 %v1798
  %1928 = vmatprep.subr.bf16.mxu0 %v1801
  %1929 = vmatpush1.bf16.msra.mxu0 %v1800
  %1930 = vmatprep.subr.bf16.mxu0 %v1803
  %1931 = vmatpush1.bf16.msra.mxu0 %v1802
  %1932 = vmatprep.subr.bf16.mxu0 %v1805
  %1933 = vmatpush1.bf16.msra.mxu0 %v1804
  %1934 = vmatprep.subr.bf16.mxu0 %v1807
  %1935 = vmatpush1.bf16.msra.mxu0 %v1806
  %1936 = vmatprep.subr.bf16.mxu0 %v1809
  %1937 = vmatpush1.bf16.msra.mxu0 %v1808
  %1938 = vmatprep.mubr.bf16.mxu0 %v1506
  %1939 = vmatmul.mubr.bf16.gmra.mrb[0].mxu0 %v1505
  %v1940 = vpop.f32.mrb[0].mxu0
  %v1941 = vadd.f32 %v1579, %v1940
  %v1942 = vpop.f32.mrb[0].mxu0
  %v1943 = vadd.f32 %v1583, %v1942
  %v1944 = vpop.f32.mrb[0].mxu0
  %v1945 = vpop.f32.mrb[0].mxu0
  %1946 = vdwg.mxu0
  %1947 = vmatprep.subr.bf16.mxu0 %v1811
  %1948 = vmatpush1.bf16.msra.mxu0 %v1810
  %1949 = vmatprep.subr.bf16.mxu0 %v1813
  %1950 = vmatpush1.bf16.msra.mxu0 %v1812
  %1951 = vmatprep.subr.bf16.mxu0 %v1815
  %1952 = vmatpush1.bf16.msra.mxu0 %v1814
  %1953 = vmatprep.subr.bf16.mxu0 %v1817
  %1954 = vmatpush1.bf16.msra.mxu0 %v1816
  %1955 = vmatprep.subr.bf16.mxu0 %v1819
  %1956 = vmatpush1.bf16.msra.mxu0 %v1818
  %1957 = vmatprep.subr.bf16.mxu0 %v1821
  %1958 = vmatpush1.bf16.msra.mxu0 %v1820
  %1959 = vmatprep.subr.bf16.mxu0 %v1823
  %1960 = vmatpush1.bf16.msra.mxu0 %v1822
  %1961 = vmatprep.subr.bf16.mxu0 %v1825
  %1962 = vmatpush1.bf16.msra.mxu0 %v1824
  %1963 = vmatprep.subr.bf16.mxu0 %v1827
  %1964 = vmatpush1.bf16.msra.mxu0 %v1826
  %1965 = vmatprep.subr.bf16.mxu0 %v1829
  %1966 = vmatpush1.bf16.msra.mxu0 %v1828
  %1967 = vmatprep.subr.bf16.mxu0 %v1831
  %1968 = vmatpush1.bf16.msra.mxu0 %v1830
  %1969 = vmatprep.subr.bf16.mxu0 %v1833
  %1970 = vmatpush1.bf16.msra.mxu0 %v1832
  %1971 = vmatprep.subr.bf16.mxu0 %v1835
  %1972 = vmatpush1.bf16.msra.mxu0 %v1834
  %1973 = vmatprep.subr.bf16.mxu0 %v1837
  %1974 = vmatpush1.bf16.msra.mxu0 %v1836
  %1975 = vmatprep.subr.bf16.mxu0 %v1839
  %1976 = vmatpush1.bf16.msra.mxu0 %v1838
  %1977 = vmatprep.subr.bf16.mxu0 %v1841
  %1978 = vmatpush1.bf16.msra.mxu0 %v1840
  %1979 = vmatprep.mubr.bf16.mxu0 %v1508
  %1980 = vmatmul.mubr.bf16.gmra.mrb[0].mxu0 %v1507
  %v1981 = vpop.f32.mrb[0].mxu0
  %v1982 = vadd.f32 %v1941, %v1981
  %v1983 = vpop.f32.mrb[0].mxu0
  %v1984 = vadd.f32 %v1943, %v1983
  %v1985 = vpop.f32.mrb[0].mxu0
  %v1986 = vpop.f32.mrb[0].mxu0
  %1987 = vdwg.mxu0
  %v1988 = vmax.f32 %v1982, 0.0
  %v1989 = vmax.f32 %v1984, 0.0
  %v1990 = vpack.c.bf16 %v1988, %v1988
  %v1991 = vpack.c.bf16 %v1989, %v1989
  %v1992 = vld [vmem:[%s3] sm:$0xff]
  %v1993 = vld [vmem:[%s3 + $0x8] sm:$0xff]
  %v1994 = vld [vmem:[%s3 + $0x10] sm:$0xff]
  %v1995 = vld [vmem:[%s3 + $0x18] sm:$0xff]
  %v1996 = vld [vmem:[%s3 + $0x20] sm:$0xff]
  %v1997 = vld [vmem:[%s3 + $0x28] sm:$0xff]
  %v1998 = vld [vmem:[%s3 + $0x30] sm:$0xff]
  %v1999 = vld [vmem:[%s3 + $0x38] sm:$0xff]
  %v2000 = vld [vmem:[%s3 + $0x40] sm:$0xff]
  %v2001 = vld [vmem:[%s3 + $0x48] sm:$0xff]
  %v2002 = vld [vmem:[%s3 + $0x50] sm:$0xff]
  %v2003 = vld [vmem:[%s3 + $0x58] sm:$0xff]
  %v2004 = vld [vmem:[%s3 + $0x60] sm:$0xff]
  %v2005 = vld [vmem:[%s3 + $0x68] sm:$0xff]
  %v2006 = vld [vmem:[%s3 + $0x70] sm:$0xff]
  %v2007 = vld [vmem:[%s3 + $0x78] sm:$0xff]
  %v2008 = vld [vmem:[%s3 + $0x80] sm:$0xff]
  %v2009 = vld [vmem:[%s3 + $0x88] sm:$0xff]
  %v2010 = vld [vmem:[%s3 + $0x90] sm:$0xff]
  %v2011 = vld [vmem:[%s3 + $0x98] sm:$0xff]
  %v2012 = vld [vmem:[%s3 + $0xa0] sm:$0xff]
  %v2013 = vld [vmem:[%s3 + $0xa8] sm:$0xff]
  %v2014 = vld [vmem:[%s3 + $0xb0] sm:$0xff]
  %v2015 = vld [vmem:[%s3 + $0xb8] sm:$0xff]
  %v2016 = vld [vmem:[%s3 + $0xc0] sm:$0xff]
  %v2017 = vld [vmem:[%s3 + $0xc8] sm:$0xff]
  %v2018 = vld [vmem:[%s3 + $0xd0] sm:$0xff]
  %v2019 = vld [vmem:[%s3 + $0xd8] sm:$0xff]
  %v2020 = vld [vmem:[%s3 + $0xe0] sm:$0xff]
  %v2021 = vld [vmem:[%s3 + $0xe8] sm:$0xff]
  %v2022 = vld [vmem:[%s3 + $0xf0] sm:$0xff]
  %v2023 = vld [vmem:[%s3 + $0xf8] sm:$0xff]
  %v2024 = vld [vmem:[%s3 + $0x100] sm:$0xff]
  %v2025 = vld [vmem:[%s3 + $0x108] sm:$0xff]
  %v2026 = vld [vmem:[%s3 + $0x110] sm:$0xff]
  %v2027 = vld [vmem:[%s3 + $0x118] sm:$0xff]
  %v2028 = vld [vmem:[%s3 + $0x120] sm:$0xff]
  %v2029 = vld [vmem:[%s3 + $0x128] sm:$0xff]
  %v2030 = vld [vmem:[%s3 + $0x130] sm:$0xff]
  %v2031 = vld [vmem:[%s3 + $0x138] sm:$0xff]
  %v2032 = vld [vmem:[%s3 + $0x140] sm:$0xff]
  %v2033 = vld [vmem:[%s3 + $0x148] sm:$0xff]
  %v2034 = vld [vmem:[%s3 + $0x150] sm:$0xff]
  %v2035 = vld [vmem:[%s3 + $0x158] sm:$0xff]
  %v2036 = vld [vmem:[%s3 + $0x160] sm:$0xff]
  %v2037 = vld [vmem:[%s3 + $0x168] sm:$0xff]
  %v2038 = vld [vmem:[%s3 + $0x170] sm:$0xff]
  %v2039 = vld [vmem:[%s3 + $0x178] sm:$0xff]
  %v2040 = vld [vmem:[%s3 + $0x180] sm:$0xff]
  %v2041 = vld [vmem:[%s3 + $0x188] sm:$0xff]
  %v2042 = vld [vmem:[%s3 + $0x190] sm:$0xff]
  %v2043 = vld [vmem:[%s3 + $0x198] sm:$0xff]
  %v2044 = vld [vmem:[%s3 + $0x1a0] sm:$0xff]
  %v2045 = vld [vmem:[%s3 + $0x1a8] sm:$0xff]
  %v2046 = vld [vmem:[%s3 + $0x1b0] sm:$0xff]
  %v2047 = vld [vmem:[%s3 + $0x1b8] sm:$0xff]
  %v2048 = vld [vmem:[%s3 + $0x1c0] sm:$0xff]
  %v2049 = vld [vmem:[%s3 + $0x1c8] sm:$0xff]
  %v2050 = vld [vmem:[%s3 + $0x1d0] sm:$0xff]
  %v2051 = vld [vmem:[%s3 + $0x1d8] sm:$0xff]
  %v2052 = vld [vmem:[%s3 + $0x1e0] sm:$0xff]
  %v2053 = vld [vmem:[%s3 + $0x1e8] sm:$0xff]
  %v2054 = vld [vmem:[%s3 + $0x1f0] sm:$0xff]
  %v2055 = vld [vmem:[%s3 + $0x1f8] sm:$0xff]
  %s2056 = scalar_lea.vmem %s6, 2
  %v2057 = vld [vmem:[%s2056] ss:$8 sm:$0xf]
  %v2059 = vlaneseq
  %v2060 = vshrl.u32 %v2059, 7
  %v2061 = vsub.s32 0, %v2060
  %v2062 = vrot.slane %v2057, %v2061
  %v2063 = vlaneseq
  %v2064 = vshrl.u32 %v2063, 7
  %v2065 = vsub.s32 1, %v2064
  %v2066 = vrot.slane %v2057, %v2065
  %v2067 = vlaneseq
  %v2068 = vshrl.u32 %v2067, 7
  %v2069 = vsub.s32 2, %v2068
  %v2070 = vrot.slane %v2057, %v2069
  %v2071 = vlaneseq
  %v2072 = vshrl.u32 %v2071, 7
  %v2073 = vsub.s32 3, %v2072
  %v2074 = vrot.slane %v2057, %v2073
  %v2143 = vunpack.c.l.b16 %v1992
  %v2144 = vunpack.c.h.b16 %v1992
  %v2145 = vunpack.c.l.b16 %v1993
  %v2146 = vunpack.c.h.b16 %v1993
  %v2147 = vunpack.c.l.b16 %v1994
  %v2148 = vunpack.c.h.b16 %v1994
  %v2149 = vunpack.c.l.b16 %v1995
  %v2150 = vunpack.c.h.b16 %v1995
  %v2151 = vunpack.c.l.b16 %v1996
  %v2152 = vunpack.c.h.b16 %v1996
  %v2153 = vunpack.c.l.b16 %v1997
  %v2154 = vunpack.c.h.b16 %v1997
  %v2155 = vunpack.c.l.b16 %v1998
  %v2156 = vunpack.c.h.b16 %v1998
  %v2157 = vunpack.c.l.b16 %v1999
  %v2158 = vunpack.c.h.b16 %v1999
  %v2159 = vunpack.c.l.b16 %v2000
  %v2160 = vunpack.c.h.b16 %v2000
  %v2161 = vunpack.c.l.b16 %v2001
  %v2162 = vunpack.c.h.b16 %v2001
  %v2163 = vunpack.c.l.b16 %v2002
  %v2164 = vunpack.c.h.b16 %v2002
  %v2165 = vunpack.c.l.b16 %v2003
  %v2166 = vunpack.c.h.b16 %v2003
  %v2167 = vunpack.c.l.b16 %v2004
  %v2168 = vunpack.c.h.b16 %v2004
  %v2169 = vunpack.c.l.b16 %v2005
  %v2170 = vunpack.c.h.b16 %v2005
  %v2171 = vunpack.c.l.b16 %v2006
  %v2172 = vunpack.c.h.b16 %v2006
  %v2173 = vunpack.c.l.b16 %v2007
  %v2174 = vunpack.c.h.b16 %v2007
  %v2175 = vunpack.c.l.b16 %v2008
  %v2176 = vunpack.c.h.b16 %v2008
  %v2177 = vunpack.c.l.b16 %v2009
  %v2178 = vunpack.c.h.b16 %v2009
  %v2179 = vunpack.c.l.b16 %v2010
  %v2180 = vunpack.c.h.b16 %v2010
  %v2181 = vunpack.c.l.b16 %v2011
  %v2182 = vunpack.c.h.b16 %v2011
  %v2183 = vunpack.c.l.b16 %v2012
  %v2184 = vunpack.c.h.b16 %v2012
  %v2185 = vunpack.c.l.b16 %v2013
  %v2186 = vunpack.c.h.b16 %v2013
  %v2187 = vunpack.c.l.b16 %v2014
  %v2188 = vunpack.c.h.b16 %v2014
  %v2189 = vunpack.c.l.b16 %v2015
  %v2190 = vunpack.c.h.b16 %v2015
  %v2191 = vunpack.c.l.b16 %v2016
  %v2192 = vunpack.c.h.b16 %v2016
  %v2193 = vunpack.c.l.b16 %v2017
  %v2194 = vunpack.c.h.b16 %v2017
  %v2195 = vunpack.c.l.b16 %v2018
  %v2196 = vunpack.c.h.b16 %v2018
  %v2197 = vunpack.c.l.b16 %v2019
  %v2198 = vunpack.c.h.b16 %v2019
  %v2199 = vunpack.c.l.b16 %v2020
  %v2200 = vunpack.c.h.b16 %v2020
  %v2201 = vunpack.c.l.b16 %v2021
  %v2202 = vunpack.c.h.b16 %v2021
  %v2203 = vunpack.c.l.b16 %v2022
  %v2204 = vunpack.c.h.b16 %v2022
  %v2205 = vunpack.c.l.b16 %v2023
  %v2206 = vunpack.c.h.b16 %v2023
  %v2207 = vunpack.c.l.b16 %v2024
  %v2208 = vunpack.c.h.b16 %v2024
  %v2209 = vunpack.c.l.b16 %v2025
  %v2210 = vunpack.c.h.b16 %v2025
  %v2211 = vunpack.c.l.b16 %v2026
  %v2212 = vunpack.c.h.b16 %v2026
  %v2213 = vunpack.c.l.b16 %v2027
  %v2214 = vunpack.c.h.b16 %v2027
  %v2215 = vunpack.c.l.b16 %v2028
  %v2216 = vunpack.c.h.b16 %v2028
  %v2217 = vunpack.c.l.b16 %v2029
  %v2218 = vunpack.c.h.b16 %v2029
  %v2219 = vunpack.c.l.b16 %v2030
  %v2220 = vunpack.c.h.b16 %v2030
  %v2221 = vunpack.c.l.b16 %v2031
  %v2222 = vunpack.c.h.b16 %v2031
  %v2223 = vunpack.c.l.b16 %v2032
  %v2224 = vunpack.c.h.b16 %v2032
  %v2225 = vunpack.c.l.b16 %v2033
  %v2226 = vunpack.c.h.b16 %v2033
  %v2227 = vunpack.c.l.b16 %v2034
  %v2228 = vunpack.c.h.b16 %v2034
  %v2229 = vunpack.c.l.b16 %v2035
  %v2230 = vunpack.c.h.b16 %v2035
  %v2231 = vunpack.c.l.b16 %v2036
  %v2232 = vunpack.c.h.b16 %v2036
  %v2233 = vunpack.c.l.b16 %v2037
  %v2234 = vunpack.c.h.b16 %v2037
  %v2235 = vunpack.c.l.b16 %v2038
  %v2236 = vunpack.c.h.b16 %v2038
  %v2237 = vunpack.c.l.b16 %v2039
  %v2238 = vunpack.c.h.b16 %v2039
  %v2239 = vunpack.c.l.b16 %v2040
  %v2240 = vunpack.c.h.b16 %v2040
  %v2241 = vunpack.c.l.b16 %v2041
  %v2242 = vunpack.c.h.b16 %v2041
  %v2243 = vunpack.c.l.b16 %v2042
  %v2244 = vunpack.c.h.b16 %v2042
  %v2245 = vunpack.c.l.b16 %v2043
  %v2246 = vunpack.c.h.b16 %v2043
  %v2247 = vunpack.c.l.b16 %v2044
  %v2248 = vunpack.c.h.b16 %v2044
  %v2249 = vunpack.c.l.b16 %v2045
  %v2250 = vunpack.c.h.b16 %v2045
  %v2251 = vunpack.c.l.b16 %v2046
  %v2252 = vunpack.c.h.b16 %v2046
  %v2253 = vunpack.c.l.b16 %v2047
  %v2254 = vunpack.c.h.b16 %v2047
  %v2255 = vunpack.c.l.b16 %v2048
  %v2256 = vunpack.c.h.b16 %v2048
  %v2257 = vunpack.c.l.b16 %v2049
  %v2258 = vunpack.c.h.b16 %v2049
  %v2259 = vunpack.c.l.b16 %v2050
  %v2260 = vunpack.c.h.b16 %v2050
  %v2261 = vunpack.c.l.b16 %v2051
  %v2262 = vunpack.c.h.b16 %v2051
  %v2263 = vunpack.c.l.b16 %v2052
  %v2264 = vunpack.c.h.b16 %v2052
  %v2265 = vunpack.c.l.b16 %v2053
  %v2266 = vunpack.c.h.b16 %v2053
  %v2267 = vunpack.c.l.b16 %v2054
  %v2268 = vunpack.c.h.b16 %v2054
  %v2269 = vunpack.c.l.b16 %v2055
  %v2270 = vunpack.c.h.b16 %v2055
  %v2271 = vpack.c.b16 %v2147, %v2143
  %v2272 = vpack.c.b16 %v2148, %v2144
  %v2273 = vpack.c.b16 %v2149, %v2145
  %v2274 = vpack.c.b16 %v2150, %v2146
  %v2275 = vpack.c.b16 %v2155, %v2151
  %v2276 = vpack.c.b16 %v2156, %v2152
  %v2277 = vpack.c.b16 %v2157, %v2153
  %v2278 = vpack.c.b16 %v2158, %v2154
  %v2279 = vpack.c.b16 %v2163, %v2159
  %v2280 = vpack.c.b16 %v2164, %v2160
  %v2281 = vpack.c.b16 %v2165, %v2161
  %v2282 = vpack.c.b16 %v2166, %v2162
  %v2283 = vpack.c.b16 %v2171, %v2167
  %v2284 = vpack.c.b16 %v2172, %v2168
  %v2285 = vpack.c.b16 %v2173, %v2169
  %v2286 = vpack.c.b16 %v2174, %v2170
  %v2287 = vpack.c.b16 %v2179, %v2175
  %v2288 = vpack.c.b16 %v2180, %v2176
  %v2289 = vpack.c.b16 %v2181, %v2177
  %v2290 = vpack.c.b16 %v2182, %v2178
  %v2291 = vpack.c.b16 %v2187, %v2183
  %v2292 = vpack.c.b16 %v2188, %v2184
  %v2293 = vpack.c.b16 %v2189, %v2185
  %v2294 = vpack.c.b16 %v2190, %v2186
  %v2295 = vpack.c.b16 %v2195, %v2191
  %v2296 = vpack.c.b16 %v2196, %v2192
  %v2297 = vpack.c.b16 %v2197, %v2193
  %v2298 = vpack.c.b16 %v2198, %v2194
  %v2299 = vpack.c.b16 %v2203, %v2199
  %v2300 = vpack.c.b16 %v2204, %v2200
  %v2301 = vpack.c.b16 %v2205, %v2201
  %v2302 = vpack.c.b16 %v2206, %v2202
  %v2303 = vpack.c.b16 %v2211, %v2207
  %v2304 = vpack.c.b16 %v2212, %v2208
  %v2305 = vpack.c.b16 %v2213, %v2209
  %v2306 = vpack.c.b16 %v2214, %v2210
  %v2307 = vpack.c.b16 %v2219, %v2215
  %v2308 = vpack.c.b16 %v2220, %v2216
  %v2309 = vpack.c.b16 %v2221, %v2217
  %v2310 = vpack.c.b16 %v2222, %v2218
  %v2311 = vpack.c.b16 %v2227, %v2223
  %v2312 = vpack.c.b16 %v2228, %v2224
  %v2313 = vpack.c.b16 %v2229, %v2225
  %v2314 = vpack.c.b16 %v2230, %v2226
  %v2315 = vpack.c.b16 %v2235, %v2231
  %v2316 = vpack.c.b16 %v2236, %v2232
  %v2317 = vpack.c.b16 %v2237, %v2233
  %v2318 = vpack.c.b16 %v2238, %v2234
  %v2319 = vpack.c.b16 %v2243, %v2239
  %v2320 = vpack.c.b16 %v2244, %v2240
  %v2321 = vpack.c.b16 %v2245, %v2241
  %v2322 = vpack.c.b16 %v2246, %v2242
  %v2323 = vpack.c.b16 %v2251, %v2247
  %v2324 = vpack.c.b16 %v2252, %v2248
  %v2325 = vpack.c.b16 %v2253, %v2249
  %v2326 = vpack.c.b16 %v2254, %v2250
  %v2327 = vpack.c.b16 %v2259, %v2255
  %v2328 = vpack.c.b16 %v2260, %v2256
  %v2329 = vpack.c.b16 %v2261, %v2257
  %v2330 = vpack.c.b16 %v2262, %v2258
  %v2331 = vpack.c.b16 %v2267, %v2263
  %v2332 = vpack.c.b16 %v2268, %v2264
  %v2333 = vpack.c.b16 %v2269, %v2265
  %v2334 = vpack.c.b16 %v2270, %v2266
  %2399 = vmatprep.subr.bf16.mxu0 %v2272
  %2400 = vmatpush1.bf16.msra.mxu0 %v2271
  %2401 = vmatprep.subr.bf16.mxu0 %v2276
  %2402 = vmatpush1.bf16.msra.mxu0 %v2275
  %2403 = vmatprep.subr.bf16.mxu0 %v2280
  %2404 = vmatpush1.bf16.msra.mxu0 %v2279
  %2405 = vmatprep.subr.bf16.mxu0 %v2284
  %2406 = vmatpush1.bf16.msra.mxu0 %v2283
  %2407 = vmatprep.subr.bf16.mxu0 %v2288
  %2408 = vmatpush1.bf16.msra.mxu0 %v2287
  %2409 = vmatprep.subr.bf16.mxu0 %v2292
  %2410 = vmatpush1.bf16.msra.mxu0 %v2291
  %2411 = vmatprep.subr.bf16.mxu0 %v2296
  %2412 = vmatpush1.bf16.msra.mxu0 %v2295
  %2413 = vmatprep.subr.bf16.mxu0 %v2300
  %2414 = vmatpush1.bf16.msra.mxu0 %v2299
  %2415 = vmatprep.subr.bf16.mxu0 %v2304
  %2416 = vmatpush1.bf16.msra.mxu0 %v2303
  %2417 = vmatprep.subr.bf16.mxu0 %v2308
  %2418 = vmatpush1.bf16.msra.mxu0 %v2307
  %2419 = vmatprep.subr.bf16.mxu0 %v2312
  %2420 = vmatpush1.bf16.msra.mxu0 %v2311
  %2421 = vmatprep.subr.bf16.mxu0 %v2316
  %2422 = vmatpush1.bf16.msra.mxu0 %v2315
  %2423 = vmatprep.subr.bf16.mxu0 %v2320
  %2424 = vmatpush1.bf16.msra.mxu0 %v2319
  %2425 = vmatprep.subr.bf16.mxu0 %v2324
  %2426 = vmatpush1.bf16.msra.mxu0 %v2323
  %2427 = vmatprep.subr.bf16.mxu0 %v2328
  %2428 = vmatpush1.bf16.msra.mxu0 %v2327
  %2429 = vmatprep.subr.bf16.mxu0 %v2332
  %2430 = vmatpush1.bf16.msra.mxu0 %v2331
  %2431 = vmatprep.mubr.bf16.mxu0 %v1991
  %2432 = vmatmul.mubr.bf16.gmra.mrb[0].mxu0 %v1990
  %v2433 = vpop.f32.mrb[0].mxu0
  %v2434 = vadd.f32 %v2062, %v2433
  %v2435 = vpop.f32.mrb[0].mxu0
  %v2436 = vadd.f32 %v2066, %v2435
  %v2437 = vpop.f32.mrb[0].mxu0
  %v2438 = vpop.f32.mrb[0].mxu0
  %2439 = vdwg.mxu0
  %2440 = vmatprep.subr.bf16.mxu0 %v2274
  %2441 = vmatpush1.bf16.msra.mxu0 %v2273
  %2442 = vmatprep.subr.bf16.mxu0 %v2278
  %2443 = vmatpush1.bf16.msra.mxu0 %v2277
  %2444 = vmatprep.subr.bf16.mxu0 %v2282
  %2445 = vmatpush1.bf16.msra.mxu0 %v2281
  %2446 = vmatprep.subr.bf16.mxu0 %v2286
  %2447 = vmatpush1.bf16.msra.mxu0 %v2285
  %2448 = vmatprep.subr.bf16.mxu0 %v2290
  %2449 = vmatpush1.bf16.msra.mxu0 %v2289
  %2450 = vmatprep.subr.bf16.mxu0 %v2294
  %2451 = vmatpush1.bf16.msra.mxu0 %v2293
  %2452 = vmatprep.subr.bf16.mxu0 %v2298
  %2453 = vmatpush1.bf16.msra.mxu0 %v2297
  %2454 = vmatprep.subr.bf16.mxu0 %v2302
  %2455 = vmatpush1.bf16.msra.mxu0 %v2301
  %2456 = vmatprep.subr.bf16.mxu0 %v2306
  %2457 = vmatpush1.bf16.msra.mxu0 %v2305
  %2458 = vmatprep.subr.bf16.mxu0 %v2310
  %2459 = vmatpush1.bf16.msra.mxu0 %v2309
  %2460 = vmatprep.subr.bf16.mxu0 %v2314
  %2461 = vmatpush1.bf16.msra.mxu0 %v2313
  %2462 = vmatprep.subr.bf16.mxu0 %v2318
  %2463 = vmatpush1.bf16.msra.mxu0 %v2317
  %2464 = vmatprep.subr.bf16.mxu0 %v2322
  %2465 = vmatpush1.bf16.msra.mxu0 %v2321
  %2466 = vmatprep.subr.bf16.mxu0 %v2326
  %2467 = vmatpush1.bf16.msra.mxu0 %v2325
  %2468 = vmatprep.subr.bf16.mxu0 %v2330
  %2469 = vmatpush1.bf16.msra.mxu0 %v2329
  %2470 = vmatprep.subr.bf16.mxu0 %v2334
  %2471 = vmatpush1.bf16.msra.mxu0 %v2333
  %2472 = vmatprep.mubr.bf16.mxu0 %v1991
  %2473 = vmatmul.mubr.bf16.gmra.mrb[0].mxu0 %v1990
  %v2474 = vpop.f32.mrb[0].mxu0
  %v2475 = vadd.f32 %v2070, %v2474
  %v2476 = vpop.f32.mrb[0].mxu0
  %v2477 = vadd.f32 %v2074, %v2476
  %v2478 = vpop.f32.mrb[0].mxu0
  %v2479 = vpop.f32.mrb[0].mxu0
  %2480 = vdwg.mxu0
  %v2481 = vmax.f32 %v2434, 0.0
  %v2482 = vmax.f32 %v2436, 0.0
  %v2483 = vmax.f32 %v2475, 0.0
  %v2484 = vmax.f32 %v2477, 0.0
  %v2485 = vpack.c.bf16 %v2481, %v2481
  %v2486 = vpack.c.bf16 %v2482, %v2482
  %v2487 = vpack.c.bf16 %v2483, %v2483
  %v2488 = vpack.c.bf16 %v2484, %v2484
  %v2489 = vld [vmem:[%s4] sm:$0xff]
  %v2490 = vld [vmem:[%s4 + $0x8] sm:$0xff]
  %v2491 = vld [vmem:[%s4 + $0x10] sm:$0xff]
  %v2492 = vld [vmem:[%s4 + $0x18] sm:$0xff]
  %v2493 = vld [vmem:[%s4 + $0x20] sm:$0xff]
  %v2494 = vld [vmem:[%s4 + $0x28] sm:$0xff]
  %v2495 = vld [vmem:[%s4 + $0x30] sm:$0xff]
  %v2496 = vld [vmem:[%s4 + $0x38] sm:$0xff]
  %v2497 = vld [vmem:[%s4 + $0x40] sm:$0xff]
  %v2498 = vld [vmem:[%s4 + $0x48] sm:$0xff]
  %v2499 = vld [vmem:[%s4 + $0x50] sm:$0xff]
  %v2500 = vld [vmem:[%s4 + $0x58] sm:$0xff]
  %v2501 = vld [vmem:[%s4 + $0x60] sm:$0xff]
  %v2502 = vld [vmem:[%s4 + $0x68] sm:$0xff]
  %v2503 = vld [vmem:[%s4 + $0x70] sm:$0xff]
  %v2504 = vld [vmem:[%s4 + $0x78] sm:$0xff]
  %v2505 = vld [vmem:[%s4 + $0x80] sm:$0xff]
  %v2506 = vld [vmem:[%s4 + $0x88] sm:$0xff]
  %v2507 = vld [vmem:[%s4 + $0x90] sm:$0xff]
  %v2508 = vld [vmem:[%s4 + $0x98] sm:$0xff]
  %v2509 = vld [vmem:[%s4 + $0xa0] sm:$0xff]
  %v2510 = vld [vmem:[%s4 + $0xa8] sm:$0xff]
  %v2511 = vld [vmem:[%s4 + $0xb0] sm:$0xff]
  %v2512 = vld [vmem:[%s4 + $0xb8] sm:$0xff]
  %v2513 = vld [vmem:[%s4 + $0xc0] sm:$0xff]
  %v2514 = vld [vmem:[%s4 + $0xc8] sm:$0xff]
  %v2515 = vld [vmem:[%s4 + $0xd0] sm:$0xff]
  %v2516 = vld [vmem:[%s4 + $0xd8] sm:$0xff]
  %v2517 = vld [vmem:[%s4 + $0xe0] sm:$0xff]
  %v2518 = vld [vmem:[%s4 + $0xe8] sm:$0xff]
  %v2519 = vld [vmem:[%s4 + $0xf0] sm:$0xff]
  %v2520 = vld [vmem:[%s4 + $0xf8] sm:$0xff]
  %v2521 = vld [vmem:[%s4 + $0x100] sm:$0xff]
  %v2522 = vld [vmem:[%s4 + $0x108] sm:$0xff]
  %v2523 = vld [vmem:[%s4 + $0x110] sm:$0xff]
  %v2524 = vld [vmem:[%s4 + $0x118] sm:$0xff]
  %v2525 = vld [vmem:[%s4 + $0x120] sm:$0xff]
  %v2526 = vld [vmem:[%s4 + $0x128] sm:$0xff]
  %v2527 = vld [vmem:[%s4 + $0x130] sm:$0xff]
  %v2528 = vld [vmem:[%s4 + $0x138] sm:$0xff]
  %v2529 = vld [vmem:[%s4 + $0x140] sm:$0xff]
  %v2530 = vld [vmem:[%s4 + $0x148] sm:$0xff]
  %v2531 = vld [vmem:[%s4 + $0x150] sm:$0xff]
  %v2532 = vld [vmem:[%s4 + $0x158] sm:$0xff]
  %v2533 = vld [vmem:[%s4 + $0x160] sm:$0xff]
  %v2534 = vld [vmem:[%s4 + $0x168] sm:$0xff]
  %v2535 = vld [vmem:[%s4 + $0x170] sm:$0xff]
  %v2536 = vld [vmem:[%s4 + $0x178] sm:$0xff]
  %v2537 = vld [vmem:[%s4 + $0x180] sm:$0xff]
  %v2538 = vld [vmem:[%s4 + $0x188] sm:$0xff]
  %v2539 = vld [vmem:[%s4 + $0x190] sm:$0xff]
  %v2540 = vld [vmem:[%s4 + $0x198] sm:$0xff]
  %v2541 = vld [vmem:[%s4 + $0x1a0] sm:$0xff]
  %v2542 = vld [vmem:[%s4 + $0x1a8] sm:$0xff]
  %v2543 = vld [vmem:[%s4 + $0x1b0] sm:$0xff]
  %v2544 = vld [vmem:[%s4 + $0x1b8] sm:$0xff]
  %v2545 = vld [vmem:[%s4 + $0x1c0] sm:$0xff]
  %v2546 = vld [vmem:[%s4 + $0x1c8] sm:$0xff]
  %v2547 = vld [vmem:[%s4 + $0x1d0] sm:$0xff]
  %v2548 = vld [vmem:[%s4 + $0x1d8] sm:$0xff]
  %v2549 = vld [vmem:[%s4 + $0x1e0] sm:$0xff]
  %v2550 = vld [vmem:[%s4 + $0x1e8] sm:$0xff]
  %v2551 = vld [vmem:[%s4 + $0x1f0] sm:$0xff]
  %v2552 = vld [vmem:[%s4 + $0x1f8] sm:$0xff]
  %v2553 = vld [vmem:[%s4 + $0x200] sm:$0xff]
  %v2554 = vld [vmem:[%s4 + $0x208] sm:$0xff]
  %v2555 = vld [vmem:[%s4 + $0x210] sm:$0xff]
  %v2556 = vld [vmem:[%s4 + $0x218] sm:$0xff]
  %v2557 = vld [vmem:[%s4 + $0x220] sm:$0xff]
  %v2558 = vld [vmem:[%s4 + $0x228] sm:$0xff]
  %v2559 = vld [vmem:[%s4 + $0x230] sm:$0xff]
  %v2560 = vld [vmem:[%s4 + $0x238] sm:$0xff]
  %v2561 = vld [vmem:[%s4 + $0x240] sm:$0xff]
  %v2562 = vld [vmem:[%s4 + $0x248] sm:$0xff]
  %v2563 = vld [vmem:[%s4 + $0x250] sm:$0xff]
  %v2564 = vld [vmem:[%s4 + $0x258] sm:$0xff]
  %v2565 = vld [vmem:[%s4 + $0x260] sm:$0xff]
  %v2566 = vld [vmem:[%s4 + $0x268] sm:$0xff]
  %v2567 = vld [vmem:[%s4 + $0x270] sm:$0xff]
  %v2568 = vld [vmem:[%s4 + $0x278] sm:$0xff]
  %v2569 = vld [vmem:[%s4 + $0x280] sm:$0xff]
  %v2570 = vld [vmem:[%s4 + $0x288] sm:$0xff]
  %v2571 = vld [vmem:[%s4 + $0x290] sm:$0xff]
  %v2572 = vld [vmem:[%s4 + $0x298] sm:$0xff]
  %v2573 = vld [vmem:[%s4 + $0x2a0] sm:$0xff]
  %v2574 = vld [vmem:[%s4 + $0x2a8] sm:$0xff]
  %v2575 = vld [vmem:[%s4 + $0x2b0] sm:$0xff]
  %v2576 = vld [vmem:[%s4 + $0x2b8] sm:$0xff]
  %v2577 = vld [vmem:[%s4 + $0x2c0] sm:$0xff]
  %v2578 = vld [vmem:[%s4 + $0x2c8] sm:$0xff]
  %v2579 = vld [vmem:[%s4 + $0x2d0] sm:$0xff]
  %v2580 = vld [vmem:[%s4 + $0x2d8] sm:$0xff]
  %v2581 = vld [vmem:[%s4 + $0x2e0] sm:$0xff]
  %v2582 = vld [vmem:[%s4 + $0x2e8] sm:$0xff]
  %v2583 = vld [vmem:[%s4 + $0x2f0] sm:$0xff]
  %v2584 = vld [vmem:[%s4 + $0x2f8] sm:$0xff]
  %v2585 = vld [vmem:[%s4 + $0x300] sm:$0xff]
  %v2586 = vld [vmem:[%s4 + $0x308] sm:$0xff]
  %v2587 = vld [vmem:[%s4 + $0x310] sm:$0xff]
  %v2588 = vld [vmem:[%s4 + $0x318] sm:$0xff]
  %v2589 = vld [vmem:[%s4 + $0x320] sm:$0xff]
  %v2590 = vld [vmem:[%s4 + $0x328] sm:$0xff]
  %v2591 = vld [vmem:[%s4 + $0x330] sm:$0xff]
  %v2592 = vld [vmem:[%s4 + $0x338] sm:$0xff]
  %v2593 = vld [vmem:[%s4 + $0x340] sm:$0xff]
  %v2594 = vld [vmem:[%s4 + $0x348] sm:$0xff]
  %v2595 = vld [vmem:[%s4 + $0x350] sm:$0xff]
  %v2596 = vld [vmem:[%s4 + $0x358] sm:$0xff]
  %v2597 = vld [vmem:[%s4 + $0x360] sm:$0xff]
  %v2598 = vld [vmem:[%s4 + $0x368] sm:$0xff]
  %v2599 = vld [vmem:[%s4 + $0x370] sm:$0xff]
  %v2600 = vld [vmem:[%s4 + $0x378] sm:$0xff]
  %v2601 = vld [vmem:[%s4 + $0x380] sm:$0xff]
  %v2602 = vld [vmem:[%s4 + $0x388] sm:$0xff]
  %v2603 = vld [vmem:[%s4 + $0x390] sm:$0xff]
  %v2604 = vld [vmem:[%s4 + $0x398] sm:$0xff]
  %v2605 = vld [vmem:[%s4 + $0x3a0] sm:$0xff]
  %v2606 = vld [vmem:[%s4 + $0x3a8] sm:$0xff]
  %v2607 = vld [vmem:[%s4 + $0x3b0] sm:$0xff]
  %v2608 = vld [vmem:[%s4 + $0x3b8] sm:$0xff]
  %v2609 = vld [vmem:[%s4 + $0x3c0] sm:$0xff]
  %v2610 = vld [vmem:[%s4 + $0x3c8] sm:$0xff]
  %v2611 = vld [vmem:[%s4 + $0x3d0] sm:$0xff]
  %v2612 = vld [vmem:[%s4 + $0x3d8] sm:$0xff]
  %v2613 = vld [vmem:[%s4 + $0x3e0] sm:$0xff]
  %v2614 = vld [vmem:[%s4 + $0x3e8] sm:$0xff]
  %v2615 = vld [vmem:[%s4 + $0x3f0] sm:$0xff]
  %v2616 = vld [vmem:[%s4 + $0x3f8] sm:$0xff]
  %v2617 = vld [vmem:[%s4 + $0x400] sm:$0xff]
  %v2618 = vld [vmem:[%s4 + $0x408] sm:$0xff]
  %v2619 = vld [vmem:[%s4 + $0x410] sm:$0xff]
  %v2620 = vld [vmem:[%s4 + $0x418] sm:$0xff]
  %v2621 = vld [vmem:[%s4 + $0x420] sm:$0xff]
  %v2622 = vld [vmem:[%s4 + $0x428] sm:$0xff]
  %v2623 = vld [vmem:[%s4 + $0x430] sm:$0xff]
  %v2624 = vld [vmem:[%s4 + $0x438] sm:$0xff]
  %v2625 = vld [vmem:[%s4 + $0x440] sm:$0xff]
  %v2626 = vld [vmem:[%s4 + $0x448] sm:$0xff]
  %v2627 = vld [vmem:[%s4 + $0x450] sm:$0xff]
  %v2628 = vld [vmem:[%s4 + $0x458] sm:$0xff]
  %v2629 = vld [vmem:[%s4 + $0x460] sm:$0xff]
  %v2630 = vld [vmem:[%s4 + $0x468] sm:$0xff]
  %v2631 = vld [vmem:[%s4 + $0x470] sm:$0xff]
  %v2632 = vld [vmem:[%s4 + $0x478] sm:$0xff]
  %v2633 = vld [vmem:[%s4 + $0x480] sm:$0xff]
  %v2634 = vld [vmem:[%s4 + $0x488] sm:$0xff]
  %v2635 = vld [vmem:[%s4 + $0x490] sm:$0xff]
  %v2636 = vld [vmem:[%s4 + $0x498] sm:$0xff]
  %v2637 = vld [vmem:[%s4 + $0x4a0] sm:$0xff]
  %v2638 = vld [vmem:[%s4 + $0x4a8] sm:$0xff]
  %v2639 = vld [vmem:[%s4 + $0x4b0] sm:$0xff]
  %v2640 = vld [vmem:[%s4 + $0x4b8] sm:$0xff]
  %v2641 = vld [vmem:[%s4 + $0x4c0] sm:$0xff]
  %v2642 = vld [vmem:[%s4 + $0x4c8] sm:$0xff]
  %v2643 = vld [vmem:[%s4 + $0x4d0] sm:$0xff]
  %v2644 = vld [vmem:[%s4 + $0x4d8] sm:$0xff]
  %v2645 = vld [vmem:[%s4 + $0x4e0] sm:$0xff]
  %v2646 = vld [vmem:[%s4 + $0x4e8] sm:$0xff]
  %v2647 = vld [vmem:[%s4 + $0x4f0] sm:$0xff]
  %v2648 = vld [vmem:[%s4 + $0x4f8] sm:$0xff]
  %v2649 = vld [vmem:[%s4 + $0x500] sm:$0xff]
  %v2650 = vld [vmem:[%s4 + $0x508] sm:$0xff]
  %v2651 = vld [vmem:[%s4 + $0x510] sm:$0xff]
  %v2652 = vld [vmem:[%s4 + $0x518] sm:$0xff]
  %v2653 = vld [vmem:[%s4 + $0x520] sm:$0xff]
  %v2654 = vld [vmem:[%s4 + $0x528] sm:$0xff]
  %v2655 = vld [vmem:[%s4 + $0x530] sm:$0xff]
  %v2656 = vld [vmem:[%s4 + $0x538] sm:$0xff]
  %v2657 = vld [vmem:[%s4 + $0x540] sm:$0xff]
  %v2658 = vld [vmem:[%s4 + $0x548] sm:$0xff]
  %v2659 = vld [vmem:[%s4 + $0x550] sm:$0xff]
  %v2660 = vld [vmem:[%s4 + $0x558] sm:$0xff]
  %v2661 = vld [vmem:[%s4 + $0x560] sm:$0xff]
  %v2662 = vld [vmem:[%s4 + $0x568] sm:$0xff]
  %v2663 = vld [vmem:[%s4 + $0x570] sm:$0xff]
  %v2664 = vld [vmem:[%s4 + $0x578] sm:$0xff]
  %v2665 = vld [vmem:[%s4 + $0x580] sm:$0xff]
  %v2666 = vld [vmem:[%s4 + $0x588] sm:$0xff]
  %v2667 = vld [vmem:[%s4 + $0x590] sm:$0xff]
  %v2668 = vld [vmem:[%s4 + $0x598] sm:$0xff]
  %v2669 = vld [vmem:[%s4 + $0x5a0] sm:$0xff]
  %v2670 = vld [vmem:[%s4 + $0x5a8] sm:$0xff]
  %v2671 = vld [vmem:[%s4 + $0x5b0] sm:$0xff]
  %v2672 = vld [vmem:[%s4 + $0x5b8] sm:$0xff]
  %v2673 = vld [vmem:[%s4 + $0x5c0] sm:$0xff]
  %v2674 = vld [vmem:[%s4 + $0x5c8] sm:$0xff]
  %v2675 = vld [vmem:[%s4 + $0x5d0] sm:$0xff]
  %v2676 = vld [vmem:[%s4 + $0x5d8] sm:$0xff]
  %v2677 = vld [vmem:[%s4 + $0x5e0] sm:$0xff]
  %v2678 = vld [vmem:[%s4 + $0x5e8] sm:$0xff]
  %v2679 = vld [vmem:[%s4 + $0x5f0] sm:$0xff]
  %v2680 = vld [vmem:[%s4 + $0x5f8] sm:$0xff]
  %s2681 = scalar_lea.vmem %s6, 3
  %v2682 = vld [vmem:[%s2681] ss:$8 sm:$0xf]
  %v2683 = vld [vmem:[%s2681] ss:$8 sm:$0x30]
  %v2684 = vor.u32 %v2682, %v2683
  %v2686 = vlaneseq
  %v2687 = vshrl.u32 %v2686, 7
  %v2688 = vsub.s32 0, %v2687
  %v2689 = vrot.slane %v2684, %v2688
  %v2690 = vlaneseq
  %v2691 = vshrl.u32 %v2690, 7
  %v2692 = vsub.s32 1, %v2691
  %v2693 = vrot.slane %v2684, %v2692
  %v2694 = vlaneseq
  %v2695 = vshrl.u32 %v2694, 7
  %v2696 = vsub.s32 2, %v2695
  %v2697 = vrot.slane %v2684, %v2696
  %v2698 = vlaneseq
  %v2699 = vshrl.u32 %v2698, 7
  %v2700 = vsub.s32 3, %v2699
  %v2701 = vrot.slane %v2684, %v2700
  %v2702 = vlaneseq
  %v2703 = vshrl.u32 %v2702, 7
  %v2704 = vsub.s32 4, %v2703
  %v2705 = vrot.slane %v2684, %v2704
  %v2706 = vlaneseq
  %v2707 = vshrl.u32 %v2706, 7
  %v2708 = vsub.s32 5, %v2707
  %v2709 = vrot.slane %v2684, %v2708
  %v2908 = vunpack.c.l.b16 %v2489
  %v2909 = vunpack.c.h.b16 %v2489
  %v2910 = vunpack.c.l.b16 %v2490
  %v2911 = vunpack.c.h.b16 %v2490
  %v2912 = vunpack.c.l.b16 %v2491
  %v2913 = vunpack.c.h.b16 %v2491
  %v2914 = vunpack.c.l.b16 %v2492
  %v2915 = vunpack.c.h.b16 %v2492
  %v2916 = vunpack.c.l.b16 %v2493
  %v2917 = vunpack.c.h.b16 %v2493
  %v2918 = vunpack.c.l.b16 %v2494
  %v2919 = vunpack.c.h.b16 %v2494
  %v2920 = vunpack.c.l.b16 %v2495
  %v2921 = vunpack.c.h.b16 %v2495
  %v2922 = vunpack.c.l.b16 %v2496
  %v2923 = vunpack.c.h.b16 %v2496
  %v2924 = vunpack.c.l.b16 %v2497
  %v2925 = vunpack.c.h.b16 %v2497
  %v2926 = vunpack.c.l.b16 %v2498
  %v2927 = vunpack.c.h.b16 %v2498
  %v2928 = vunpack.c.l.b16 %v2499
  %v2929 = vunpack.c.h.b16 %v2499
  %v2930 = vunpack.c.l.b16 %v2500
  %v2931 = vunpack.c.h.b16 %v2500
  %v2932 = vunpack.c.l.b16 %v2501
  %v2933 = vunpack.c.h.b16 %v2501
  %v2934 = vunpack.c.l.b16 %v2502
  %v2935 = vunpack.c.h.b16 %v2502
  %v2936 = vunpack.c.l.b16 %v2503
  %v2937 = vunpack.c.h.b16 %v2503
  %v2938 = vunpack.c.l.b16 %v2504
  %v2939 = vunpack.c.h.b16 %v2504
  %v2940 = vunpack.c.l.b16 %v2505
  %v2941 = vunpack.c.h.b16 %v2505
  %v2942 = vunpack.c.l.b16 %v2506
  %v2943 = vunpack.c.h.b16 %v2506
  %v2944 = vunpack.c.l.b16 %v2507
  %v2945 = vunpack.c.h.b16 %v2507
  %v2946 = vunpack.c.l.b16 %v2508
  %v2947 = vunpack.c.h.b16 %v2508
  %v2948 = vunpack.c.l.b16 %v2509
  %v2949 = vunpack.c.h.b16 %v2509
  %v2950 = vunpack.c.l.b16 %v2510
  %v2951 = vunpack.c.h.b16 %v2510
  %v2952 = vunpack.c.l.b16 %v2511
  %v2953 = vunpack.c.h.b16 %v2511
  %v2954 = vunpack.c.l.b16 %v2512
  %v2955 = vunpack.c.h.b16 %v2512
  %v2956 = vunpack.c.l.b16 %v2513
  %v2957 = vunpack.c.h.b16 %v2513
  %v2958 = vunpack.c.l.b16 %v2514
  %v2959 = vunpack.c.h.b16 %v2514
  %v2960 = vunpack.c.l.b16 %v2515
  %v2961 = vunpack.c.h.b16 %v2515
  %v2962 = vunpack.c.l.b16 %v2516
  %v2963 = vunpack.c.h.b16 %v2516
  %v2964 = vunpack.c.l.b16 %v2517
  %v2965 = vunpack.c.h.b16 %v2517
  %v2966 = vunpack.c.l.b16 %v2518
  %v2967 = vunpack.c.h.b16 %v2518
  %v2968 = vunpack.c.l.b16 %v2519
  %v2969 = vunpack.c.h.b16 %v2519
  %v2970 = vunpack.c.l.b16 %v2520
  %v2971 = vunpack.c.h.b16 %v2520
  %v2972 = vunpack.c.l.b16 %v2521
  %v2973 = vunpack.c.h.b16 %v2521
  %v2974 = vunpack.c.l.b16 %v2522
  %v2975 = vunpack.c.h.b16 %v2522
  %v2976 = vunpack.c.l.b16 %v2523
  %v2977 = vunpack.c.h.b16 %v2523
  %v2978 = vunpack.c.l.b16 %v2524
  %v2979 = vunpack.c.h.b16 %v2524
  %v2980 = vunpack.c.l.b16 %v2525
  %v2981 = vunpack.c.h.b16 %v2525
  %v2982 = vunpack.c.l.b16 %v2526
  %v2983 = vunpack.c.h.b16 %v2526
  %v2984 = vunpack.c.l.b16 %v2527
  %v2985 = vunpack.c.h.b16 %v2527
  %v2986 = vunpack.c.l.b16 %v2528
  %v2987 = vunpack.c.h.b16 %v2528
  %v2988 = vunpack.c.l.b16 %v2529
  %v2989 = vunpack.c.h.b16 %v2529
  %v2990 = vunpack.c.l.b16 %v2530
  %v2991 = vunpack.c.h.b16 %v2530
  %v2992 = vunpack.c.l.b16 %v2531
  %v2993 = vunpack.c.h.b16 %v2531
  %v2994 = vunpack.c.l.b16 %v2532
  %v2995 = vunpack.c.h.b16 %v2532
  %v2996 = vunpack.c.l.b16 %v2533
  %v2997 = vunpack.c.h.b16 %v2533
  %v2998 = vunpack.c.l.b16 %v2534
  %v2999 = vunpack.c.h.b16 %v2534
  %v3000 = vunpack.c.l.b16 %v2535
  %v3001 = vunpack.c.h.b16 %v2535
  %v3002 = vunpack.c.l.b16 %v2536
  %v3003 = vunpack.c.h.b16 %v2536
  %v3004 = vunpack.c.l.b16 %v2537
  %v3005 = vunpack.c.h.b16 %v2537
  %v3006 = vunpack.c.l.b16 %v2538
  %v3007 = vunpack.c.h.b16 %v2538
  %v3008 = vunpack.c.l.b16 %v2539
  %v3009 = vunpack.c.h.b16 %v2539
  %v3010 = vunpack.c.l.b16 %v2540
  %v3011 = vunpack.c.h.b16 %v2540
  %v3012 = vunpack.c.l.b16 %v2541
  %v3013 = vunpack.c.h.b16 %v2541
  %v3014 = vunpack.c.l.b16 %v2542
  %v3015 = vunpack.c.h.b16 %v2542
  %v3016 = vunpack.c.l.b16 %v2543
  %v3017 = vunpack.c.h.b16 %v2543
  %v3018 = vunpack.c.l.b16 %v2544
  %v3019 = vunpack.c.h.b16 %v2544
  %v3020 = vunpack.c.l.b16 %v2545
  %v3021 = vunpack.c.h.b16 %v2545
  %v3022 = vunpack.c.l.b16 %v2546
  %v3023 = vunpack.c.h.b16 %v2546
  %v3024 = vunpack.c.l.b16 %v2547
  %v3025 = vunpack.c.h.b16 %v2547
  %v3026 = vunpack.c.l.b16 %v2548
  %v3027 = vunpack.c.h.b16 %v2548
  %v3028 = vunpack.c.l.b16 %v2549
  %v3029 = vunpack.c.h.b16 %v2549
  %v3030 = vunpack.c.l.b16 %v2550
  %v3031 = vunpack.c.h.b16 %v2550
  %v3032 = vunpack.c.l.b16 %v2551
  %v3033 = vunpack.c.h.b16 %v2551
  %v3034 = vunpack.c.l.b16 %v2552
  %v3035 = vunpack.c.h.b16 %v2552
  %v3036 = vunpack.c.l.b16 %v2553
  %v3037 = vunpack.c.h.b16 %v2553
  %v3038 = vunpack.c.l.b16 %v2554
  %v3039 = vunpack.c.h.b16 %v2554
  %v3040 = vunpack.c.l.b16 %v2555
  %v3041 = vunpack.c.h.b16 %v2555
  %v3042 = vunpack.c.l.b16 %v2556
  %v3043 = vunpack.c.h.b16 %v2556
  %v3044 = vunpack.c.l.b16 %v2557
  %v3045 = vunpack.c.h.b16 %v2557
  %v3046 = vunpack.c.l.b16 %v2558
  %v3047 = vunpack.c.h.b16 %v2558
  %v3048 = vunpack.c.l.b16 %v2559
  %v3049 = vunpack.c.h.b16 %v2559
  %v3050 = vunpack.c.l.b16 %v2560
  %v3051 = vunpack.c.h.b16 %v2560
  %v3052 = vunpack.c.l.b16 %v2561
  %v3053 = vunpack.c.h.b16 %v2561
  %v3054 = vunpack.c.l.b16 %v2562
  %v3055 = vunpack.c.h.b16 %v2562
  %v3056 = vunpack.c.l.b16 %v2563
  %v3057 = vunpack.c.h.b16 %v2563
  %v3058 = vunpack.c.l.b16 %v2564
  %v3059 = vunpack.c.h.b16 %v2564
  %v3060 = vunpack.c.l.b16 %v2565
  %v3061 = vunpack.c.h.b16 %v2565
  %v3062 = vunpack.c.l.b16 %v2566
  %v3063 = vunpack.c.h.b16 %v2566
  %v3064 = vunpack.c.l.b16 %v2567
  %v3065 = vunpack.c.h.b16 %v2567
  %v3066 = vunpack.c.l.b16 %v2568
  %v3067 = vunpack.c.h.b16 %v2568
  %v3068 = vunpack.c.l.b16 %v2569
  %v3069 = vunpack.c.h.b16 %v2569
  %v3070 = vunpack.c.l.b16 %v2570
  %v3071 = vunpack.c.h.b16 %v2570
  %v3072 = vunpack.c.l.b16 %v2571
  %v3073 = vunpack.c.h.b16 %v2571
  %v3074 = vunpack.c.l.b16 %v2572
  %v3075 = vunpack.c.h.b16 %v2572
  %v3076 = vunpack.c.l.b16 %v2573
  %v3077 = vunpack.c.h.b16 %v2573
  %v3078 = vunpack.c.l.b16 %v2574
  %v3079 = vunpack.c.h.b16 %v2574
  %v3080 = vunpack.c.l.b16 %v2575
  %v3081 = vunpack.c.h.b16 %v2575
  %v3082 = vunpack.c.l.b16 %v2576
  %v3083 = vunpack.c.h.b16 %v2576
  %v3084 = vunpack.c.l.b16 %v2577
  %v3085 = vunpack.c.h.b16 %v2577
  %v3086 = vunpack.c.l.b16 %v2578
  %v3087 = vunpack.c.h.b16 %v2578
  %v3088 = vunpack.c.l.b16 %v2579
  %v3089 = vunpack.c.h.b16 %v2579
  %v3090 = vunpack.c.l.b16 %v2580
  %v3091 = vunpack.c.h.b16 %v2580
  %v3092 = vunpack.c.l.b16 %v2581
  %v3093 = vunpack.c.h.b16 %v2581
  %v3094 = vunpack.c.l.b16 %v2582
  %v3095 = vunpack.c.h.b16 %v2582
  %v3096 = vunpack.c.l.b16 %v2583
  %v3097 = vunpack.c.h.b16 %v2583
  %v3098 = vunpack.c.l.b16 %v2584
  %v3099 = vunpack.c.h.b16 %v2584
  %v3100 = vunpack.c.l.b16 %v2585
  %v3101 = vunpack.c.h.b16 %v2585
  %v3102 = vunpack.c.l.b16 %v2586
  %v3103 = vunpack.c.h.b16 %v2586
  %v3104 = vunpack.c.l.b16 %v2587
  %v3105 = vunpack.c.h.b16 %v2587
  %v3106 = vunpack.c.l.b16 %v2588
  %v3107 = vunpack.c.h.b16 %v2588
  %v3108 = vunpack.c.l.b16 %v2589
  %v3109 = vunpack.c.h.b16 %v2589
  %v3110 = vunpack.c.l.b16 %v2590
  %v3111 = vunpack.c.h.b16 %v2590
  %v3112 = vunpack.c.l.b16 %v2591
  %v3113 = vunpack.c.h.b16 %v2591
  %v3114 = vunpack.c.l.b16 %v2592
  %v3115 = vunpack.c.h.b16 %v2592
  %v3116 = vunpack.c.l.b16 %v2593
  %v3117 = vunpack.c.h.b16 %v2593
  %v3118 = vunpack.c.l.b16 %v2594
  %v3119 = vunpack.c.h.b16 %v2594
  %v3120 = vunpack.c.l.b16 %v2595
  %v3121 = vunpack.c.h.b16 %v2595
  %v3122 = vunpack.c.l.b16 %v2596
  %v3123 = vunpack.c.h.b16 %v2596
  %v3124 = vunpack.c.l.b16 %v2597
  %v3125 = vunpack.c.h.b16 %v2597
  %v3126 = vunpack.c.l.b16 %v2598
  %v3127 = vunpack.c.h.b16 %v2598
  %v3128 = vunpack.c.l.b16 %v2599
  %v3129 = vunpack.c.h.b16 %v2599
  %v3130 = vunpack.c.l.b16 %v2600
  %v3131 = vunpack.c.h.b16 %v2600
  %v3132 = vunpack.c.l.b16 %v2601
  %v3133 = vunpack.c.h.b16 %v2601
  %v3134 = vunpack.c.l.b16 %v2602
  %v3135 = vunpack.c.h.b16 %v2602
  %v3136 = vunpack.c.l.b16 %v2603
  %v3137 = vunpack.c.h.b16 %v2603
  %v3138 = vunpack.c.l.b16 %v2604
  %v3139 = vunpack.c.h.b16 %v2604
  %v3140 = vunpack.c.l.b16 %v2605
  %v3141 = vunpack.c.h.b16 %v2605
  %v3142 = vunpack.c.l.b16 %v2606
  %v3143 = vunpack.c.h.b16 %v2606
  %v3144 = vunpack.c.l.b16 %v2607
  %v3145 = vunpack.c.h.b16 %v2607
  %v3146 = vunpack.c.l.b16 %v2608
  %v3147 = vunpack.c.h.b16 %v2608
  %v3148 = vunpack.c.l.b16 %v2609
  %v3149 = vunpack.c.h.b16 %v2609
  %v3150 = vunpack.c.l.b16 %v2610
  %v3151 = vunpack.c.h.b16 %v2610
  %v3152 = vunpack.c.l.b16 %v2611
  %v3153 = vunpack.c.h.b16 %v2611
  %v3154 = vunpack.c.l.b16 %v2612
  %v3155 = vunpack.c.h.b16 %v2612
  %v3156 = vunpack.c.l.b16 %v2613
  %v3157 = vunpack.c.h.b16 %v2613
  %v3158 = vunpack.c.l.b16 %v2614
  %v3159 = vunpack.c.h.b16 %v2614
  %v3160 = vunpack.c.l.b16 %v2615
  %v3161 = vunpack.c.h.b16 %v2615
  %v3162 = vunpack.c.l.b16 %v2616
  %v3163 = vunpack.c.h.b16 %v2616
  %v3164 = vunpack.c.l.b16 %v2617
  %v3165 = vunpack.c.h.b16 %v2617
  %v3166 = vunpack.c.l.b16 %v2618
  %v3167 = vunpack.c.h.b16 %v2618
  %v3168 = vunpack.c.l.b16 %v2619
  %v3169 = vunpack.c.h.b16 %v2619
  %v3170 = vunpack.c.l.b16 %v2620
  %v3171 = vunpack.c.h.b16 %v2620
  %v3172 = vunpack.c.l.b16 %v2621
  %v3173 = vunpack.c.h.b16 %v2621
  %v3174 = vunpack.c.l.b16 %v2622
  %v3175 = vunpack.c.h.b16 %v2622
  %v3176 = vunpack.c.l.b16 %v2623
  %v3177 = vunpack.c.h.b16 %v2623
  %v3178 = vunpack.c.l.b16 %v2624
  %v3179 = vunpack.c.h.b16 %v2624
  %v3180 = vunpack.c.l.b16 %v2625
  %v3181 = vunpack.c.h.b16 %v2625
  %v3182 = vunpack.c.l.b16 %v2626
  %v3183 = vunpack.c.h.b16 %v2626
  %v3184 = vunpack.c.l.b16 %v2627
  %v3185 = vunpack.c.h.b16 %v2627
  %v3186 = vunpack.c.l.b16 %v2628
  %v3187 = vunpack.c.h.b16 %v2628
  %v3188 = vunpack.c.l.b16 %v2629
  %v3189 = vunpack.c.h.b16 %v2629
  %v3190 = vunpack.c.l.b16 %v2630
  %v3191 = vunpack.c.h.b16 %v2630
  %v3192 = vunpack.c.l.b16 %v2631
  %v3193 = vunpack.c.h.b16 %v2631
  %v3194 = vunpack.c.l.b16 %v2632
  %v3195 = vunpack.c.h.b16 %v2632
  %v3196 = vunpack.c.l.b16 %v2633
  %v3197 = vunpack.c.h.b16 %v2633
  %v3198 = vunpack.c.l.b16 %v2634
  %v3199 = vunpack.c.h.b16 %v2634
  %v3200 = vunpack.c.l.b16 %v2635
  %v3201 = vunpack.c.h.b16 %v2635
  %v3202 = vunpack.c.l.b16 %v2636
  %v3203 = vunpack.c.h.b16 %v2636
  %v3204 = vunpack.c.l.b16 %v2637
  %v3205 = vunpack.c.h.b16 %v2637
  %v3206 = vunpack.c.l.b16 %v2638
  %v3207 = vunpack.c.h.b16 %v2638
  %v3208 = vunpack.c.l.b16 %v2639
  %v3209 = vunpack.c.h.b16 %v2639
  %v3210 = vunpack.c.l.b16 %v2640
  %v3211 = vunpack.c.h.b16 %v2640
  %v3212 = vunpack.c.l.b16 %v2641
  %v3213 = vunpack.c.h.b16 %v2641
  %v3214 = vunpack.c.l.b16 %v2642
  %v3215 = vunpack.c.h.b16 %v2642
  %v3216 = vunpack.c.l.b16 %v2643
  %v3217 = vunpack.c.h.b16 %v2643
  %v3218 = vunpack.c.l.b16 %v2644
  %v3219 = vunpack.c.h.b16 %v2644
  %v3220 = vunpack.c.l.b16 %v2645
  %v3221 = vunpack.c.h.b16 %v2645
  %v3222 = vunpack.c.l.b16 %v2646
  %v3223 = vunpack.c.h.b16 %v2646
  %v3224 = vunpack.c.l.b16 %v2647
  %v3225 = vunpack.c.h.b16 %v2647
  %v3226 = vunpack.c.l.b16 %v2648
  %v3227 = vunpack.c.h.b16 %v2648
  %v3228 = vunpack.c.l.b16 %v2649
  %v3229 = vunpack.c.h.b16 %v2649
  %v3230 = vunpack.c.l.b16 %v2650
  %v3231 = vunpack.c.h.b16 %v2650
  %v3232 = vunpack.c.l.b16 %v2651
  %v3233 = vunpack.c.h.b16 %v2651
  %v3234 = vunpack.c.l.b16 %v2652
  %v3235 = vunpack.c.h.b16 %v2652
  %v3236 = vunpack.c.l.b16 %v2653
  %v3237 = vunpack.c.h.b16 %v2653
  %v3238 = vunpack.c.l.b16 %v2654
  %v3239 = vunpack.c.h.b16 %v2654
  %v3240 = vunpack.c.l.b16 %v2655
  %v3241 = vunpack.c.h.b16 %v2655
  %v3242 = vunpack.c.l.b16 %v2656
  %v3243 = vunpack.c.h.b16 %v2656
  %v3244 = vunpack.c.l.b16 %v2657
  %v3245 = vunpack.c.h.b16 %v2657
  %v3246 = vunpack.c.l.b16 %v2658
  %v3247 = vunpack.c.h.b16 %v2658
  %v3248 = vunpack.c.l.b16 %v2659
  %v3249 = vunpack.c.h.b16 %v2659
  %v3250 = vunpack.c.l.b16 %v2660
  %v3251 = vunpack.c.h.b16 %v2660
  %v3252 = vunpack.c.l.b16 %v2661
  %v3253 = vunpack.c.h.b16 %v2661
  %v3254 = vunpack.c.l.b16 %v2662
  %v3255 = vunpack.c.h.b16 %v2662
  %v3256 = vunpack.c.l.b16 %v2663
  %v3257 = vunpack.c.h.b16 %v2663
  %v3258 = vunpack.c.l.b16 %v2664
  %v3259 = vunpack.c.h.b16 %v2664
  %v3260 = vunpack.c.l.b16 %v2665
  %v3261 = vunpack.c.h.b16 %v2665
  %v3262 = vunpack.c.l.b16 %v2666
  %v3263 = vunpack.c.h.b16 %v2666
  %v3264 = vunpack.c.l.b16 %v2667
  %v3265 = vunpack.c.h.b16 %v2667
  %v3266 = vunpack.c.l.b16 %v2668
  %v3267 = vunpack.c.h.b16 %v2668
  %v3268 = vunpack.c.l.b16 %v2669
  %v3269 = vunpack.c.h.b16 %v2669
  %v3270 = vunpack.c.l.b16 %v2670
  %v3271 = vunpack.c.h.b16 %v2670
  %v3272 = vunpack.c.l.b16 %v2671
  %v3273 = vunpack.c.h.b16 %v2671
  %v3274 = vunpack.c.l.b16 %v2672
  %v3275 = vunpack.c.h.b16 %v2672
  %v3276 = vunpack.c.l.b16 %v2673
  %v3277 = vunpack.c.h.b16 %v2673
  %v3278 = vunpack.c.l.b16 %v2674
  %v3279 = vunpack.c.h.b16 %v2674
  %v3280 = vunpack.c.l.b16 %v2675
  %v3281 = vunpack.c.h.b16 %v2675
  %v3282 = vunpack.c.l.b16 %v2676
  %v3283 = vunpack.c.h.b16 %v2676
  %v3284 = vunpack.c.l.b16 %v2677
  %v3285 = vunpack.c.h.b16 %v2677
  %v3286 = vunpack.c.l.b16 %v2678
  %v3287 = vunpack.c.h.b16 %v2678
  %v3288 = vunpack.c.l.b16 %v2679
  %v3289 = vunpack.c.h.b16 %v2679
  %v3290 = vunpack.c.l.b16 %v2680
  %v3291 = vunpack.c.h.b16 %v2680
  %v3292 = vpack.c.b16 %v2914, %v2908
  %v3293 = vpack.c.b16 %v2915, %v2909
  %v3294 = vpack.c.b16 %v2916, %v2910
  %v3295 = vpack.c.b16 %v2917, %v2911
  %v3296 = vpack.c.b16 %v2918, %v2912
  %v3297 = vpack.c.b16 %v2919, %v2913
  %v3298 = vpack.c.b16 %v2926, %v2920
  %v3299 = vpack.c.b16 %v2927, %v2921
  %v3300 = vpack.c.b16 %v2928, %v2922
  %v3301 = vpack.c.b16 %v2929, %v2923
  %v3302 = vpack.c.b16 %v2930, %v2924
  %v3303 = vpack.c.b16 %v2931, %v2925
  %v3304 = vpack.c.b16 %v2938, %v2932
  %v3305 = vpack.c.b16 %v2939, %v2933
  %v3306 = vpack.c.b16 %v2940, %v2934
  %v3307 = vpack.c.b16 %v2941, %v2935
  %v3308 = vpack.c.b16 %v2942, %v2936
  %v3309 = vpack.c.b16 %v2943, %v2937
  %v3310 = vpack.c.b16 %v2950, %v2944
  %v3311 = vpack.c.b16 %v2951, %v2945
  %v3312 = vpack.c.b16 %v2952, %v2946
  %v3313 = vpack.c.b16 %v2953, %v2947
  %v3314 = vpack.c.b16 %v2954, %v2948
  %v3315 = vpack.c.b16 %v2955, %v2949
  %v3316 = vpack.c.b16 %v2962, %v2956
  %v3317 = vpack.c.b16 %v2963, %v2957
  %v3318 = vpack.c.b16 %v2964, %v2958
  %v3319 = vpack.c.b16 %v2965, %v2959
  %v3320 = vpack.c.b16 %v2966, %v2960
  %v3321 = vpack.c.b16 %v2967, %v2961
  %v3322 = vpack.c.b16 %v2974, %v2968
  %v3323 = vpack.c.b16 %v2975, %v2969
  %v3324 = vpack.c.b16 %v2976, %v2970
  %v3325 = vpack.c.b16 %v2977, %v2971
  %v3326 = vpack.c.b16 %v2978, %v2972
  %v3327 = vpack.c.b16 %v2979, %v2973
  %v3328 = vpack.c.b16 %v2986, %v2980
  %v3329 = vpack.c.b16 %v2987, %v2981
  %v3330 = vpack.c.b16 %v2988, %v2982
  %v3331 = vpack.c.b16 %v2989, %v2983
  %v3332 = vpack.c.b16 %v2990, %v2984
  %v3333 = vpack.c.b16 %v2991, %v2985
  %v3334 = vpack.c.b16 %v2998, %v2992
  %v3335 = vpack.c.b16 %v2999, %v2993
  %v3336 = vpack.c.b16 %v3000, %v2994
  %v3337 = vpack.c.b16 %v3001, %v2995
  %v3338 = vpack.c.b16 %v3002, %v2996
  %v3339 = vpack.c.b16 %v3003, %v2997
  %v3340 = vpack.c.b16 %v3010, %v3004
  %v3341 = vpack.c.b16 %v3011, %v3005
  %v3342 = vpack.c.b16 %v3012, %v3006
  %v3343 = vpack.c.b16 %v3013, %v3007
  %v3344 = vpack.c.b16 %v3014, %v3008
  %v3345 = vpack.c.b16 %v3015, %v3009
  %v3346 = vpack.c.b16 %v3022, %v3016
  %v3347 = vpack.c.b16 %v3023, %v3017
  %v3348 = vpack.c.b16 %v3024, %v3018
  %v3349 = vpack.c.b16 %v3025, %v3019
  %v3350 = vpack.c.b16 %v3026, %v3020
  %v3351 = vpack.c.b16 %v3027, %v3021
  %v3352 = vpack.c.b16 %v3034, %v3028
  %v3353 = vpack.c.b16 %v3035, %v3029
  %v3354 = vpack.c.b16 %v3036, %v3030
  %v3355 = vpack.c.b16 %v3037, %v3031
  %v3356 = vpack.c.b16 %v3038, %v3032
  %v3357 = vpack.c.b16 %v3039, %v3033
  %v3358 = vpack.c.b16 %v3046, %v3040
  %v3359 = vpack.c.b16 %v3047, %v3041
  %v3360 = vpack.c.b16 %v3048, %v3042
  %v3361 = vpack.c.b16 %v3049, %v3043
  %v3362 = vpack.c.b16 %v3050, %v3044
  %v3363 = vpack.c.b16 %v3051, %v3045
  %v3364 = vpack.c.b16 %v3058, %v3052
  %v3365 = vpack.c.b16 %v3059, %v3053
  %v3366 = vpack.c.b16 %v3060, %v3054
  %v3367 = vpack.c.b16 %v3061, %v3055
  %v3368 = vpack.c.b16 %v3062, %v3056
  %v3369 = vpack.c.b16 %v3063, %v3057
  %v3370 = vpack.c.b16 %v3070, %v3064
  %v3371 = vpack.c.b16 %v3071, %v3065
  %v3372 = vpack.c.b16 %v3072, %v3066
  %v3373 = vpack.c.b16 %v3073, %v3067
  %v3374 = vpack.c.b16 %v3074, %v3068
  %v3375 = vpack.c.b16 %v3075, %v3069
  %v3376 = vpack.c.b16 %v3082, %v3076
  %v3377 = vpack.c.b16 %v3083, %v3077
  %v3378 = vpack.c.b16 %v3084, %v3078
  %v3379 = vpack.c.b16 %v3085, %v3079
  %v3380 = vpack.c.b16 %v3086, %v3080
  %v3381 = vpack.c.b16 %v3087, %v3081
  %v3382 = vpack.c.b16 %v3094, %v3088
  %v3383 = vpack.c.b16 %v3095, %v3089
  %v3384 = vpack.c.b16 %v3096, %v3090
  %v3385 = vpack.c.b16 %v3097, %v3091
  %v3386 = vpack.c.b16 %v3098, %v3092
  %v3387 = vpack.c.b16 %v3099, %v3093
  %v3388 = vpack.c.b16 %v3106, %v3100
  %v3389 = vpack.c.b16 %v3107, %v3101
  %v3390 = vpack.c.b16 %v3108, %v3102
  %v3391 = vpack.c.b16 %v3109, %v3103
  %v3392 = vpack.c.b16 %v3110, %v3104
  %v3393 = vpack.c.b16 %v3111, %v3105
  %v3394 = vpack.c.b16 %v3118, %v3112
  %v3395 = vpack.c.b16 %v3119, %v3113
  %v3396 = vpack.c.b16 %v3120, %v3114
  %v3397 = vpack.c.b16 %v3121, %v3115
  %v3398 = vpack.c.b16 %v3122, %v3116
  %v3399 = vpack.c.b16 %v3123, %v3117
  %v3400 = vpack.c.b16 %v3130, %v3124
  %v3401 = vpack.c.b16 %v3131, %v3125
  %v3402 = vpack.c.b16 %v3132, %v3126
  %v3403 = vpack.c.b16 %v3133, %v3127
  %v3404 = vpack.c.b16 %v3134, %v3128
  %v3405 = vpack.c.b16 %v3135, %v3129
  %v3406 = vpack.c.b16 %v3142, %v3136
  %v3407 = vpack.c.b16 %v3143, %v3137
  %v3408 = vpack.c.b16 %v3144, %v3138
  %v3409 = vpack.c.b16 %v3145, %v3139
  %v3410 = vpack.c.b16 %v3146, %v3140
  %v3411 = vpack.c.b16 %v3147, %v3141
  %v3412 = vpack.c.b16 %v3154, %v3148
  %v3413 = vpack.c.b16 %v3155, %v3149
  %v3414 = vpack.c.b16 %v3156, %v3150
  %v3415 = vpack.c.b16 %v3157, %v3151
  %v3416 = vpack.c.b16 %v3158, %v3152
  %v3417 = vpack.c.b16 %v3159, %v3153
  %v3418 = vpack.c.b16 %v3166, %v3160
  %v3419 = vpack.c.b16 %v3167, %v3161
  %v3420 = vpack.c.b16 %v3168, %v3162
  %v3421 = vpack.c.b16 %v3169, %v3163
  %v3422 = vpack.c.b16 %v3170, %v3164
  %v3423 = vpack.c.b16 %v3171, %v3165
  %v3424 = vpack.c.b16 %v3178, %v3172
  %v3425 = vpack.c.b16 %v3179, %v3173
  %v3426 = vpack.c.b16 %v3180, %v3174
  %v3427 = vpack.c.b16 %v3181, %v3175
  %v3428 = vpack.c.b16 %v3182, %v3176
  %v3429 = vpack.c.b16 %v3183, %v3177
  %v3430 = vpack.c.b16 %v3190, %v3184
  %v3431 = vpack.c.b16 %v3191, %v3185
  %v3432 = vpack.c.b16 %v3192, %v3186
  %v3433 = vpack.c.b16 %v3193, %v3187
  %v3434 = vpack.c.b16 %v3194, %v3188
  %v3435 = vpack.c.b16 %v3195, %v3189
  %v3436 = vpack.c.b16 %v3202, %v3196
  %v3437 = vpack.c.b16 %v3203, %v3197
  %v3438 = vpack.c.b16 %v3204, %v3198
  %v3439 = vpack.c.b16 %v3205, %v3199
  %v3440 = vpack.c.b16 %v3206, %v3200
  %v3441 = vpack.c.b16 %v3207, %v3201
  %v3442 = vpack.c.b16 %v3214, %v3208
  %v3443 = vpack.c.b16 %v3215, %v3209
  %v3444 = vpack.c.b16 %v3216, %v3210
  %v3445 = vpack.c.b16 %v3217, %v3211
  %v3446 = vpack.c.b16 %v3218, %v3212
  %v3447 = vpack.c.b16 %v3219, %v3213
  %v3448 = vpack.c.b16 %v3226, %v3220
  %v3449 = vpack.c.b16 %v3227, %v3221
  %v3450 = vpack.c.b16 %v3228, %v3222
  %v3451 = vpack.c.b16 %v3229, %v3223
  %v3452 = vpack.c.b16 %v3230, %v3224
  %v3453 = vpack.c.b16 %v3231, %v3225
  %v3454 = vpack.c.b16 %v3238, %v3232
  %v3455 = vpack.c.b16 %v3239, %v3233
  %v3456 = vpack.c.b16 %v3240, %v3234
  %v3457 = vpack.c.b16 %v3241, %v3235
  %v3458 = vpack.c.b16 %v3242, %v3236
  %v3459 = vpack.c.b16 %v3243, %v3237
  %v3460 = vpack.c.b16 %v3250, %v3244
  %v3461 = vpack.c.b16 %v3251, %v3245
  %v3462 = vpack.c.b16 %v3252, %v3246
  %v3463 = vpack.c.b16 %v3253, %v3247
  %v3464 = vpack.c.b16 %v3254, %v3248
  %v3465 = vpack.c.b16 %v3255, %v3249
  %v3466 = vpack.c.b16 %v3262, %v3256
  %v3467 = vpack.c.b16 %v3263, %v3257
  %v3468 = vpack.c.b16 %v3264, %v3258
  %v3469 = vpack.c.b16 %v3265, %v3259
  %v3470 = vpack.c.b16 %v3266, %v3260
  %v3471 = vpack.c.b16 %v3267, %v3261
  %v3472 = vpack.c.b16 %v3274, %v3268
  %v3473 = vpack.c.b16 %v3275, %v3269
  %v3474 = vpack.c.b16 %v3276, %v3270
  %v3475 = vpack.c.b16 %v3277, %v3271
  %v3476 = vpack.c.b16 %v3278, %v3272
  %v3477 = vpack.c.b16 %v3279, %v3273
  %v3478 = vpack.c.b16 %v3286, %v3280
  %v3479 = vpack.c.b16 %v3287, %v3281
  %v3480 = vpack.c.b16 %v3288, %v3282
  %v3481 = vpack.c.b16 %v3289, %v3283
  %v3482 = vpack.c.b16 %v3290, %v3284
  %v3483 = vpack.c.b16 %v3291, %v3285
  %3676 = vmatprep.subr.bf16.mxu0 %v3293
  %3677 = vmatpush1.bf16.msra.mxu0 %v3292
  %3678 = vmatprep.subr.bf16.mxu0 %v3299
  %3679 = vmatpush1.bf16.msra.mxu0 %v3298
  %3680 = vmatprep.subr.bf16.mxu0 %v3305
  %3681 = vmatpush1.bf16.msra.mxu0 %v3304
  %3682 = vmatprep.subr.bf16.mxu0 %v3311
  %3683 = vmatpush1.bf16.msra.mxu0 %v3310
  %3684 = vmatprep.subr.bf16.mxu0 %v3317
  %3685 = vmatpush1.bf16.msra.mxu0 %v3316
  %3686 = vmatprep.subr.bf16.mxu0 %v3323
  %3687 = vmatpush1.bf16.msra.mxu0 %v3322
  %3688 = vmatprep.subr.bf16.mxu0 %v3329
  %3689 = vmatpush1.bf16.msra.mxu0 %v3328
  %3690 = vmatprep.subr.bf16.mxu0 %v3335
  %3691 = vmatpush1.bf16.msra.mxu0 %v3334
  %3692 = vmatprep.subr.bf16.mxu0 %v3341
  %3693 = vmatpush1.bf16.msra.mxu0 %v3340
  %3694 = vmatprep.subr.bf16.mxu0 %v3347
  %3695 = vmatpush1.bf16.msra.mxu0 %v3346
  %3696 = vmatprep.subr.bf16.mxu0 %v3353
  %3697 = vmatpush1.bf16.msra.mxu0 %v3352
  %3698 = vmatprep.subr.bf16.mxu0 %v3359
  %3699 = vmatpush1.bf16.msra.mxu0 %v3358
  %3700 = vmatprep.subr.bf16.mxu0 %v3365
  %3701 = vmatpush1.bf16.msra.mxu0 %v3364
  %3702 = vmatprep.subr.bf16.mxu0 %v3371
  %3703 = vmatpush1.bf16.msra.mxu0 %v3370
  %3704 = vmatprep.subr.bf16.mxu0 %v3377
  %3705 = vmatpush1.bf16.msra.mxu0 %v3376
  %3706 = vmatprep.subr.bf16.mxu0 %v3383
  %3707 = vmatpush1.bf16.msra.mxu0 %v3382
  %3708 = vmatprep.mubr.bf16.mxu0 %v2486
  %3709 = vmatmul.mubr.bf16.gmra.mrb[0].mxu0 %v2485
  %v3710 = vpop.f32.mrb[0].mxu0
  %v3711 = vadd.f32 %v2689, %v3710
  %v3712 = vpop.f32.mrb[0].mxu0
  %v3713 = vadd.f32 %v2693, %v3712
  %v3714 = vpop.f32.mrb[0].mxu0
  %v3715 = vpop.f32.mrb[0].mxu0
  %3716 = vdwg.mxu0
  %3717 = vmatprep.subr.bf16.mxu0 %v3389
  %3718 = vmatpush1.bf16.msra.mxu0 %v3388
  %3719 = vmatprep.subr.bf16.mxu0 %v3395
  %3720 = vmatpush1.bf16.msra.mxu0 %v3394
  %3721 = vmatprep.subr.bf16.mxu0 %v3401
  %3722 = vmatpush1.bf16.msra.mxu0 %v3400
  %3723 = vmatprep.subr.bf16.mxu0 %v3407
  %3724 = vmatpush1.bf16.msra.mxu0 %v3406
  %3725 = vmatprep.subr.bf16.mxu0 %v3413
  %3726 = vmatpush1.bf16.msra.mxu0 %v3412
  %3727 = vmatprep.subr.bf16.mxu0 %v3419
  %3728 = vmatpush1.bf16.msra.mxu0 %v3418
  %3729 = vmatprep.subr.bf16.mxu0 %v3425
  %3730 = vmatpush1.bf16.msra.mxu0 %v3424
  %3731 = vmatprep.subr.bf16.mxu0 %v3431
  %3732 = vmatpush1.bf16.msra.mxu0 %v3430
  %3733 = vmatprep.subr.bf16.mxu0 %v3437
  %3734 = vmatpush1.bf16.msra.mxu0 %v3436
  %3735 = vmatprep.subr.bf16.mxu0 %v3443
  %3736 = vmatpush1.bf16.msra.mxu0 %v3442
  %3737 = vmatprep.subr.bf16.mxu0 %v3449
  %3738 = vmatpush1.bf16.msra.mxu0 %v3448
  %3739 = vmatprep.subr.bf16.mxu0 %v3455
  %3740 = vmatpush1.bf16.msra.mxu0 %v3454
  %3741 = vmatprep.subr.bf16.mxu0 %v3461
  %3742 = vmatpush1.bf16.msra.mxu0 %v3460
  %3743 = vmatprep.subr.bf16.mxu0 %v3467
  %3744 = vmatpush1.bf16.msra.mxu0 %v3466
  %3745 = vmatprep.subr.bf16.mxu0 %v3473
  %3746 = vmatpush1.bf16.msra.mxu0 %v3472
  %3747 = vmatprep.subr.bf16.mxu0 %v3479
  %3748 = vmatpush1.bf16.msra.mxu0 %v3478
  %3749 = vmatprep.mubr.bf16.mxu0 %v2488
  %3750 = vmatmul.mubr.bf16.gmra.mrb[0].mxu0 %v2487
  %v3751 = vpop.f32.mrb[0].mxu0
  %v3752 = vadd.f32 %v3711, %v3751
  %v3753 = vpop.f32.mrb[0].mxu0
  %v3754 = vadd.f32 %v3713, %v3753
  %v3755 = vpop.f32.mrb[0].mxu0
  %v3756 = vpop.f32.mrb[0].mxu0
  %3757 = vdwg.mxu0
  %3758 = vmatprep.subr.bf16.mxu0 %v3295
  %3759 = vmatpush1.bf16.msra.mxu0 %v3294
  %3760 = vmatprep.subr.bf16.mxu0 %v3301
  %3761 = vmatpush1.bf16.msra.mxu0 %v3300
  %3762 = vmatprep.subr.bf16.mxu0 %v3307
  %3763 = vmatpush1.bf16.msra.mxu0 %v3306
  %3764 = vmatprep.subr.bf16.mxu0 %v3313
  %3765 = vmatpush1.bf16.msra.mxu0 %v3312
  %3766 = vmatprep.subr.bf16.mxu0 %v3319
  %3767 = vmatpush1.bf16.msra.mxu0 %v3318
  %3768 = vmatprep.subr.bf16.mxu0 %v3325
  %3769 = vmatpush1.bf16.msra.mxu0 %v3324
  %3770 = vmatprep.subr.bf16.mxu0 %v3331
  %3771 = vmatpush1.bf16.msra.mxu0 %v3330
  %3772 = vmatprep.subr.bf16.mxu0 %v3337
  %3773 = vmatpush1.bf16.msra.mxu0 %v3336
  %3774 = vmatprep.subr.bf16.mxu0 %v3343
  %3775 = vmatpush1.bf16.msra.mxu0 %v3342
  %3776 = vmatprep.subr.bf16.mxu0 %v3349
  %3777 = vmatpush1.bf16.msra.mxu0 %v3348
  %3778 = vmatprep.subr.bf16.mxu0 %v3355
  %3779 = vmatpush1.bf16.msra.mxu0 %v3354
  %3780 = vmatprep.subr.bf16.mxu0 %v3361
  %3781 = vmatpush1.bf16.msra.mxu0 %v3360
  %3782 = vmatprep.subr.bf16.mxu0 %v3367
  %3783 = vmatpush1.bf16.msra.mxu0 %v3366
  %3784 = vmatprep.subr.bf16.mxu0 %v3373
  %3785 = vmatpush1.bf16.msra.mxu0 %v3372
  %3786 = vmatprep.subr.bf16.mxu0 %v3379
  %3787 = vmatpush1.bf16.msra.mxu0 %v3378
  %3788 = vmatprep.subr.bf16.mxu0 %v3385
  %3789 = vmatpush1.bf16.msra.mxu0 %v3384
  %3790 = vmatprep.mubr.bf16.mxu0 %v2486
  %3791 = vmatmul.mubr.bf16.gmra.mrb[0].mxu0 %v2485
  %v3792 = vpop.f32.mrb[0].mxu0
  %v3793 = vadd.f32 %v2697, %v3792
  %v3794 = vpop.f32.mrb[0].mxu0
  %v3795 = vadd.f32 %v2701, %v3794
  %v3796 = vpop.f32.mrb[0].mxu0
  %v3797 = vpop.f32.mrb[0].mxu0
  %3798 = vdwg.mxu0
  %3799 = vmatprep.subr.bf16.mxu0 %v3391
  %3800 = vmatpush1.bf16.msra.mxu0 %v3390
  %3801 = vmatprep.subr.bf16.mxu0 %v3397
  %3802 = vmatpush1.bf16.msra.mxu0 %v3396
  %3803 = vmatprep.subr.bf16.mxu0 %v3403
  %3804 = vmatpush1.bf16.msra.mxu0 %v3402
  %3805 = vmatprep.subr.bf16.mxu0 %v3409
  %3806 = vmatpush1.bf16.msra.mxu0 %v3408
  %3807 = vmatprep.subr.bf16.mxu0 %v3415
  %3808 = vmatpush1.bf16.msra.mxu0 %v3414
  %3809 = vmatprep.subr.bf16.mxu0 %v3421
  %3810 = vmatpush1.bf16.msra.mxu0 %v3420
  %3811 = vmatprep.subr.bf16.mxu0 %v3427
  %3812 = vmatpush1.bf16.msra.mxu0 %v3426
  %3813 = vmatprep.subr.bf16.mxu0 %v3433
  %3814 = vmatpush1.bf16.msra.mxu0 %v3432
  %3815 = vmatprep.subr.bf16.mxu0 %v3439
  %3816 = vmatpush1.bf16.msra.mxu0 %v3438
  %3817 = vmatprep.subr.bf16.mxu0 %v3445
  %3818 = vmatpush1.bf16.msra.mxu0 %v3444
  %3819 = vmatprep.subr.bf16.mxu0 %v3451
  %3820 = vmatpush1.bf16.msra.mxu0 %v3450
  %3821 = vmatprep.subr.bf16.mxu0 %v3457
  %3822 = vmatpush1.bf16.msra.mxu0 %v3456
  %3823 = vmatprep.subr.bf16.mxu0 %v3463
  %3824 = vmatpush1.bf16.msra.mxu0 %v3462
  %3825 = vmatprep.subr.bf16.mxu0 %v3469
  %3826 = vmatpush1.bf16.msra.mxu0 %v3468
  %3827 = vmatprep.subr.bf16.mxu0 %v3475
  %3828 = vmatpush1.bf16.msra.mxu0 %v3474
  %3829 = vmatprep.subr.bf16.mxu0 %v3481
  %3830 = vmatpush1.bf16.msra.mxu0 %v3480
  %3831 = vmatprep.mubr.bf16.mxu0 %v2488
  %3832 = vmatmul.mubr.bf16.gmra.mrb[0].mxu0 %v2487
  %v3833 = vpop.f32.mrb[0].mxu0
  %v3834 = vadd.f32 %v3793, %v3833
  %v3835 = vpop.f32.mrb[0].mxu0
  %v3836 = vadd.f32 %v3795, %v3835
  %v3837 = vpop.f32.mrb[0].mxu0
  %v3838 = vpop.f32.mrb[0].mxu0
  %3839 = vdwg.mxu0
  %3840 = vmatprep.subr.bf16.mxu0 %v3297
  %3841 = vmatpush1.bf16.msra.mxu0 %v3296
  %3842 = vmatprep.subr.bf16.mxu0 %v3303
  %3843 = vmatpush1.bf16.msra.mxu0 %v3302
  %3844 = vmatprep.subr.bf16.mxu0 %v3309
  %3845 = vmatpush1.bf16.msra.mxu0 %v3308
  %3846 = vmatprep.subr.bf16.mxu0 %v3315
  %3847 = vmatpush1.bf16.msra.mxu0 %v3314
  %3848 = vmatprep.subr.bf16.mxu0 %v3321
  %3849 = vmatpush1.bf16.msra.mxu0 %v3320
  %3850 = vmatprep.subr.bf16.mxu0 %v3327
  %3851 = vmatpush1.bf16.msra.mxu0 %v3326
  %3852 = vmatprep.subr.bf16.mxu0 %v3333
  %3853 = vmatpush1.bf16.msra.mxu0 %v3332
  %3854 = vmatprep.subr.bf16.mxu0 %v3339
  %3855 = vmatpush1.bf16.msra.mxu0 %v3338
  %3856 = vmatprep.subr.bf16.mxu0 %v3345
  %3857 = vmatpush1.bf16.msra.mxu0 %v3344
  %3858 = vmatprep.subr.bf16.mxu0 %v3351
  %3859 = vmatpush1.bf16.msra.mxu0 %v3350
  %3860 = vmatprep.subr.bf16.mxu0 %v3357
  %3861 = vmatpush1.bf16.msra.mxu0 %v3356
  %3862 = vmatprep.subr.bf16.mxu0 %v3363
  %3863 = vmatpush1.bf16.msra.mxu0 %v3362
  %3864 = vmatprep.subr.bf16.mxu0 %v3369
  %3865 = vmatpush1.bf16.msra.mxu0 %v3368
  %3866 = vmatprep.subr.bf16.mxu0 %v3375
  %3867 = vmatpush1.bf16.msra.mxu0 %v3374
  %3868 = vmatprep.subr.bf16.mxu0 %v3381
  %3869 = vmatpush1.bf16.msra.mxu0 %v3380
  %3870 = vmatprep.subr.bf16.mxu0 %v3387
  %3871 = vmatpush1.bf16.msra.mxu0 %v3386
  %3872 = vmatprep.mubr.bf16.mxu0 %v2486
  %3873 = vmatmul.mubr.bf16.gmra.mrb[0].mxu0 %v2485
  %v3874 = vpop.f32.mrb[0].mxu0
  %v3875 = vadd.f32 %v2705, %v3874
  %v3876 = vpop.f32.mrb[0].mxu0
  %v3877 = vadd.f32 %v2709, %v3876
  %v3878 = vpop.f32.mrb[0].mxu0
  %v3879 = vpop.f32.mrb[0].mxu0
  %3880 = vdwg.mxu0
  %3881 = vmatprep.subr.bf16.mxu0 %v3393
  %3882 = vmatpush1.bf16.msra.mxu0 %v3392
  %3883 = vmatprep.subr.bf16.mxu0 %v3399
  %3884 = vmatpush1.bf16.msra.mxu0 %v3398
  %3885 = vmatprep.subr.bf16.mxu0 %v3405
  %3886 = vmatpush1.bf16.msra.mxu0 %v3404
  %3887 = vmatprep.subr.bf16.mxu0 %v3411
  %3888 = vmatpush1.bf16.msra.mxu0 %v3410
  %3889 = vmatprep.subr.bf16.mxu0 %v3417
  %3890 = vmatpush1.bf16.msra.mxu0 %v3416
  %3891 = vmatprep.subr.bf16.mxu0 %v3423
  %3892 = vmatpush1.bf16.msra.mxu0 %v3422
  %3893 = vmatprep.subr.bf16.mxu0 %v3429
  %3894 = vmatpush1.bf16.msra.mxu0 %v3428
  %3895 = vmatprep.subr.bf16.mxu0 %v3435
  %3896 = vmatpush1.bf16.msra.mxu0 %v3434
  %3897 = vmatprep.subr.bf16.mxu0 %v3441
  %3898 = vmatpush1.bf16.msra.mxu0 %v3440
  %3899 = vmatprep.subr.bf16.mxu0 %v3447
  %3900 = vmatpush1.bf16.msra.mxu0 %v3446
  %3901 = vmatprep.subr.bf16.mxu0 %v3453
  %3902 = vmatpush1.bf16.msra.mxu0 %v3452
  %3903 = vmatprep.subr.bf16.mxu0 %v3459
  %3904 = vmatpush1.bf16.msra.mxu0 %v3458
  %3905 = vmatprep.subr.bf16.mxu0 %v3465
  %3906 = vmatpush1.bf16.msra.mxu0 %v3464
  %3907 = vmatprep.subr.bf16.mxu0 %v3471
  %3908 = vmatpush1.bf16.msra.mxu0 %v3470
  %3909 = vmatprep.subr.bf16.mxu0 %v3477
  %3910 = vmatpush1.bf16.msra.mxu0 %v3476
  %3911 = vmatprep.subr.bf16.mxu0 %v3483
  %3912 = vmatpush1.bf16.msra.mxu0 %v3482
  %3913 = vmatprep.mubr.bf16.mxu0 %v2488
  %3914 = vmatmul.mubr.bf16.gmra.mrb[0].mxu0 %v2487
  %v3915 = vpop.f32.mrb[0].mxu0
  %v3916 = vadd.f32 %v3875, %v3915
  %v3917 = vpop.f32.mrb[0].mxu0
  %v3918 = vadd.f32 %v3877, %v3917
  %v3919 = vpop.f32.mrb[0].mxu0
  %v3920 = vpop.f32.mrb[0].mxu0
  %3921 = vdwg.mxu0
  %v3922 = vmax.f32 %v3752, 0.0
  %v3923 = vmax.f32 %v3754, 0.0
  %v3924 = vmax.f32 %v3834, 0.0
  %v3925 = vmax.f32 %v3836, 0.0
  %v3926 = vmax.f32 %v3916, 0.0
  %v3927 = vmax.f32 %v3918, 0.0
  %v3928 = vpack.c.bf16 %v3922, %v3922
  %v3929 = vpack.c.bf16 %v3923, %v3923
  %v3930 = vpack.c.bf16 %v3924, %v3924
  %v3931 = vpack.c.bf16 %v3925, %v3925
  %v3932 = vpack.c.bf16 %v3926, %v3926
  %v3933 = vpack.c.bf16 %v3927, %v3927
  %v3934 = vld [vmem:[%s5] sm:$0xff]
  %v3935 = vld [vmem:[%s5 + $0x8] sm:$0xff]
  %v3936 = vld [vmem:[%s5 + $0x10] sm:$0xff]
  %v3937 = vld [vmem:[%s5 + $0x18] sm:$0xff]
  %v3938 = vld [vmem:[%s5 + $0x20] sm:$0xff]
  %v3939 = vld [vmem:[%s5 + $0x28] sm:$0xff]
  %v3940 = vld [vmem:[%s5 + $0x30] sm:$0xff]
  %v3941 = vld [vmem:[%s5 + $0x38] sm:$0xff]
  %v3942 = vld [vmem:[%s5 + $0x40] sm:$0xff]
  %v3943 = vld [vmem:[%s5 + $0x48] sm:$0xff]
  %v3944 = vld [vmem:[%s5 + $0x50] sm:$0xff]
  %v3945 = vld [vmem:[%s5 + $0x58] sm:$0xff]
  %v3946 = vld [vmem:[%s5 + $0x60] sm:$0xff]
  %v3947 = vld [vmem:[%s5 + $0x68] sm:$0xff]
  %v3948 = vld [vmem:[%s5 + $0x70] sm:$0xff]
  %v3949 = vld [vmem:[%s5 + $0x78] sm:$0xff]
  %v3950 = vld [vmem:[%s5 + $0x80] sm:$0xff]
  %v3951 = vld [vmem:[%s5 + $0x88] sm:$0xff]
  %v3952 = vld [vmem:[%s5 + $0x90] sm:$0xff]
  %v3953 = vld [vmem:[%s5 + $0x98] sm:$0xff]
  %v3954 = vld [vmem:[%s5 + $0xa0] sm:$0xff]
  %v3955 = vld [vmem:[%s5 + $0xa8] sm:$0xff]
  %v3956 = vld [vmem:[%s5 + $0xb0] sm:$0xff]
  %v3957 = vld [vmem:[%s5 + $0xb8] sm:$0xff]
  %v3958 = vld [vmem:[%s5 + $0xc0] sm:$0xff]
  %v3959 = vld [vmem:[%s5 + $0xc8] sm:$0xff]
  %v3960 = vld [vmem:[%s5 + $0xd0] sm:$0xff]
  %v3961 = vld [vmem:[%s5 + $0xd8] sm:$0xff]
  %v3962 = vld [vmem:[%s5 + $0xe0] sm:$0xff]
  %v3963 = vld [vmem:[%s5 + $0xe8] sm:$0xff]
  %v3964 = vld [vmem:[%s5 + $0xf0] sm:$0xff]
  %v3965 = vld [vmem:[%s5 + $0xf8] sm:$0xff]
  %v3966 = vld [vmem:[%s5 + $0x100] sm:$0xff]
  %v3967 = vld [vmem:[%s5 + $0x108] sm:$0xff]
  %v3968 = vld [vmem:[%s5 + $0x110] sm:$0xff]
  %v3969 = vld [vmem:[%s5 + $0x118] sm:$0xff]
  %v3970 = vld [vmem:[%s5 + $0x120] sm:$0xff]
  %v3971 = vld [vmem:[%s5 + $0x128] sm:$0xff]
  %v3972 = vld [vmem:[%s5 + $0x130] sm:$0xff]
  %v3973 = vld [vmem:[%s5 + $0x138] sm:$0xff]
  %v3974 = vld [vmem:[%s5 + $0x140] sm:$0xff]
  %v3975 = vld [vmem:[%s5 + $0x148] sm:$0xff]
  %v3976 = vld [vmem:[%s5 + $0x150] sm:$0xff]
  %v3977 = vld [vmem:[%s5 + $0x158] sm:$0xff]
  %v3978 = vld [vmem:[%s5 + $0x160] sm:$0xff]
  %v3979 = vld [vmem:[%s5 + $0x168] sm:$0xff]
  %v3980 = vld [vmem:[%s5 + $0x170] sm:$0xff]
  %v3981 = vld [vmem:[%s5 + $0x178] sm:$0xff]
  %v3982 = vld [vmem:[%s5 + $0x180] sm:$0xff]
  %v3983 = vld [vmem:[%s5 + $0x188] sm:$0xff]
  %v3984 = vld [vmem:[%s5 + $0x190] sm:$0xff]
  %v3985 = vld [vmem:[%s5 + $0x198] sm:$0xff]
  %v3986 = vld [vmem:[%s5 + $0x1a0] sm:$0xff]
  %v3987 = vld [vmem:[%s5 + $0x1a8] sm:$0xff]
  %v3988 = vld [vmem:[%s5 + $0x1b0] sm:$0xff]
  %v3989 = vld [vmem:[%s5 + $0x1b8] sm:$0xff]
  %v3990 = vld [vmem:[%s5 + $0x1c0] sm:$0xff]
  %v3991 = vld [vmem:[%s5 + $0x1c8] sm:$0xff]
  %v3992 = vld [vmem:[%s5 + $0x1d0] sm:$0xff]
  %v3993 = vld [vmem:[%s5 + $0x1d8] sm:$0xff]
  %v3994 = vld [vmem:[%s5 + $0x1e0] sm:$0xff]
  %v3995 = vld [vmem:[%s5 + $0x1e8] sm:$0xff]
  %v3996 = vld [vmem:[%s5 + $0x1f0] sm:$0xff]
  %v3997 = vld [vmem:[%s5 + $0x1f8] sm:$0xff]
  %v3998 = vld [vmem:[%s5 + $0x200] sm:$0xff]
  %v3999 = vld [vmem:[%s5 + $0x208] sm:$0xff]
  %v4000 = vld [vmem:[%s5 + $0x210] sm:$0xff]
  %v4001 = vld [vmem:[%s5 + $0x218] sm:$0xff]
  %v4002 = vld [vmem:[%s5 + $0x220] sm:$0xff]
  %v4003 = vld [vmem:[%s5 + $0x228] sm:$0xff]
  %v4004 = vld [vmem:[%s5 + $0x230] sm:$0xff]
  %v4005 = vld [vmem:[%s5 + $0x238] sm:$0xff]
  %v4006 = vld [vmem:[%s5 + $0x240] sm:$0xff]
  %v4007 = vld [vmem:[%s5 + $0x248] sm:$0xff]
  %v4008 = vld [vmem:[%s5 + $0x250] sm:$0xff]
  %v4009 = vld [vmem:[%s5 + $0x258] sm:$0xff]
  %v4010 = vld [vmem:[%s5 + $0x260] sm:$0xff]
  %v4011 = vld [vmem:[%s5 + $0x268] sm:$0xff]
  %v4012 = vld [vmem:[%s5 + $0x270] sm:$0xff]
  %v4013 = vld [vmem:[%s5 + $0x278] sm:$0xff]
  %v4014 = vld [vmem:[%s5 + $0x280] sm:$0xff]
  %v4015 = vld [vmem:[%s5 + $0x288] sm:$0xff]
  %v4016 = vld [vmem:[%s5 + $0x290] sm:$0xff]
  %v4017 = vld [vmem:[%s5 + $0x298] sm:$0xff]
  %v4018 = vld [vmem:[%s5 + $0x2a0] sm:$0xff]
  %v4019 = vld [vmem:[%s5 + $0x2a8] sm:$0xff]
  %v4020 = vld [vmem:[%s5 + $0x2b0] sm:$0xff]
  %v4021 = vld [vmem:[%s5 + $0x2b8] sm:$0xff]
  %v4022 = vld [vmem:[%s5 + $0x2c0] sm:$0xff]
  %v4023 = vld [vmem:[%s5 + $0x2c8] sm:$0xff]
  %v4024 = vld [vmem:[%s5 + $0x2d0] sm:$0xff]
  %v4025 = vld [vmem:[%s5 + $0x2d8] sm:$0xff]
  %v4026 = vld [vmem:[%s5 + $0x2e0] sm:$0xff]
  %v4027 = vld [vmem:[%s5 + $0x2e8] sm:$0xff]
  %v4028 = vld [vmem:[%s5 + $0x2f0] sm:$0xff]
  %v4029 = vld [vmem:[%s5 + $0x2f8] sm:$0xff]
  %v4030 = vld [vmem:[%s5 + $0x300] sm:$0xff]
  %v4031 = vld [vmem:[%s5 + $0x308] sm:$0xff]
  %v4032 = vld [vmem:[%s5 + $0x310] sm:$0xff]
  %v4033 = vld [vmem:[%s5 + $0x318] sm:$0xff]
  %v4034 = vld [vmem:[%s5 + $0x320] sm:$0xff]
  %v4035 = vld [vmem:[%s5 + $0x328] sm:$0xff]
  %v4036 = vld [vmem:[%s5 + $0x330] sm:$0xff]
  %v4037 = vld [vmem:[%s5 + $0x338] sm:$0xff]
  %v4038 = vld [vmem:[%s5 + $0x340] sm:$0xff]
  %v4039 = vld [vmem:[%s5 + $0x348] sm:$0xff]
  %v4040 = vld [vmem:[%s5 + $0x350] sm:$0xff]
  %v4041 = vld [vmem:[%s5 + $0x358] sm:$0xff]
  %v4042 = vld [vmem:[%s5 + $0x360] sm:$0xff]
  %v4043 = vld [vmem:[%s5 + $0x368] sm:$0xff]
  %v4044 = vld [vmem:[%s5 + $0x370] sm:$0xff]
  %v4045 = vld [vmem:[%s5 + $0x378] sm:$0xff]
  %v4046 = vld [vmem:[%s5 + $0x380] sm:$0xff]
  %v4047 = vld [vmem:[%s5 + $0x388] sm:$0xff]
  %v4048 = vld [vmem:[%s5 + $0x390] sm:$0xff]
  %v4049 = vld [vmem:[%s5 + $0x398] sm:$0xff]
  %v4050 = vld [vmem:[%s5 + $0x3a0] sm:$0xff]
  %v4051 = vld [vmem:[%s5 + $0x3a8] sm:$0xff]
  %v4052 = vld [vmem:[%s5 + $0x3b0] sm:$0xff]
  %v4053 = vld [vmem:[%s5 + $0x3b8] sm:$0xff]
  %v4054 = vld [vmem:[%s5 + $0x3c0] sm:$0xff]
  %v4055 = vld [vmem:[%s5 + $0x3c8] sm:$0xff]
  %v4056 = vld [vmem:[%s5 + $0x3d0] sm:$0xff]
  %v4057 = vld [vmem:[%s5 + $0x3d8] sm:$0xff]
  %v4058 = vld [vmem:[%s5 + $0x3e0] sm:$0xff]
  %v4059 = vld [vmem:[%s5 + $0x3e8] sm:$0xff]
  %v4060 = vld [vmem:[%s5 + $0x3f0] sm:$0xff]
  %v4061 = vld [vmem:[%s5 + $0x3f8] sm:$0xff]
  %v4062 = vld [vmem:[%s5 + $0x400] sm:$0xff]
  %v4063 = vld [vmem:[%s5 + $0x408] sm:$0xff]
  %v4064 = vld [vmem:[%s5 + $0x410] sm:$0xff]
  %v4065 = vld [vmem:[%s5 + $0x418] sm:$0xff]
  %v4066 = vld [vmem:[%s5 + $0x420] sm:$0xff]
  %v4067 = vld [vmem:[%s5 + $0x428] sm:$0xff]
  %v4068 = vld [vmem:[%s5 + $0x430] sm:$0xff]
  %v4069 = vld [vmem:[%s5 + $0x438] sm:$0xff]
  %v4070 = vld [vmem:[%s5 + $0x440] sm:$0xff]
  %v4071 = vld [vmem:[%s5 + $0x448] sm:$0xff]
  %v4072 = vld [vmem:[%s5 + $0x450] sm:$0xff]
  %v4073 = vld [vmem:[%s5 + $0x458] sm:$0xff]
  %v4074 = vld [vmem:[%s5 + $0x460] sm:$0xff]
  %v4075 = vld [vmem:[%s5 + $0x468] sm:$0xff]
  %v4076 = vld [vmem:[%s5 + $0x470] sm:$0xff]
  %v4077 = vld [vmem:[%s5 + $0x478] sm:$0xff]
  %v4078 = vld [vmem:[%s5 + $0x480] sm:$0xff]
  %v4079 = vld [vmem:[%s5 + $0x488] sm:$0xff]
  %v4080 = vld [vmem:[%s5 + $0x490] sm:$0xff]
  %v4081 = vld [vmem:[%s5 + $0x498] sm:$0xff]
  %v4082 = vld [vmem:[%s5 + $0x4a0] sm:$0xff]
  %v4083 = vld [vmem:[%s5 + $0x4a8] sm:$0xff]
  %v4084 = vld [vmem:[%s5 + $0x4b0] sm:$0xff]
  %v4085 = vld [vmem:[%s5 + $0x4b8] sm:$0xff]
  %v4086 = vld [vmem:[%s5 + $0x4c0] sm:$0xff]
  %v4087 = vld [vmem:[%s5 + $0x4c8] sm:$0xff]
  %v4088 = vld [vmem:[%s5 + $0x4d0] sm:$0xff]
  %v4089 = vld [vmem:[%s5 + $0x4d8] sm:$0xff]
  %v4090 = vld [vmem:[%s5 + $0x4e0] sm:$0xff]
  %v4091 = vld [vmem:[%s5 + $0x4e8] sm:$0xff]
  %v4092 = vld [vmem:[%s5 + $0x4f0] sm:$0xff]
  %v4093 = vld [vmem:[%s5 + $0x4f8] sm:$0xff]
  %v4094 = vld [vmem:[%s5 + $0x500] sm:$0xff]
  %v4095 = vld [vmem:[%s5 + $0x508] sm:$0xff]
  %v4096 = vld [vmem:[%s5 + $0x510] sm:$0xff]
  %v4097 = vld [vmem:[%s5 + $0x518] sm:$0xff]
  %v4098 = vld [vmem:[%s5 + $0x520] sm:$0xff]
  %v4099 = vld [vmem:[%s5 + $0x528] sm:$0xff]
  %v4100 = vld [vmem:[%s5 + $0x530] sm:$0xff]
  %v4101 = vld [vmem:[%s5 + $0x538] sm:$0xff]
  %v4102 = vld [vmem:[%s5 + $0x540] sm:$0xff]
  %v4103 = vld [vmem:[%s5 + $0x548] sm:$0xff]
  %v4104 = vld [vmem:[%s5 + $0x550] sm:$0xff]
  %v4105 = vld [vmem:[%s5 + $0x558] sm:$0xff]
  %v4106 = vld [vmem:[%s5 + $0x560] sm:$0xff]
  %v4107 = vld [vmem:[%s5 + $0x568] sm:$0xff]
  %v4108 = vld [vmem:[%s5 + $0x570] sm:$0xff]
  %v4109 = vld [vmem:[%s5 + $0x578] sm:$0xff]
  %v4110 = vld [vmem:[%s5 + $0x580] sm:$0xff]
  %v4111 = vld [vmem:[%s5 + $0x588] sm:$0xff]
  %v4112 = vld [vmem:[%s5 + $0x590] sm:$0xff]
  %v4113 = vld [vmem:[%s5 + $0x598] sm:$0xff]
  %v4114 = vld [vmem:[%s5 + $0x5a0] sm:$0xff]
  %v4115 = vld [vmem:[%s5 + $0x5a8] sm:$0xff]
  %v4116 = vld [vmem:[%s5 + $0x5b0] sm:$0xff]
  %v4117 = vld [vmem:[%s5 + $0x5b8] sm:$0xff]
  %v4118 = vld [vmem:[%s5 + $0x5c0] sm:$0xff]
  %v4119 = vld [vmem:[%s5 + $0x5c8] sm:$0xff]
  %v4120 = vld [vmem:[%s5 + $0x5d0] sm:$0xff]
  %v4121 = vld [vmem:[%s5 + $0x5d8] sm:$0xff]
  %v4122 = vld [vmem:[%s5 + $0x5e0] sm:$0xff]
  %v4123 = vld [vmem:[%s5 + $0x5e8] sm:$0xff]
  %v4124 = vld [vmem:[%s5 + $0x5f0] sm:$0xff]
  %v4125 = vld [vmem:[%s5 + $0x5f8] sm:$0xff]
  %v4126 = vld [vmem:[%s5 + $0x600] sm:$0xff]
  %v4127 = vld [vmem:[%s5 + $0x608] sm:$0xff]
  %v4128 = vld [vmem:[%s5 + $0x610] sm:$0xff]
  %v4129 = vld [vmem:[%s5 + $0x618] sm:$0xff]
  %v4130 = vld [vmem:[%s5 + $0x620] sm:$0xff]
  %v4131 = vld [vmem:[%s5 + $0x628] sm:$0xff]
  %v4132 = vld [vmem:[%s5 + $0x630] sm:$0xff]
  %v4133 = vld [vmem:[%s5 + $0x638] sm:$0xff]
  %v4134 = vld [vmem:[%s5 + $0x640] sm:$0xff]
  %v4135 = vld [vmem:[%s5 + $0x648] sm:$0xff]
  %v4136 = vld [vmem:[%s5 + $0x650] sm:$0xff]
  %v4137 = vld [vmem:[%s5 + $0x658] sm:$0xff]
  %v4138 = vld [vmem:[%s5 + $0x660] sm:$0xff]
  %v4139 = vld [vmem:[%s5 + $0x668] sm:$0xff]
  %v4140 = vld [vmem:[%s5 + $0x670] sm:$0xff]
  %v4141 = vld [vmem:[%s5 + $0x678] sm:$0xff]
  %v4142 = vld [vmem:[%s5 + $0x680] sm:$0xff]
  %v4143 = vld [vmem:[%s5 + $0x688] sm:$0xff]
  %v4144 = vld [vmem:[%s5 + $0x690] sm:$0xff]
  %v4145 = vld [vmem:[%s5 + $0x698] sm:$0xff]
  %v4146 = vld [vmem:[%s5 + $0x6a0] sm:$0xff]
  %v4147 = vld [vmem:[%s5 + $0x6a8] sm:$0xff]
  %v4148 = vld [vmem:[%s5 + $0x6b0] sm:$0xff]
  %v4149 = vld [vmem:[%s5 + $0x6b8] sm:$0xff]
  %v4150 = vld [vmem:[%s5 + $0x6c0] sm:$0xff]
  %v4151 = vld [vmem:[%s5 + $0x6c8] sm:$0xff]
  %v4152 = vld [vmem:[%s5 + $0x6d0] sm:$0xff]
  %v4153 = vld [vmem:[%s5 + $0x6d8] sm:$0xff]
  %v4154 = vld [vmem:[%s5 + $0x6e0] sm:$0xff]
  %v4155 = vld [vmem:[%s5 + $0x6e8] sm:$0xff]
  %v4156 = vld [vmem:[%s5 + $0x6f0] sm:$0xff]
  %v4157 = vld [vmem:[%s5 + $0x6f8] sm:$0xff]
  %v4158 = vld [vmem:[%s5 + $0x700] sm:$0xff]
  %v4159 = vld [vmem:[%s5 + $0x708] sm:$0xff]
  %v4160 = vld [vmem:[%s5 + $0x710] sm:$0xff]
  %v4161 = vld [vmem:[%s5 + $0x718] sm:$0xff]
  %v4162 = vld [vmem:[%s5 + $0x720] sm:$0xff]
  %v4163 = vld [vmem:[%s5 + $0x728] sm:$0xff]
  %v4164 = vld [vmem:[%s5 + $0x730] sm:$0xff]
  %v4165 = vld [vmem:[%s5 + $0x738] sm:$0xff]
  %v4166 = vld [vmem:[%s5 + $0x740] sm:$0xff]
  %v4167 = vld [vmem:[%s5 + $0x748] sm:$0xff]
  %v4168 = vld [vmem:[%s5 + $0x750] sm:$0xff]
  %v4169 = vld [vmem:[%s5 + $0x758] sm:$0xff]
  %v4170 = vld [vmem:[%s5 + $0x760] sm:$0xff]
  %v4171 = vld [vmem:[%s5 + $0x768] sm:$0xff]
  %v4172 = vld [vmem:[%s5 + $0x770] sm:$0xff]
  %v4173 = vld [vmem:[%s5 + $0x778] sm:$0xff]
  %v4174 = vld [vmem:[%s5 + $0x780] sm:$0xff]
  %v4175 = vld [vmem:[%s5 + $0x788] sm:$0xff]
  %v4176 = vld [vmem:[%s5 + $0x790] sm:$0xff]
  %v4177 = vld [vmem:[%s5 + $0x798] sm:$0xff]
  %v4178 = vld [vmem:[%s5 + $0x7a0] sm:$0xff]
  %v4179 = vld [vmem:[%s5 + $0x7a8] sm:$0xff]
  %v4180 = vld [vmem:[%s5 + $0x7b0] sm:$0xff]
  %v4181 = vld [vmem:[%s5 + $0x7b8] sm:$0xff]
  %v4182 = vld [vmem:[%s5 + $0x7c0] sm:$0xff]
  %v4183 = vld [vmem:[%s5 + $0x7c8] sm:$0xff]
  %v4184 = vld [vmem:[%s5 + $0x7d0] sm:$0xff]
  %v4185 = vld [vmem:[%s5 + $0x7d8] sm:$0xff]
  %v4186 = vld [vmem:[%s5 + $0x7e0] sm:$0xff]
  %v4187 = vld [vmem:[%s5 + $0x7e8] sm:$0xff]
  %v4188 = vld [vmem:[%s5 + $0x7f0] sm:$0xff]
  %v4189 = vld [vmem:[%s5 + $0x7f8] sm:$0xff]
  %v4190 = vld [vmem:[%s5 + $0x800] sm:$0xff]
  %v4191 = vld [vmem:[%s5 + $0x808] sm:$0xff]
  %v4192 = vld [vmem:[%s5 + $0x810] sm:$0xff]
  %v4193 = vld [vmem:[%s5 + $0x818] sm:$0xff]
  %v4194 = vld [vmem:[%s5 + $0x820] sm:$0xff]
  %v4195 = vld [vmem:[%s5 + $0x828] sm:$0xff]
  %v4196 = vld [vmem:[%s5 + $0x830] sm:$0xff]
  %v4197 = vld [vmem:[%s5 + $0x838] sm:$0xff]
  %v4198 = vld [vmem:[%s5 + $0x840] sm:$0xff]
  %v4199 = vld [vmem:[%s5 + $0x848] sm:$0xff]
  %v4200 = vld [vmem:[%s5 + $0x850] sm:$0xff]
  %v4201 = vld [vmem:[%s5 + $0x858] sm:$0xff]
  %v4202 = vld [vmem:[%s5 + $0x860] sm:$0xff]
  %v4203 = vld [vmem:[%s5 + $0x868] sm:$0xff]
  %v4204 = vld [vmem:[%s5 + $0x870] sm:$0xff]
  %v4205 = vld [vmem:[%s5 + $0x878] sm:$0xff]
  %v4206 = vld [vmem:[%s5 + $0x880] sm:$0xff]
  %v4207 = vld [vmem:[%s5 + $0x888] sm:$0xff]
  %v4208 = vld [vmem:[%s5 + $0x890] sm:$0xff]
  %v4209 = vld [vmem:[%s5 + $0x898] sm:$0xff]
  %v4210 = vld [vmem:[%s5 + $0x8a0] sm:$0xff]
  %v4211 = vld [vmem:[%s5 + $0x8a8] sm:$0xff]
  %v4212 = vld [vmem:[%s5 + $0x8b0] sm:$0xff]
  %v4213 = vld [vmem:[%s5 + $0x8b8] sm:$0xff]
  %v4214 = vld [vmem:[%s5 + $0x8c0] sm:$0xff]
  %v4215 = vld [vmem:[%s5 + $0x8c8] sm:$0xff]
  %v4216 = vld [vmem:[%s5 + $0x8d0] sm:$0xff]
  %v4217 = vld [vmem:[%s5 + $0x8d8] sm:$0xff]
  %v4218 = vld [vmem:[%s5 + $0x8e0] sm:$0xff]
  %v4219 = vld [vmem:[%s5 + $0x8e8] sm:$0xff]
  %v4220 = vld [vmem:[%s5 + $0x8f0] sm:$0xff]
  %v4221 = vld [vmem:[%s5 + $0x8f8] sm:$0xff]
  %s4222 = scalar_lea.vmem %s6, 4
  %v4223 = vld [vmem:[%s4222] ss:$8 sm:$0xf]
  %v4224 = vld [vmem:[%s4222] ss:$8 sm:$0x30]
  %v4225 = vor.u32 %v4223, %v4224
  %v4227 = vlaneseq
  %v4228 = vshrl.u32 %v4227, 7
  %v4229 = vsub.s32 0, %v4228
  %v4230 = vrot.slane %v4225, %v4229
  %v4231 = vlaneseq
  %v4232 = vshrl.u32 %v4231, 7
  %v4233 = vsub.s32 1, %v4232
  %v4234 = vrot.slane %v4225, %v4233
  %v4235 = vlaneseq
  %v4236 = vshrl.u32 %v4235, 7
  %v4237 = vsub.s32 2, %v4236
  %v4238 = vrot.slane %v4225, %v4237
  %v4239 = vlaneseq
  %v4240 = vshrl.u32 %v4239, 7
  %v4241 = vsub.s32 3, %v4240
  %v4242 = vrot.slane %v4225, %v4241
  %v4243 = vlaneseq
  %v4244 = vshrl.u32 %v4243, 7
  %v4245 = vsub.s32 4, %v4244
  %v4246 = vrot.slane %v4225, %v4245
  %v4247 = vlaneseq
  %v4248 = vshrl.u32 %v4247, 7
  %v4249 = vsub.s32 5, %v4248
  %v4250 = vrot.slane %v4225, %v4249
  %v4545 = vunpack.c.l.b16 %v3934
  %v4546 = vunpack.c.h.b16 %v3934
  %v4547 = vunpack.c.l.b16 %v3935
  %v4548 = vunpack.c.h.b16 %v3935
  %v4549 = vunpack.c.l.b16 %v3936
  %v4550 = vunpack.c.h.b16 %v3936
  %v4551 = vunpack.c.l.b16 %v3937
  %v4552 = vunpack.c.h.b16 %v3937
  %v4553 = vunpack.c.l.b16 %v3938
  %v4554 = vunpack.c.h.b16 %v3938
  %v4555 = vunpack.c.l.b16 %v3939
  %v4556 = vunpack.c.h.b16 %v3939
  %v4557 = vunpack.c.l.b16 %v3940
  %v4558 = vunpack.c.h.b16 %v3940
  %v4559 = vunpack.c.l.b16 %v3941
  %v4560 = vunpack.c.h.b16 %v3941
  %v4561 = vunpack.c.l.b16 %v3942
  %v4562 = vunpack.c.h.b16 %v3942
  %v4563 = vunpack.c.l.b16 %v3943
  %v4564 = vunpack.c.h.b16 %v3943
  %v4565 = vunpack.c.l.b16 %v3944
  %v4566 = vunpack.c.h.b16 %v3944
  %v4567 = vunpack.c.l.b16 %v3945
  %v4568 = vunpack.c.h.b16 %v3945
  %v4569 = vunpack.c.l.b16 %v3946
  %v4570 = vunpack.c.h.b16 %v3946
  %v4571 = vunpack.c.l.b16 %v3947
  %v4572 = vunpack.c.h.b16 %v3947
  %v4573 = vunpack.c.l.b16 %v3948
  %v4574 = vunpack.c.h.b16 %v3948
  %v4575 = vunpack.c.l.b16 %v3949
  %v4576 = vunpack.c.h.b16 %v3949
  %v4577 = vunpack.c.l.b16 %v3950
  %v4578 = vunpack.c.h.b16 %v3950
  %v4579 = vunpack.c.l.b16 %v3951
  %v4580 = vunpack.c.h.b16 %v3951
  %v4581 = vunpack.c.l.b16 %v3952
  %v4582 = vunpack.c.h.b16 %v3952
  %v4583 = vunpack.c.l.b16 %v3953
  %v4584 = vunpack.c.h.b16 %v3953
  %v4585 = vunpack.c.l.b16 %v3954
  %v4586 = vunpack.c.h.b16 %v3954
  %v4587 = vunpack.c.l.b16 %v3955
  %v4588 = vunpack.c.h.b16 %v3955
  %v4589 = vunpack.c.l.b16 %v3956
  %v4590 = vunpack.c.h.b16 %v3956
  %v4591 = vunpack.c.l.b16 %v3957
  %v4592 = vunpack.c.h.b16 %v3957
  %v4593 = vunpack.c.l.b16 %v3958
  %v4594 = vunpack.c.h.b16 %v3958
  %v4595 = vunpack.c.l.b16 %v3959
  %v4596 = vunpack.c.h.b16 %v3959
  %v4597 = vunpack.c.l.b16 %v3960
  %v4598 = vunpack.c.h.b16 %v3960
  %v4599 = vunpack.c.l.b16 %v3961
  %v4600 = vunpack.c.h.b16 %v3961
  %v4601 = vunpack.c.l.b16 %v3962
  %v4602 = vunpack.c.h.b16 %v3962
  %v4603 = vunpack.c.l.b16 %v3963
  %v4604 = vunpack.c.h.b16 %v3963
  %v4605 = vunpack.c.l.b16 %v3964
  %v4606 = vunpack.c.h.b16 %v3964
  %v4607 = vunpack.c.l.b16 %v3965
  %v4608 = vunpack.c.h.b16 %v3965
  %v4609 = vunpack.c.l.b16 %v3966
  %v4610 = vunpack.c.h.b16 %v3966
  %v4611 = vunpack.c.l.b16 %v3967
  %v4612 = vunpack.c.h.b16 %v3967
  %v4613 = vunpack.c.l.b16 %v3968
  %v4614 = vunpack.c.h.b16 %v3968
  %v4615 = vunpack.c.l.b16 %v3969
  %v4616 = vunpack.c.h.b16 %v3969
  %v4617 = vunpack.c.l.b16 %v3970
  %v4618 = vunpack.c.h.b16 %v3970
  %v4619 = vunpack.c.l.b16 %v3971
  %v4620 = vunpack.c.h.b16 %v3971
  %v4621 = vunpack.c.l.b16 %v3972
  %v4622 = vunpack.c.h.b16 %v3972
  %v4623 = vunpack.c.l.b16 %v3973
  %v4624 = vunpack.c.h.b16 %v3973
  %v4625 = vunpack.c.l.b16 %v3974
  %v4626 = vunpack.c.h.b16 %v3974
  %v4627 = vunpack.c.l.b16 %v3975
  %v4628 = vunpack.c.h.b16 %v3975
  %v4629 = vunpack.c.l.b16 %v3976
  %v4630 = vunpack.c.h.b16 %v3976
  %v4631 = vunpack.c.l.b16 %v3977
  %v4632 = vunpack.c.h.b16 %v3977
  %v4633 = vunpack.c.l.b16 %v3978
  %v4634 = vunpack.c.h.b16 %v3978
  %v4635 = vunpack.c.l.b16 %v3979
  %v4636 = vunpack.c.h.b16 %v3979
  %v4637 = vunpack.c.l.b16 %v3980
  %v4638 = vunpack.c.h.b16 %v3980
  %v4639 = vunpack.c.l.b16 %v3981
  %v4640 = vunpack.c.h.b16 %v3981
  %v4641 = vunpack.c.l.b16 %v3982
  %v4642 = vunpack.c.h.b16 %v3982
  %v4643 = vunpack.c.l.b16 %v3983
  %v4644 = vunpack.c.h.b16 %v3983
  %v4645 = vunpack.c.l.b16 %v3984
  %v4646 = vunpack.c.h.b16 %v3984
  %v4647 = vunpack.c.l.b16 %v3985
  %v4648 = vunpack.c.h.b16 %v3985
  %v4649 = vunpack.c.l.b16 %v3986
  %v4650 = vunpack.c.h.b16 %v3986
  %v4651 = vunpack.c.l.b16 %v3987
  %v4652 = vunpack.c.h.b16 %v3987
  %v4653 = vunpack.c.l.b16 %v3988
  %v4654 = vunpack.c.h.b16 %v3988
  %v4655 = vunpack.c.l.b16 %v3989
  %v4656 = vunpack.c.h.b16 %v3989
  %v4657 = vunpack.c.l.b16 %v3990
  %v4658 = vunpack.c.h.b16 %v3990
  %v4659 = vunpack.c.l.b16 %v3991
  %v4660 = vunpack.c.h.b16 %v3991
  %v4661 = vunpack.c.l.b16 %v3992
  %v4662 = vunpack.c.h.b16 %v3992
  %v4663 = vunpack.c.l.b16 %v3993
  %v4664 = vunpack.c.h.b16 %v3993
  %v4665 = vunpack.c.l.b16 %v3994
  %v4666 = vunpack.c.h.b16 %v3994
  %v4667 = vunpack.c.l.b16 %v3995
  %v4668 = vunpack.c.h.b16 %v3995
  %v4669 = vunpack.c.l.b16 %v3996
  %v4670 = vunpack.c.h.b16 %v3996
  %v4671 = vunpack.c.l.b16 %v3997
  %v4672 = vunpack.c.h.b16 %v3997
  %v4673 = vunpack.c.l.b16 %v3998
  %v4674 = vunpack.c.h.b16 %v3998
  %v4675 = vunpack.c.l.b16 %v3999
  %v4676 = vunpack.c.h.b16 %v3999
  %v4677 = vunpack.c.l.b16 %v4000
  %v4678 = vunpack.c.h.b16 %v4000
  %v4679 = vunpack.c.l.b16 %v4001
  %v4680 = vunpack.c.h.b16 %v4001
  %v4681 = vunpack.c.l.b16 %v4002
  %v4682 = vunpack.c.h.b16 %v4002
  %v4683 = vunpack.c.l.b16 %v4003
  %v4684 = vunpack.c.h.b16 %v4003
  %v4685 = vunpack.c.l.b16 %v4004
  %v4686 = vunpack.c.h.b16 %v4004
  %v4687 = vunpack.c.l.b16 %v4005
  %v4688 = vunpack.c.h.b16 %v4005
  %v4689 = vunpack.c.l.b16 %v4006
  %v4690 = vunpack.c.h.b16 %v4006
  %v4691 = vunpack.c.l.b16 %v4007
  %v4692 = vunpack.c.h.b16 %v4007
  %v4693 = vunpack.c.l.b16 %v4008
  %v4694 = vunpack.c.h.b16 %v4008
  %v4695 = vunpack.c.l.b16 %v4009
  %v4696 = vunpack.c.h.b16 %v4009
  %v4697 = vunpack.c.l.b16 %v4010
  %v4698 = vunpack.c.h.b16 %v4010
  %v4699 = vunpack.c.l.b16 %v4011
  %v4700 = vunpack.c.h.b16 %v4011
  %v4701 = vunpack.c.l.b16 %v4012
  %v4702 = vunpack.c.h.b16 %v4012
  %v4703 = vunpack.c.l.b16 %v4013
  %v4704 = vunpack.c.h.b16 %v4013
  %v4705 = vunpack.c.l.b16 %v4014
  %v4706 = vunpack.c.h.b16 %v4014
  %v4707 = vunpack.c.l.b16 %v4015
  %v4708 = vunpack.c.h.b16 %v4015
  %v4709 = vunpack.c.l.b16 %v4016
  %v4710 = vunpack.c.h.b16 %v4016
  %v4711 = vunpack.c.l.b16 %v4017
  %v4712 = vunpack.c.h.b16 %v4017
  %v4713 = vunpack.c.l.b16 %v4018
  %v4714 = vunpack.c.h.b16 %v4018
  %v4715 = vunpack.c.l.b16 %v4019
  %v4716 = vunpack.c.h.b16 %v4019
  %v4717 = vunpack.c.l.b16 %v4020
  %v4718 = vunpack.c.h.b16 %v4020
  %v4719 = vunpack.c.l.b16 %v4021
  %v4720 = vunpack.c.h.b16 %v4021
  %v4721 = vunpack.c.l.b16 %v4022
  %v4722 = vunpack.c.h.b16 %v4022
  %v4723 = vunpack.c.l.b16 %v4023
  %v4724 = vunpack.c.h.b16 %v4023
  %v4725 = vunpack.c.l.b16 %v4024
  %v4726 = vunpack.c.h.b16 %v4024
  %v4727 = vunpack.c.l.b16 %v4025
  %v4728 = vunpack.c.h.b16 %v4025
  %v4729 = vunpack.c.l.b16 %v4026
  %v4730 = vunpack.c.h.b16 %v4026
  %v4731 = vunpack.c.l.b16 %v4027
  %v4732 = vunpack.c.h.b16 %v4027
  %v4733 = vunpack.c.l.b16 %v4028
  %v4734 = vunpack.c.h.b16 %v4028
  %v4735 = vunpack.c.l.b16 %v4029
  %v4736 = vunpack.c.h.b16 %v4029
  %v4737 = vunpack.c.l.b16 %v4030
  %v4738 = vunpack.c.h.b16 %v4030
  %v4739 = vunpack.c.l.b16 %v4031
  %v4740 = vunpack.c.h.b16 %v4031
  %v4741 = vunpack.c.l.b16 %v4032
  %v4742 = vunpack.c.h.b16 %v4032
  %v4743 = vunpack.c.l.b16 %v4033
  %v4744 = vunpack.c.h.b16 %v4033
  %v4745 = vunpack.c.l.b16 %v4034
  %v4746 = vunpack.c.h.b16 %v4034
  %v4747 = vunpack.c.l.b16 %v4035
  %v4748 = vunpack.c.h.b16 %v4035
  %v4749 = vunpack.c.l.b16 %v4036
  %v4750 = vunpack.c.h.b16 %v4036
  %v4751 = vunpack.c.l.b16 %v4037
  %v4752 = vunpack.c.h.b16 %v4037
  %v4753 = vunpack.c.l.b16 %v4038
  %v4754 = vunpack.c.h.b16 %v4038
  %v4755 = vunpack.c.l.b16 %v4039
  %v4756 = vunpack.c.h.b16 %v4039
  %v4757 = vunpack.c.l.b16 %v4040
  %v4758 = vunpack.c.h.b16 %v4040
  %v4759 = vunpack.c.l.b16 %v4041
  %v4760 = vunpack.c.h.b16 %v4041
  %v4761 = vunpack.c.l.b16 %v4042
  %v4762 = vunpack.c.h.b16 %v4042
  %v4763 = vunpack.c.l.b16 %v4043
  %v4764 = vunpack.c.h.b16 %v4043
  %v4765 = vunpack.c.l.b16 %v4044
  %v4766 = vunpack.c.h.b16 %v4044
  %v4767 = vunpack.c.l.b16 %v4045
  %v4768 = vunpack.c.h.b16 %v4045
  %v4769 = vunpack.c.l.b16 %v4046
  %v4770 = vunpack.c.h.b16 %v4046
  %v4771 = vunpack.c.l.b16 %v4047
  %v4772 = vunpack.c.h.b16 %v4047
  %v4773 = vunpack.c.l.b16 %v4048
  %v4774 = vunpack.c.h.b16 %v4048
  %v4775 = vunpack.c.l.b16 %v4049
  %v4776 = vunpack.c.h.b16 %v4049
  %v4777 = vunpack.c.l.b16 %v4050
  %v4778 = vunpack.c.h.b16 %v4050
  %v4779 = vunpack.c.l.b16 %v4051
  %v4780 = vunpack.c.h.b16 %v4051
  %v4781 = vunpack.c.l.b16 %v4052
  %v4782 = vunpack.c.h.b16 %v4052
  %v4783 = vunpack.c.l.b16 %v4053
  %v4784 = vunpack.c.h.b16 %v4053
  %v4785 = vunpack.c.l.b16 %v4054
  %v4786 = vunpack.c.h.b16 %v4054
  %v4787 = vunpack.c.l.b16 %v4055
  %v4788 = vunpack.c.h.b16 %v4055
  %v4789 = vunpack.c.l.b16 %v4056
  %v4790 = vunpack.c.h.b16 %v4056
  %v4791 = vunpack.c.l.b16 %v4057
  %v4792 = vunpack.c.h.b16 %v4057
  %v4793 = vunpack.c.l.b16 %v4058
  %v4794 = vunpack.c.h.b16 %v4058
  %v4795 = vunpack.c.l.b16 %v4059
  %v4796 = vunpack.c.h.b16 %v4059
  %v4797 = vunpack.c.l.b16 %v4060
  %v4798 = vunpack.c.h.b16 %v4060
  %v4799 = vunpack.c.l.b16 %v4061
  %v4800 = vunpack.c.h.b16 %v4061
  %v4801 = vunpack.c.l.b16 %v4062
  %v4802 = vunpack.c.h.b16 %v4062
  %v4803 = vunpack.c.l.b16 %v4063
  %v4804 = vunpack.c.h.b16 %v4063
  %v4805 = vunpack.c.l.b16 %v4064
  %v4806 = vunpack.c.h.b16 %v4064
  %v4807 = vunpack.c.l.b16 %v4065
  %v4808 = vunpack.c.h.b16 %v4065
  %v4809 = vunpack.c.l.b16 %v4066
  %v4810 = vunpack.c.h.b16 %v4066
  %v4811 = vunpack.c.l.b16 %v4067
  %v4812 = vunpack.c.h.b16 %v4067
  %v4813 = vunpack.c.l.b16 %v4068
  %v4814 = vunpack.c.h.b16 %v4068
  %v4815 = vunpack.c.l.b16 %v4069
  %v4816 = vunpack.c.h.b16 %v4069
  %v4817 = vunpack.c.l.b16 %v4070
  %v4818 = vunpack.c.h.b16 %v4070
  %v4819 = vunpack.c.l.b16 %v4071
  %v4820 = vunpack.c.h.b16 %v4071
  %v4821 = vunpack.c.l.b16 %v4072
  %v4822 = vunpack.c.h.b16 %v4072
  %v4823 = vunpack.c.l.b16 %v4073
  %v4824 = vunpack.c.h.b16 %v4073
  %v4825 = vunpack.c.l.b16 %v4074
  %v4826 = vunpack.c.h.b16 %v4074
  %v4827 = vunpack.c.l.b16 %v4075
  %v4828 = vunpack.c.h.b16 %v4075
  %v4829 = vunpack.c.l.b16 %v4076
  %v4830 = vunpack.c.h.b16 %v4076
  %v4831 = vunpack.c.l.b16 %v4077
  %v4832 = vunpack.c.h.b16 %v4077
  %v4833 = vunpack.c.l.b16 %v4078
  %v4834 = vunpack.c.h.b16 %v4078
  %v4835 = vunpack.c.l.b16 %v4079
  %v4836 = vunpack.c.h.b16 %v4079
  %v4837 = vunpack.c.l.b16 %v4080
  %v4838 = vunpack.c.h.b16 %v4080
  %v4839 = vunpack.c.l.b16 %v4081
  %v4840 = vunpack.c.h.b16 %v4081
  %v4841 = vunpack.c.l.b16 %v4082
  %v4842 = vunpack.c.h.b16 %v4082
  %v4843 = vunpack.c.l.b16 %v4083
  %v4844 = vunpack.c.h.b16 %v4083
  %v4845 = vunpack.c.l.b16 %v4084
  %v4846 = vunpack.c.h.b16 %v4084
  %v4847 = vunpack.c.l.b16 %v4085
  %v4848 = vunpack.c.h.b16 %v4085
  %v4849 = vunpack.c.l.b16 %v4086
  %v4850 = vunpack.c.h.b16 %v4086
  %v4851 = vunpack.c.l.b16 %v4087
  %v4852 = vunpack.c.h.b16 %v4087
  %v4853 = vunpack.c.l.b16 %v4088
  %v4854 = vunpack.c.h.b16 %v4088
  %v4855 = vunpack.c.l.b16 %v4089
  %v4856 = vunpack.c.h.b16 %v4089
  %v4857 = vunpack.c.l.b16 %v4090
  %v4858 = vunpack.c.h.b16 %v4090
  %v4859 = vunpack.c.l.b16 %v4091
  %v4860 = vunpack.c.h.b16 %v4091
  %v4861 = vunpack.c.l.b16 %v4092
  %v4862 = vunpack.c.h.b16 %v4092
  %v4863 = vunpack.c.l.b16 %v4093
  %v4864 = vunpack.c.h.b16 %v4093
  %v4865 = vunpack.c.l.b16 %v4094
  %v4866 = vunpack.c.h.b16 %v4094
  %v4867 = vunpack.c.l.b16 %v4095
  %v4868 = vunpack.c.h.b16 %v4095
  %v4869 = vunpack.c.l.b16 %v4096
  %v4870 = vunpack.c.h.b16 %v4096
  %v4871 = vunpack.c.l.b16 %v4097
  %v4872 = vunpack.c.h.b16 %v4097
  %v4873 = vunpack.c.l.b16 %v4098
  %v4874 = vunpack.c.h.b16 %v4098
  %v4875 = vunpack.c.l.b16 %v4099
  %v4876 = vunpack.c.h.b16 %v4099
  %v4877 = vunpack.c.l.b16 %v4100
  %v4878 = vunpack.c.h.b16 %v4100
  %v4879 = vunpack.c.l.b16 %v4101
  %v4880 = vunpack.c.h.b16 %v4101
  %v4881 = vunpack.c.l.b16 %v4102
  %v4882 = vunpack.c.h.b16 %v4102
  %v4883 = vunpack.c.l.b16 %v4103
  %v4884 = vunpack.c.h.b16 %v4103
  %v4885 = vunpack.c.l.b16 %v4104
  %v4886 = vunpack.c.h.b16 %v4104
  %v4887 = vunpack.c.l.b16 %v4105
  %v4888 = vunpack.c.h.b16 %v4105
  %v4889 = vunpack.c.l.b16 %v4106
  %v4890 = vunpack.c.h.b16 %v4106
  %v4891 = vunpack.c.l.b16 %v4107
  %v4892 = vunpack.c.h.b16 %v4107
  %v4893 = vunpack.c.l.b16 %v4108
  %v4894 = vunpack.c.h.b16 %v4108
  %v4895 = vunpack.c.l.b16 %v4109
  %v4896 = vunpack.c.h.b16 %v4109
  %v4897 = vunpack.c.l.b16 %v4110
  %v4898 = vunpack.c.h.b16 %v4110
  %v4899 = vunpack.c.l.b16 %v4111
  %v4900 = vunpack.c.h.b16 %v4111
  %v4901 = vunpack.c.l.b16 %v4112
  %v4902 = vunpack.c.h.b16 %v4112
  %v4903 = vunpack.c.l.b16 %v4113
  %v4904 = vunpack.c.h.b16 %v4113
  %v4905 = vunpack.c.l.b16 %v4114
  %v4906 = vunpack.c.h.b16 %v4114
  %v4907 = vunpack.c.l.b16 %v4115
  %v4908 = vunpack.c.h.b16 %v4115
  %v4909 = vunpack.c.l.b16 %v4116
  %v4910 = vunpack.c.h.b16 %v4116
  %v4911 = vunpack.c.l.b16 %v4117
  %v4912 = vunpack.c.h.b16 %v4117
  %v4913 = vunpack.c.l.b16 %v4118
  %v4914 = vunpack.c.h.b16 %v4118
  %v4915 = vunpack.c.l.b16 %v4119
  %v4916 = vunpack.c.h.b16 %v4119
  %v4917 = vunpack.c.l.b16 %v4120
  %v4918 = vunpack.c.h.b16 %v4120
  %v4919 = vunpack.c.l.b16 %v4121
  %v4920 = vunpack.c.h.b16 %v4121
  %v4921 = vunpack.c.l.b16 %v4122
  %v4922 = vunpack.c.h.b16 %v4122
  %v4923 = vunpack.c.l.b16 %v4123
  %v4924 = vunpack.c.h.b16 %v4123
  %v4925 = vunpack.c.l.b16 %v4124
  %v4926 = vunpack.c.h.b16 %v4124
  %v4927 = vunpack.c.l.b16 %v4125
  %v4928 = vunpack.c.h.b16 %v4125
  %v4929 = vunpack.c.l.b16 %v4126
  %v4930 = vunpack.c.h.b16 %v4126
  %v4931 = vunpack.c.l.b16 %v4127
  %v4932 = vunpack.c.h.b16 %v4127
  %v4933 = vunpack.c.l.b16 %v4128
  %v4934 = vunpack.c.h.b16 %v4128
  %v4935 = vunpack.c.l.b16 %v4129
  %v4936 = vunpack.c.h.b16 %v4129
  %v4937 = vunpack.c.l.b16 %v4130
  %v4938 = vunpack.c.h.b16 %v4130
  %v4939 = vunpack.c.l.b16 %v4131
  %v4940 = vunpack.c.h.b16 %v4131
  %v4941 = vunpack.c.l.b16 %v4132
  %v4942 = vunpack.c.h.b16 %v4132
  %v4943 = vunpack.c.l.b16 %v4133
  %v4944 = vunpack.c.h.b16 %v4133
  %v4945 = vunpack.c.l.b16 %v4134
  %v4946 = vunpack.c.h.b16 %v4134
  %v4947 = vunpack.c.l.b16 %v4135
  %v4948 = vunpack.c.h.b16 %v4135
  %v4949 = vunpack.c.l.b16 %v4136
  %v4950 = vunpack.c.h.b16 %v4136
  %v4951 = vunpack.c.l.b16 %v4137
  %v4952 = vunpack.c.h.b16 %v4137
  %v4953 = vunpack.c.l.b16 %v4138
  %v4954 = vunpack.c.h.b16 %v4138
  %v4955 = vunpack.c.l.b16 %v4139
  %v4956 = vunpack.c.h.b16 %v4139
  %v4957 = vunpack.c.l.b16 %v4140
  %v4958 = vunpack.c.h.b16 %v4140
  %v4959 = vunpack.c.l.b16 %v4141
  %v4960 = vunpack.c.h.b16 %v4141
  %v4961 = vunpack.c.l.b16 %v4142
  %v4962 = vunpack.c.h.b16 %v4142
  %v4963 = vunpack.c.l.b16 %v4143
  %v4964 = vunpack.c.h.b16 %v4143
  %v4965 = vunpack.c.l.b16 %v4144
  %v4966 = vunpack.c.h.b16 %v4144
  %v4967 = vunpack.c.l.b16 %v4145
  %v4968 = vunpack.c.h.b16 %v4145
  %v4969 = vunpack.c.l.b16 %v4146
  %v4970 = vunpack.c.h.b16 %v4146
  %v4971 = vunpack.c.l.b16 %v4147
  %v4972 = vunpack.c.h.b16 %v4147
  %v4973 = vunpack.c.l.b16 %v4148
  %v4974 = vunpack.c.h.b16 %v4148
  %v4975 = vunpack.c.l.b16 %v4149
  %v4976 = vunpack.c.h.b16 %v4149
  %v4977 = vunpack.c.l.b16 %v4150
  %v4978 = vunpack.c.h.b16 %v4150
  %v4979 = vunpack.c.l.b16 %v4151
  %v4980 = vunpack.c.h.b16 %v4151
  %v4981 = vunpack.c.l.b16 %v4152
  %v4982 = vunpack.c.h.b16 %v4152
  %v4983 = vunpack.c.l.b16 %v4153
  %v4984 = vunpack.c.h.b16 %v4153
  %v4985 = vunpack.c.l.b16 %v4154
  %v4986 = vunpack.c.h.b16 %v4154
  %v4987 = vunpack.c.l.b16 %v4155
  %v4988 = vunpack.c.h.b16 %v4155
  %v4989 = vunpack.c.l.b16 %v4156
  %v4990 = vunpack.c.h.b16 %v4156
  %v4991 = vunpack.c.l.b16 %v4157
  %v4992 = vunpack.c.h.b16 %v4157
  %v4993 = vunpack.c.l.b16 %v4158
  %v4994 = vunpack.c.h.b16 %v4158
  %v4995 = vunpack.c.l.b16 %v4159
  %v4996 = vunpack.c.h.b16 %v4159
  %v4997 = vunpack.c.l.b16 %v4160
  %v4998 = vunpack.c.h.b16 %v4160
  %v4999 = vunpack.c.l.b16 %v4161
  %v5000 = vunpack.c.h.b16 %v4161
  %v5001 = vunpack.c.l.b16 %v4162
  %v5002 = vunpack.c.h.b16 %v4162
  %v5003 = vunpack.c.l.b16 %v4163
  %v5004 = vunpack.c.h.b16 %v4163
  %v5005 = vunpack.c.l.b16 %v4164
  %v5006 = vunpack.c.h.b16 %v4164
  %v5007 = vunpack.c.l.b16 %v4165
  %v5008 = vunpack.c.h.b16 %v4165
  %v5009 = vunpack.c.l.b16 %v4166
  %v5010 = vunpack.c.h.b16 %v4166
  %v5011 = vunpack.c.l.b16 %v4167
  %v5012 = vunpack.c.h.b16 %v4167
  %v5013 = vunpack.c.l.b16 %v4168
  %v5014 = vunpack.c.h.b16 %v4168
  %v5015 = vunpack.c.l.b16 %v4169
  %v5016 = vunpack.c.h.b16 %v4169
  %v5017 = vunpack.c.l.b16 %v4170
  %v5018 = vunpack.c.h.b16 %v4170
  %v5019 = vunpack.c.l.b16 %v4171
  %v5020 = vunpack.c.h.b16 %v4171
  %v5021 = vunpack.c.l.b16 %v4172
  %v5022 = vunpack.c.h.b16 %v4172
  %v5023 = vunpack.c.l.b16 %v4173
  %v5024 = vunpack.c.h.b16 %v4173
  %v5025 = vunpack.c.l.b16 %v4174
  %v5026 = vunpack.c.h.b16 %v4174
  %v5027 = vunpack.c.l.b16 %v4175
  %v5028 = vunpack.c.h.b16 %v4175
  %v5029 = vunpack.c.l.b16 %v4176
  %v5030 = vunpack.c.h.b16 %v4176
  %v5031 = vunpack.c.l.b16 %v4177
  %v5032 = vunpack.c.h.b16 %v4177
  %v5033 = vunpack.c.l.b16 %v4178
  %v5034 = vunpack.c.h.b16 %v4178
  %v5035 = vunpack.c.l.b16 %v4179
  %v5036 = vunpack.c.h.b16 %v4179
  %v5037 = vunpack.c.l.b16 %v4180
  %v5038 = vunpack.c.h.b16 %v4180
  %v5039 = vunpack.c.l.b16 %v4181
  %v5040 = vunpack.c.h.b16 %v4181
  %v5041 = vunpack.c.l.b16 %v4182
  %v5042 = vunpack.c.h.b16 %v4182
  %v5043 = vunpack.c.l.b16 %v4183
  %v5044 = vunpack.c.h.b16 %v4183
  %v5045 = vunpack.c.l.b16 %v4184
  %v5046 = vunpack.c.h.b16 %v4184
  %v5047 = vunpack.c.l.b16 %v4185
  %v5048 = vunpack.c.h.b16 %v4185
  %v5049 = vunpack.c.l.b16 %v4186
  %v5050 = vunpack.c.h.b16 %v4186
  %v5051 = vunpack.c.l.b16 %v4187
  %v5052 = vunpack.c.h.b16 %v4187
  %v5053 = vunpack.c.l.b16 %v4188
  %v5054 = vunpack.c.h.b16 %v4188
  %v5055 = vunpack.c.l.b16 %v4189
  %v5056 = vunpack.c.h.b16 %v4189
  %v5057 = vunpack.c.l.b16 %v4190
  %v5058 = vunpack.c.h.b16 %v4190
  %v5059 = vunpack.c.l.b16 %v4191
  %v5060 = vunpack.c.h.b16 %v4191
  %v5061 = vunpack.c.l.b16 %v4192
  %v5062 = vunpack.c.h.b16 %v4192
  %v5063 = vunpack.c.l.b16 %v4193
  %v5064 = vunpack.c.h.b16 %v4193
  %v5065 = vunpack.c.l.b16 %v4194
  %v5066 = vunpack.c.h.b16 %v4194
  %v5067 = vunpack.c.l.b16 %v4195
  %v5068 = vunpack.c.h.b16 %v4195
  %v5069 = vunpack.c.l.b16 %v4196
  %v5070 = vunpack.c.h.b16 %v4196
  %v5071 = vunpack.c.l.b16 %v4197
  %v5072 = vunpack.c.h.b16 %v4197
  %v5073 = vunpack.c.l.b16 %v4198
  %v5074 = vunpack.c.h.b16 %v4198
  %v5075 = vunpack.c.l.b16 %v4199
  %v5076 = vunpack.c.h.b16 %v4199
  %v5077 = vunpack.c.l.b16 %v4200
  %v5078 = vunpack.c.h.b16 %v4200
  %v5079 = vunpack.c.l.b16 %v4201
  %v5080 = vunpack.c.h.b16 %v4201
  %v5081 = vunpack.c.l.b16 %v4202
  %v5082 = vunpack.c.h.b16 %v4202
  %v5083 = vunpack.c.l.b16 %v4203
  %v5084 = vunpack.c.h.b16 %v4203
  %v5085 = vunpack.c.l.b16 %v4204
  %v5086 = vunpack.c.h.b16 %v4204
  %v5087 = vunpack.c.l.b16 %v4205
  %v5088 = vunpack.c.h.b16 %v4205
  %v5089 = vunpack.c.l.b16 %v4206
  %v5090 = vunpack.c.h.b16 %v4206
  %v5091 = vunpack.c.l.b16 %v4207
  %v5092 = vunpack.c.h.b16 %v4207
  %v5093 = vunpack.c.l.b16 %v4208
  %v5094 = vunpack.c.h.b16 %v4208
  %v5095 = vunpack.c.l.b16 %v4209
  %v5096 = vunpack.c.h.b16 %v4209
  %v5097 = vunpack.c.l.b16 %v4210
  %v5098 = vunpack.c.h.b16 %v4210
  %v5099 = vunpack.c.l.b16 %v4211
  %v5100 = vunpack.c.h.b16 %v4211
  %v5101 = vunpack.c.l.b16 %v4212
  %v5102 = vunpack.c.h.b16 %v4212
  %v5103 = vunpack.c.l.b16 %v4213
  %v5104 = vunpack.c.h.b16 %v4213
  %v5105 = vunpack.c.l.b16 %v4214
  %v5106 = vunpack.c.h.b16 %v4214
  %v5107 = vunpack.c.l.b16 %v4215
  %v5108 = vunpack.c.h.b16 %v4215
  %v5109 = vunpack.c.l.b16 %v4216
  %v5110 = vunpack.c.h.b16 %v4216
  %v5111 = vunpack.c.l.b16 %v4217
  %v5112 = vunpack.c.h.b16 %v4217
  %v5113 = vunpack.c.l.b16 %v4218
  %v5114 = vunpack.c.h.b16 %v4218
  %v5115 = vunpack.c.l.b16 %v4219
  %v5116 = vunpack.c.h.b16 %v4219
  %v5117 = vunpack.c.l.b16 %v4220
  %v5118 = vunpack.c.h.b16 %v4220
  %v5119 = vunpack.c.l.b16 %v4221
  %v5120 = vunpack.c.h.b16 %v4221
  %v5121 = vpack.c.b16 %v4551, %v4545
  %v5122 = vpack.c.b16 %v4552, %v4546
  %v5123 = vpack.c.b16 %v4553, %v4547
  %v5124 = vpack.c.b16 %v4554, %v4548
  %v5125 = vpack.c.b16 %v4555, %v4549
  %v5126 = vpack.c.b16 %v4556, %v4550
  %v5127 = vpack.c.b16 %v4563, %v4557
  %v5128 = vpack.c.b16 %v4564, %v4558
  %v5129 = vpack.c.b16 %v4565, %v4559
  %v5130 = vpack.c.b16 %v4566, %v4560
  %v5131 = vpack.c.b16 %v4567, %v4561
  %v5132 = vpack.c.b16 %v4568, %v4562
  %v5133 = vpack.c.b16 %v4575, %v4569
  %v5134 = vpack.c.b16 %v4576, %v4570
  %v5135 = vpack.c.b16 %v4577, %v4571
  %v5136 = vpack.c.b16 %v4578, %v4572
  %v5137 = vpack.c.b16 %v4579, %v4573
  %v5138 = vpack.c.b16 %v4580, %v4574
  %v5139 = vpack.c.b16 %v4587, %v4581
  %v5140 = vpack.c.b16 %v4588, %v4582
  %v5141 = vpack.c.b16 %v4589, %v4583
  %v5142 = vpack.c.b16 %v4590, %v4584
  %v5143 = vpack.c.b16 %v4591, %v4585
  %v5144 = vpack.c.b16 %v4592, %v4586
  %v5145 = vpack.c.b16 %v4599, %v4593
  %v5146 = vpack.c.b16 %v4600, %v4594
  %v5147 = vpack.c.b16 %v4601, %v4595
  %v5148 = vpack.c.b16 %v4602, %v4596
  %v5149 = vpack.c.b16 %v4603, %v4597
  %v5150 = vpack.c.b16 %v4604, %v4598
  %v5151 = vpack.c.b16 %v4611, %v4605
  %v5152 = vpack.c.b16 %v4612, %v4606
  %v5153 = vpack.c.b16 %v4613, %v4607
  %v5154 = vpack.c.b16 %v4614, %v4608
  %v5155 = vpack.c.b16 %v4615, %v4609
  %v5156 = vpack.c.b16 %v4616, %v4610
  %v5157 = vpack.c.b16 %v4623, %v4617
  %v5158 = vpack.c.b16 %v4624, %v4618
  %v5159 = vpack.c.b16 %v4625, %v4619
  %v5160 = vpack.c.b16 %v4626, %v4620
  %v5161 = vpack.c.b16 %v4627, %v4621
  %v5162 = vpack.c.b16 %v4628, %v4622
  %v5163 = vpack.c.b16 %v4635, %v4629
  %v5164 = vpack.c.b16 %v4636, %v4630
  %v5165 = vpack.c.b16 %v4637, %v4631
  %v5166 = vpack.c.b16 %v4638, %v4632
  %v5167 = vpack.c.b16 %v4639, %v4633
  %v5168 = vpack.c.b16 %v4640, %v4634
  %v5169 = vpack.c.b16 %v4647, %v4641
  %v5170 = vpack.c.b16 %v4648, %v4642
  %v5171 = vpack.c.b16 %v4649, %v4643
  %v5172 = vpack.c.b16 %v4650, %v4644
  %v5173 = vpack.c.b16 %v4651, %v4645
  %v5174 = vpack.c.b16 %v4652, %v4646
  %v5175 = vpack.c.b16 %v4659, %v4653
  %v5176 = vpack.c.b16 %v4660, %v4654
  %v5177 = vpack.c.b16 %v4661, %v4655
  %v5178 = vpack.c.b16 %v4662, %v4656
  %v5179 = vpack.c.b16 %v4663, %v4657
  %v5180 = vpack.c.b16 %v4664, %v4658
  %v5181 = vpack.c.b16 %v4671, %v4665
  %v5182 = vpack.c.b16 %v4672, %v4666
  %v5183 = vpack.c.b16 %v4673, %v4667
  %v5184 = vpack.c.b16 %v4674, %v4668
  %v5185 = vpack.c.b16 %v4675, %v4669
  %v5186 = vpack.c.b16 %v4676, %v4670
  %v5187 = vpack.c.b16 %v4683, %v4677
  %v5188 = vpack.c.b16 %v4684, %v4678
  %v5189 = vpack.c.b16 %v4685, %v4679
  %v5190 = vpack.c.b16 %v4686, %v4680
  %v5191 = vpack.c.b16 %v4687, %v4681
  %v5192 = vpack.c.b16 %v4688, %v4682
  %v5193 = vpack.c.b16 %v4695, %v4689
  %v5194 = vpack.c.b16 %v4696, %v4690
  %v5195 = vpack.c.b16 %v4697, %v4691
  %v5196 = vpack.c.b16 %v4698, %v4692
  %v5197 = vpack.c.b16 %v4699, %v4693
  %v5198 = vpack.c.b16 %v4700, %v4694
  %v5199 = vpack.c.b16 %v4707, %v4701
  %v5200 = vpack.c.b16 %v4708, %v4702
  %v5201 = vpack.c.b16 %v4709, %v4703
  %v5202 = vpack.c.b16 %v4710, %v4704
  %v5203 = vpack.c.b16 %v4711, %v4705
  %v5204 = vpack.c.b16 %v4712, %v4706
  %v5205 = vpack.c.b16 %v4719, %v4713
  %v5206 = vpack.c.b16 %v4720, %v4714
  %v5207 = vpack.c.b16 %v4721, %v4715
  %v5208 = vpack.c.b16 %v4722, %v4716
  %v5209 = vpack.c.b16 %v4723, %v4717
  %v5210 = vpack.c.b16 %v4724, %v4718
  %v5211 = vpack.c.b16 %v4731, %v4725
  %v5212 = vpack.c.b16 %v4732, %v4726
  %v5213 = vpack.c.b16 %v4733, %v4727
  %v5214 = vpack.c.b16 %v4734, %v4728
  %v5215 = vpack.c.b16 %v4735, %v4729
  %v5216 = vpack.c.b16 %v4736, %v4730
  %v5217 = vpack.c.b16 %v4743, %v4737
  %v5218 = vpack.c.b16 %v4744, %v4738
  %v5219 = vpack.c.b16 %v4745, %v4739
  %v5220 = vpack.c.b16 %v4746, %v4740
  %v5221 = vpack.c.b16 %v4747, %v4741
  %v5222 = vpack.c.b16 %v4748, %v4742
  %v5223 = vpack.c.b16 %v4755, %v4749
  %v5224 = vpack.c.b16 %v4756, %v4750
  %v5225 = vpack.c.b16 %v4757, %v4751
  %v5226 = vpack.c.b16 %v4758, %v4752
  %v5227 = vpack.c.b16 %v4759, %v4753
  %v5228 = vpack.c.b16 %v4760, %v4754
  %v5229 = vpack.c.b16 %v4767, %v4761
  %v5230 = vpack.c.b16 %v4768, %v4762
  %v5231 = vpack.c.b16 %v4769, %v4763
  %v5232 = vpack.c.b16 %v4770, %v4764
  %v5233 = vpack.c.b16 %v4771, %v4765
  %v5234 = vpack.c.b16 %v4772, %v4766
  %v5235 = vpack.c.b16 %v4779, %v4773
  %v5236 = vpack.c.b16 %v4780, %v4774
  %v5237 = vpack.c.b16 %v4781, %v4775
  %v5238 = vpack.c.b16 %v4782, %v4776
  %v5239 = vpack.c.b16 %v4783, %v4777
  %v5240 = vpack.c.b16 %v4784, %v4778
  %v5241 = vpack.c.b16 %v4791, %v4785
  %v5242 = vpack.c.b16 %v4792, %v4786
  %v5243 = vpack.c.b16 %v4793, %v4787
  %v5244 = vpack.c.b16 %v4794, %v4788
  %v5245 = vpack.c.b16 %v4795, %v4789
  %v5246 = vpack.c.b16 %v4796, %v4790
  %v5247 = vpack.c.b16 %v4803, %v4797
  %v5248 = vpack.c.b16 %v4804, %v4798
  %v5249 = vpack.c.b16 %v4805, %v4799
  %v5250 = vpack.c.b16 %v4806, %v4800
  %v5251 = vpack.c.b16 %v4807, %v4801
  %v5252 = vpack.c.b16 %v4808, %v4802
  %v5253 = vpack.c.b16 %v4815, %v4809
  %v5254 = vpack.c.b16 %v4816, %v4810
  %v5255 = vpack.c.b16 %v4817, %v4811
  %v5256 = vpack.c.b16 %v4818, %v4812
  %v5257 = vpack.c.b16 %v4819, %v4813
  %v5258 = vpack.c.b16 %v4820, %v4814
  %v5259 = vpack.c.b16 %v4827, %v4821
  %v5260 = vpack.c.b16 %v4828, %v4822
  %v5261 = vpack.c.b16 %v4829, %v4823
  %v5262 = vpack.c.b16 %v4830, %v4824
  %v5263 = vpack.c.b16 %v4831, %v4825
  %v5264 = vpack.c.b16 %v4832, %v4826
  %v5265 = vpack.c.b16 %v4839, %v4833
  %v5266 = vpack.c.b16 %v4840, %v4834
  %v5267 = vpack.c.b16 %v4841, %v4835
  %v5268 = vpack.c.b16 %v4842, %v4836
  %v5269 = vpack.c.b16 %v4843, %v4837
  %v5270 = vpack.c.b16 %v4844, %v4838
  %v5271 = vpack.c.b16 %v4851, %v4845
  %v5272 = vpack.c.b16 %v4852, %v4846
  %v5273 = vpack.c.b16 %v4853, %v4847
  %v5274 = vpack.c.b16 %v4854, %v4848
  %v5275 = vpack.c.b16 %v4855, %v4849
  %v5276 = vpack.c.b16 %v4856, %v4850
  %v5277 = vpack.c.b16 %v4863, %v4857
  %v5278 = vpack.c.b16 %v4864, %v4858
  %v5279 = vpack.c.b16 %v4865, %v4859
  %v5280 = vpack.c.b16 %v4866, %v4860
  %v5281 = vpack.c.b16 %v4867, %v4861
  %v5282 = vpack.c.b16 %v4868, %v4862
  %v5283 = vpack.c.b16 %v4875, %v4869
  %v5284 = vpack.c.b16 %v4876, %v4870
  %v5285 = vpack.c.b16 %v4877, %v4871
  %v5286 = vpack.c.b16 %v4878, %v4872
  %v5287 = vpack.c.b16 %v4879, %v4873
  %v5288 = vpack.c.b16 %v4880, %v4874
  %v5289 = vpack.c.b16 %v4887, %v4881
  %v5290 = vpack.c.b16 %v4888, %v4882
  %v5291 = vpack.c.b16 %v4889, %v4883
  %v5292 = vpack.c.b16 %v4890, %v4884
  %v5293 = vpack.c.b16 %v4891, %v4885
  %v5294 = vpack.c.b16 %v4892, %v4886
  %v5295 = vpack.c.b16 %v4899, %v4893
  %v5296 = vpack.c.b16 %v4900, %v4894
  %v5297 = vpack.c.b16 %v4901, %v4895
  %v5298 = vpack.c.b16 %v4902, %v4896
  %v5299 = vpack.c.b16 %v4903, %v4897
  %v5300 = vpack.c.b16 %v4904, %v4898
  %v5301 = vpack.c.b16 %v4911, %v4905
  %v5302 = vpack.c.b16 %v4912, %v4906
  %v5303 = vpack.c.b16 %v4913, %v4907
  %v5304 = vpack.c.b16 %v4914, %v4908
  %v5305 = vpack.c.b16 %v4915, %v4909
  %v5306 = vpack.c.b16 %v4916, %v4910
  %v5307 = vpack.c.b16 %v4923, %v4917
  %v5308 = vpack.c.b16 %v4924, %v4918
  %v5309 = vpack.c.b16 %v4925, %v4919
  %v5310 = vpack.c.b16 %v4926, %v4920
  %v5311 = vpack.c.b16 %v4927, %v4921
  %v5312 = vpack.c.b16 %v4928, %v4922
  %v5313 = vpack.c.b16 %v4935, %v4929
  %v5314 = vpack.c.b16 %v4936, %v4930
  %v5315 = vpack.c.b16 %v4937, %v4931
  %v5316 = vpack.c.b16 %v4938, %v4932
  %v5317 = vpack.c.b16 %v4939, %v4933
  %v5318 = vpack.c.b16 %v4940, %v4934
  %v5319 = vpack.c.b16 %v4947, %v4941
  %v5320 = vpack.c.b16 %v4948, %v4942
  %v5321 = vpack.c.b16 %v4949, %v4943
  %v5322 = vpack.c.b16 %v4950, %v4944
  %v5323 = vpack.c.b16 %v4951, %v4945
  %v5324 = vpack.c.b16 %v4952, %v4946
  %v5325 = vpack.c.b16 %v4959, %v4953
  %v5326 = vpack.c.b16 %v4960, %v4954
  %v5327 = vpack.c.b16 %v4961, %v4955
  %v5328 = vpack.c.b16 %v4962, %v4956
  %v5329 = vpack.c.b16 %v4963, %v4957
  %v5330 = vpack.c.b16 %v4964, %v4958
  %v5331 = vpack.c.b16 %v4971, %v4965
  %v5332 = vpack.c.b16 %v4972, %v4966
  %v5333 = vpack.c.b16 %v4973, %v4967
  %v5334 = vpack.c.b16 %v4974, %v4968
  %v5335 = vpack.c.b16 %v4975, %v4969
  %v5336 = vpack.c.b16 %v4976, %v4970
  %v5337 = vpack.c.b16 %v4983, %v4977
  %v5338 = vpack.c.b16 %v4984, %v4978
  %v5339 = vpack.c.b16 %v4985, %v4979
  %v5340 = vpack.c.b16 %v4986, %v4980
  %v5341 = vpack.c.b16 %v4987, %v4981
  %v5342 = vpack.c.b16 %v4988, %v4982
  %v5343 = vpack.c.b16 %v4995, %v4989
  %v5344 = vpack.c.b16 %v4996, %v4990
  %v5345 = vpack.c.b16 %v4997, %v4991
  %v5346 = vpack.c.b16 %v4998, %v4992
  %v5347 = vpack.c.b16 %v4999, %v4993
  %v5348 = vpack.c.b16 %v5000, %v4994
  %v5349 = vpack.c.b16 %v5007, %v5001
  %v5350 = vpack.c.b16 %v5008, %v5002
  %v5351 = vpack.c.b16 %v5009, %v5003
  %v5352 = vpack.c.b16 %v5010, %v5004
  %v5353 = vpack.c.b16 %v5011, %v5005
  %v5354 = vpack.c.b16 %v5012, %v5006
  %v5355 = vpack.c.b16 %v5019, %v5013
  %v5356 = vpack.c.b16 %v5020, %v5014
  %v5357 = vpack.c.b16 %v5021, %v5015
  %v5358 = vpack.c.b16 %v5022, %v5016
  %v5359 = vpack.c.b16 %v5023, %v5017
  %v5360 = vpack.c.b16 %v5024, %v5018
  %v5361 = vpack.c.b16 %v5031, %v5025
  %v5362 = vpack.c.b16 %v5032, %v5026
  %v5363 = vpack.c.b16 %v5033, %v5027
  %v5364 = vpack.c.b16 %v5034, %v5028
  %v5365 = vpack.c.b16 %v5035, %v5029
  %v5366 = vpack.c.b16 %v5036, %v5030
  %v5367 = vpack.c.b16 %v5043, %v5037
  %v5368 = vpack.c.b16 %v5044, %v5038
  %v5369 = vpack.c.b16 %v5045, %v5039
  %v5370 = vpack.c.b16 %v5046, %v5040
  %v5371 = vpack.c.b16 %v5047, %v5041
  %v5372 = vpack.c.b16 %v5048, %v5042
  %v5373 = vpack.c.b16 %v5055, %v5049
  %v5374 = vpack.c.b16 %v5056, %v5050
  %v5375 = vpack.c.b16 %v5057, %v5051
  %v5376 = vpack.c.b16 %v5058, %v5052
  %v5377 = vpack.c.b16 %v5059, %v5053
  %v5378 = vpack.c.b16 %v5060, %v5054
  %v5379 = vpack.c.b16 %v5067, %v5061
  %v5380 = vpack.c.b16 %v5068, %v5062
  %v5381 = vpack.c.b16 %v5069, %v5063
  %v5382 = vpack.c.b16 %v5070, %v5064
  %v5383 = vpack.c.b16 %v5071, %v5065
  %v5384 = vpack.c.b16 %v5072, %v5066
  %v5385 = vpack.c.b16 %v5079, %v5073
  %v5386 = vpack.c.b16 %v5080, %v5074
  %v5387 = vpack.c.b16 %v5081, %v5075
  %v5388 = vpack.c.b16 %v5082, %v5076
  %v5389 = vpack.c.b16 %v5083, %v5077
  %v5390 = vpack.c.b16 %v5084, %v5078
  %v5391 = vpack.c.b16 %v5091, %v5085
  %v5392 = vpack.c.b16 %v5092, %v5086
  %v5393 = vpack.c.b16 %v5093, %v5087
  %v5394 = vpack.c.b16 %v5094, %v5088
  %v5395 = vpack.c.b16 %v5095, %v5089
  %v5396 = vpack.c.b16 %v5096, %v5090
  %v5397 = vpack.c.b16 %v5103, %v5097
  %v5398 = vpack.c.b16 %v5104, %v5098
  %v5399 = vpack.c.b16 %v5105, %v5099
  %v5400 = vpack.c.b16 %v5106, %v5100
  %v5401 = vpack.c.b16 %v5107, %v5101
  %v5402 = vpack.c.b16 %v5108, %v5102
  %v5403 = vpack.c.b16 %v5115, %v5109
  %v5404 = vpack.c.b16 %v5116, %v5110
  %v5405 = vpack.c.b16 %v5117, %v5111
  %v5406 = vpack.c.b16 %v5118, %v5112
  %v5407 = vpack.c.b16 %v5119, %v5113
  %v5408 = vpack.c.b16 %v5120, %v5114
  %5697 = vmatprep.subr.bf16.mxu0 %v5122
  %5698 = vmatpush1.bf16.msra.mxu0 %v5121
  %5699 = vmatprep.subr.bf16.mxu0 %v5128
  %5700 = vmatpush1.bf16.msra.mxu0 %v5127
  %5701 = vmatprep.subr.bf16.mxu0 %v5134
  %5702 = vmatpush1.bf16.msra.mxu0 %v5133
  %5703 = vmatprep.subr.bf16.mxu0 %v5140
  %5704 = vmatpush1.bf16.msra.mxu0 %v5139
  %5705 = vmatprep.subr.bf16.mxu0 %v5146
  %5706 = vmatpush1.bf16.msra.mxu0 %v5145
  %5707 = vmatprep.subr.bf16.mxu0 %v5152
  %5708 = vmatpush1.bf16.msra.mxu0 %v5151
  %5709 = vmatprep.subr.bf16.mxu0 %v5158
  %5710 = vmatpush1.bf16.msra.mxu0 %v5157
  %5711 = vmatprep.subr.bf16.mxu0 %v5164
  %5712 = vmatpush1.bf16.msra.mxu0 %v5163
  %5713 = vmatprep.subr.bf16.mxu0 %v5170
  %5714 = vmatpush1.bf16.msra.mxu0 %v5169
  %5715 = vmatprep.subr.bf16.mxu0 %v5176
  %5716 = vmatpush1.bf16.msra.mxu0 %v5175
  %5717 = vmatprep.subr.bf16.mxu0 %v5182
  %5718 = vmatpush1.bf16.msra.mxu0 %v5181
  %5719 = vmatprep.subr.bf16.mxu0 %v5188
  %5720 = vmatpush1.bf16.msra.mxu0 %v5187
  %5721 = vmatprep.subr.bf16.mxu0 %v5194
  %5722 = vmatpush1.bf16.msra.mxu0 %v5193
  %5723 = vmatprep.subr.bf16.mxu0 %v5200
  %5724 = vmatpush1.bf16.msra.mxu0 %v5199
  %5725 = vmatprep.subr.bf16.mxu0 %v5206
  %5726 = vmatpush1.bf16.msra.mxu0 %v5205
  %5727 = vmatprep.subr.bf16.mxu0 %v5212
  %5728 = vmatpush1.bf16.msra.mxu0 %v5211
  %5729 = vmatprep.mubr.bf16.mxu0 %v3929
  %5730 = vmatmul.mubr.bf16.gmra.mrb[0].mxu0 %v3928
  %v5731 = vpop.f32.mrb[0].mxu0
  %v5732 = vadd.f32 %v4230, %v5731
  %v5733 = vpop.f32.mrb[0].mxu0
  %v5734 = vadd.f32 %v4234, %v5733
  %v5735 = vpop.f32.mrb[0].mxu0
  %v5736 = vpop.f32.mrb[0].mxu0
  %5737 = vdwg.mxu0
  %5738 = vmatprep.subr.bf16.mxu0 %v5218
  %5739 = vmatpush1.bf16.msra.mxu0 %v5217
  %5740 = vmatprep.subr.bf16.mxu0 %v5224
  %5741 = vmatpush1.bf16.msra.mxu0 %v5223
  %5742 = vmatprep.subr.bf16.mxu0 %v5230
  %5743 = vmatpush1.bf16.msra.mxu0 %v5229
  %5744 = vmatprep.subr.bf16.mxu0 %v5236
  %5745 = vmatpush1.bf16.msra.mxu0 %v5235
  %5746 = vmatprep.subr.bf16.mxu0 %v5242
  %5747 = vmatpush1.bf16.msra.mxu0 %v5241
  %5748 = vmatprep.subr.bf16.mxu0 %v5248
  %5749 = vmatpush1.bf16.msra.mxu0 %v5247
  %5750 = vmatprep.subr.bf16.mxu0 %v5254
  %5751 = vmatpush1.bf16.msra.mxu0 %v5253
  %5752 = vmatprep.subr.bf16.mxu0 %v5260
  %5753 = vmatpush1.bf16.msra.mxu0 %v5259
  %5754 = vmatprep.subr.bf16.mxu0 %v5266
  %5755 = vmatpush1.bf16.msra.mxu0 %v5265
  %5756 = vmatprep.subr.bf16.mxu0 %v5272
  %5757 = vmatpush1.bf16.msra.mxu0 %v5271
  %5758 = vmatprep.subr.bf16.mxu0 %v5278
  %5759 = vmatpush1.bf16.msra.mxu0 %v5277
  %5760 = vmatprep.subr.bf16.mxu0 %v5284
  %5761 = vmatpush1.bf16.msra.mxu0 %v5283
  %5762 = vmatprep.subr.bf16.mxu0 %v5290
  %5763 = vmatpush1.bf16.msra.mxu0 %v5289
  %5764 = vmatprep.subr.bf16.mxu0 %v5296
  %5765 = vmatpush1.bf16.msra.mxu0 %v5295
  %5766 = vmatprep.subr.bf16.mxu0 %v5302
  %5767 = vmatpush1.bf16.msra.mxu0 %v5301
  %5768 = vmatprep.subr.bf16.mxu0 %v5308
  %5769 = vmatpush1.bf16.msra.mxu0 %v5307
  %5770 = vmatprep.mubr.bf16.mxu0 %v3931
  %5771 = vmatmul.mubr.bf16.gmra.mrb[0].mxu0 %v3930
  %v5772 = vpop.f32.mrb[0].mxu0
  %v5773 = vadd.f32 %v5732, %v5772
  %v5774 = vpop.f32.mrb[0].mxu0
  %v5775 = vadd.f32 %v5734, %v5774
  %v5776 = vpop.f32.mrb[0].mxu0
  %v5777 = vpop.f32.mrb[0].mxu0
  %5778 = vdwg.mxu0
  %5779 = vmatprep.subr.bf16.mxu0 %v5314
  %5780 = vmatpush1.bf16.msra.mxu0 %v5313
  %5781 = vmatprep.subr.bf16.mxu0 %v5320
  %5782 = vmatpush1.bf16.msra.mxu0 %v5319
  %5783 = vmatprep.subr.bf16.mxu0 %v5326
  %5784 = vmatpush1.bf16.msra.mxu0 %v5325
  %5785 = vmatprep.subr.bf16.mxu0 %v5332
  %5786 = vmatpush1.bf16.msra.mxu0 %v5331
  %5787 = vmatprep.subr.bf16.mxu0 %v5338
  %5788 = vmatpush1.bf16.msra.mxu0 %v5337
  %5789 = vmatprep.subr.bf16.mxu0 %v5344
  %5790 = vmatpush1.bf16.msra.mxu0 %v5343
  %5791 = vmatprep.subr.bf16.mxu0 %v5350
  %5792 = vmatpush1.bf16.msra.mxu0 %v5349
  %5793 = vmatprep.subr.bf16.mxu0 %v5356
  %5794 = vmatpush1.bf16.msra.mxu0 %v5355
  %5795 = vmatprep.subr.bf16.mxu0 %v5362
  %5796 = vmatpush1.bf16.msra.mxu0 %v5361
  %5797 = vmatprep.subr.bf16.mxu0 %v5368
  %5798 = vmatpush1.bf16.msra.mxu0 %v5367
  %5799 = vmatprep.subr.bf16.mxu0 %v5374
  %5800 = vmatpush1.bf16.msra.mxu0 %v5373
  %5801 = vmatprep.subr.bf16.mxu0 %v5380
  %5802 = vmatpush1.bf16.msra.mxu0 %v5379
  %5803 = vmatprep.subr.bf16.mxu0 %v5386
  %5804 = vmatpush1.bf16.msra.mxu0 %v5385
  %5805 = vmatprep.subr.bf16.mxu0 %v5392
  %5806 = vmatpush1.bf16.msra.mxu0 %v5391
  %5807 = vmatprep.subr.bf16.mxu0 %v5398
  %5808 = vmatpush1.bf16.msra.mxu0 %v5397
  %5809 = vmatprep.subr.bf16.mxu0 %v5404
  %5810 = vmatpush1.bf16.msra.mxu0 %v5403
  %5811 = vmatprep.mubr.bf16.mxu0 %v3933
  %5812 = vmatmul.mubr.bf16.gmra.mrb[0].mxu0 %v3932
  %v5813 = vpop.f32.mrb[0].mxu0
  %v5814 = vadd.f32 %v5773, %v5813
  %v5815 = vpop.f32.mrb[0].mxu0
  %v5816 = vadd.f32 %v5775, %v5815
  %v5817 = vpop.f32.mrb[0].mxu0
  %v5818 = vpop.f32.mrb[0].mxu0
  %5819 = vdwg.mxu0
  %5820 = vmatprep.subr.bf16.mxu0 %v5124
  %5821 = vmatpush1.bf16.msra.mxu0 %v5123
  %5822 = vmatprep.subr.bf16.mxu0 %v5130
  %5823 = vmatpush1.bf16.msra.mxu0 %v5129
  %5824 = vmatprep.subr.bf16.mxu0 %v5136
  %5825 = vmatpush1.bf16.msra.mxu0 %v5135
  %5826 = vmatprep.subr.bf16.mxu0 %v5142
  %5827 = vmatpush1.bf16.msra.mxu0 %v5141
  %5828 = vmatprep.subr.bf16.mxu0 %v5148
  %5829 = vmatpush1.bf16.msra.mxu0 %v5147
  %5830 = vmatprep.subr.bf16.mxu0 %v5154
  %5831 = vmatpush1.bf16.msra.mxu0 %v5153
  %5832 = vmatprep.subr.bf16.mxu0 %v5160
  %5833 = vmatpush1.bf16.msra.mxu0 %v5159
  %5834 = vmatprep.subr.bf16.mxu0 %v5166
  %5835 = vmatpush1.bf16.msra.mxu0 %v5165
  %5836 = vmatprep.subr.bf16.mxu0 %v5172
  %5837 = vmatpush1.bf16.msra.mxu0 %v5171
  %5838 = vmatprep.subr.bf16.mxu0 %v5178
  %5839 = vmatpush1.bf16.msra.mxu0 %v5177
  %5840 = vmatprep.subr.bf16.mxu0 %v5184
  %5841 = vmatpush1.bf16.msra.mxu0 %v5183
  %5842 = vmatprep.subr.bf16.mxu0 %v5190
  %5843 = vmatpush1.bf16.msra.mxu0 %v5189
  %5844 = vmatprep.subr.bf16.mxu0 %v5196
  %5845 = vmatpush1.bf16.msra.mxu0 %v5195
  %5846 = vmatprep.subr.bf16.mxu0 %v5202
  %5847 = vmatpush1.bf16.msra.mxu0 %v5201
  %5848 = vmatprep.subr.bf16.mxu0 %v5208
  %5849 = vmatpush1.bf16.msra.mxu0 %v5207
  %5850 = vmatprep.subr.bf16.mxu0 %v5214
  %5851 = vmatpush1.bf16.msra.mxu0 %v5213
  %5852 = vmatprep.mubr.bf16.mxu0 %v3929
  %5853 = vmatmul.mubr.bf16.gmra.mrb[0].mxu0 %v3928
  %v5854 = vpop.f32.mrb[0].mxu0
  %v5855 = vadd.f32 %v4238, %v5854
  %v5856 = vpop.f32.mrb[0].mxu0
  %v5857 = vadd.f32 %v4242, %v5856
  %v5858 = vpop.f32.mrb[0].mxu0
  %v5859 = vpop.f32.mrb[0].mxu0
  %5860 = vdwg.mxu0
  %5861 = vmatprep.subr.bf16.mxu0 %v5220
  %5862 = vmatpush1.bf16.msra.mxu0 %v5219
  %5863 = vmatprep.subr.bf16.mxu0 %v5226
  %5864 = vmatpush1.bf16.msra.mxu0 %v5225
  %5865 = vmatprep.subr.bf16.mxu0 %v5232
  %5866 = vmatpush1.bf16.msra.mxu0 %v5231
  %5867 = vmatprep.subr.bf16.mxu0 %v5238
  %5868 = vmatpush1.bf16.msra.mxu0 %v5237
  %5869 = vmatprep.subr.bf16.mxu0 %v5244
  %5870 = vmatpush1.bf16.msra.mxu0 %v5243
  %5871 = vmatprep.subr.bf16.mxu0 %v5250
  %5872 = vmatpush1.bf16.msra.mxu0 %v5249
  %5873 = vmatprep.subr.bf16.mxu0 %v5256
  %5874 = vmatpush1.bf16.msra.mxu0 %v5255
  %5875 = vmatprep.subr.bf16.mxu0 %v5262
  %5876 = vmatpush1.bf16.msra.mxu0 %v5261
  %5877 = vmatprep.subr.bf16.mxu0 %v5268
  %5878 = vmatpush1.bf16.msra.mxu0 %v5267
  %5879 = vmatprep.subr.bf16.mxu0 %v5274
  %5880 = vmatpush1.bf16.msra.mxu0 %v5273
  %5881 = vmatprep.subr.bf16.mxu0 %v5280
  %5882 = vmatpush1.bf16.msra.mxu0 %v5279
  %5883 = vmatprep.subr.bf16.mxu0 %v5286
  %5884 = vmatpush1.bf16.msra.mxu0 %v5285
  %5885 = vmatprep.subr.bf16.mxu0 %v5292
  %5886 = vmatpush1.bf16.msra.mxu0 %v5291
  %5887 = vmatprep.subr.bf16.mxu0 %v5298
  %5888 = vmatpush1.bf16.msra.mxu0 %v5297
  %5889 = vmatprep.subr.bf16.mxu0 %v5304
  %5890 = vmatpush1.bf16.msra.mxu0 %v5303
  %5891 = vmatprep.subr.bf16.mxu0 %v5310
  %5892 = vmatpush1.bf16.msra.mxu0 %v5309
  %5893 = vmatprep.mubr.bf16.mxu0 %v3931
  %5894 = vmatmul.mubr.bf16.gmra.mrb[0].mxu0 %v3930
  %v5895 = vpop.f32.mrb[0].mxu0
  %v5896 = vadd.f32 %v5855, %v5895
  %v5897 = vpop.f32.mrb[0].mxu0
  %v5898 = vadd.f32 %v5857, %v5897
  %v5899 = vpop.f32.mrb[0].mxu0
  %v5900 = vpop.f32.mrb[0].mxu0
  %5901 = vdwg.mxu0
  %5902 = vmatprep.subr.bf16.mxu0 %v5316
  %5903 = vmatpush1.bf16.msra.mxu0 %v5315
  %5904 = vmatprep.subr.bf16.mxu0 %v5322
  %5905 = vmatpush1.bf16.msra.mxu0 %v5321
  %5906 = vmatprep.subr.bf16.mxu0 %v5328
  %5907 = vmatpush1.bf16.msra.mxu0 %v5327
  %5908 = vmatprep.subr.bf16.mxu0 %v5334
  %5909 = vmatpush1.bf16.msra.mxu0 %v5333
  %5910 = vmatprep.subr.bf16.mxu0 %v5340
  %5911 = vmatpush1.bf16.msra.mxu0 %v5339
  %5912 = vmatprep.subr.bf16.mxu0 %v5346
  %5913 = vmatpush1.bf16.msra.mxu0 %v5345
  %5914 = vmatprep.subr.bf16.mxu0 %v5352
  %5915 = vmatpush1.bf16.msra.mxu0 %v5351
  %5916 = vmatprep.subr.bf16.mxu0 %v5358
  %5917 = vmatpush1.bf16.msra.mxu0 %v5357
  %5918 = vmatprep.subr.bf16.mxu0 %v5364
  %5919 = vmatpush1.bf16.msra.mxu0 %v5363
  %5920 = vmatprep.subr.bf16.mxu0 %v5370
  %5921 = vmatpush1.bf16.msra.mxu0 %v5369
  %5922 = vmatprep.subr.bf16.mxu0 %v5376
  %5923 = vmatpush1.bf16.msra.mxu0 %v5375
  %5924 = vmatprep.subr.bf16.mxu0 %v5382
  %5925 = vmatpush1.bf16.msra.mxu0 %v5381
  %5926 = vmatprep.subr.bf16.mxu0 %v5388
  %5927 = vmatpush1.bf16.msra.mxu0 %v5387
  %5928 = vmatprep.subr.bf16.mxu0 %v5394
  %5929 = vmatpush1.bf16.msra.mxu0 %v5393
  %5930 = vmatprep.subr.bf16.mxu0 %v5400
  %5931 = vmatpush1.bf16.msra.mxu0 %v5399
  %5932 = vmatprep.subr.bf16.mxu0 %v5406
  %5933 = vmatpush1.bf16.msra.mxu0 %v5405
  %5934 = vmatprep.mubr.bf16.mxu0 %v3933
  %5935 = vmatmul.mubr.bf16.gmra.mrb[0].mxu0 %v3932
  %v5936 = vpop.f32.mrb[0].mxu0
  %v5937 = vadd.f32 %v5896, %v5936
  %v5938 = vpop.f32.mrb[0].mxu0
  %v5939 = vadd.f32 %v5898, %v5938
  %v5940 = vpop.f32.mrb[0].mxu0
  %v5941 = vpop.f32.mrb[0].mxu0
  %5942 = vdwg.mxu0
  %5943 = vmatprep.subr.bf16.mxu0 %v5126
  %5944 = vmatpush1.bf16.msra.mxu0 %v5125
  %5945 = vmatprep.subr.bf16.mxu0 %v5132
  %5946 = vmatpush1.bf16.msra.mxu0 %v5131
  %5947 = vmatprep.subr.bf16.mxu0 %v5138
  %5948 = vmatpush1.bf16.msra.mxu0 %v5137
  %5949 = vmatprep.subr.bf16.mxu0 %v5144
  %5950 = vmatpush1.bf16.msra.mxu0 %v5143
  %5951 = vmatprep.subr.bf16.mxu0 %v5150
  %5952 = vmatpush1.bf16.msra.mxu0 %v5149
  %5953 = vmatprep.subr.bf16.mxu0 %v5156
  %5954 = vmatpush1.bf16.msra.mxu0 %v5155
  %5955 = vmatprep.subr.bf16.mxu0 %v5162
  %5956 = vmatpush1.bf16.msra.mxu0 %v5161
  %5957 = vmatprep.subr.bf16.mxu0 %v5168
  %5958 = vmatpush1.bf16.msra.mxu0 %v5167
  %5959 = vmatprep.subr.bf16.mxu0 %v5174
  %5960 = vmatpush1.bf16.msra.mxu0 %v5173
  %5961 = vmatprep.subr.bf16.mxu0 %v5180
  %5962 = vmatpush1.bf16.msra.mxu0 %v5179
  %5963 = vmatprep.subr.bf16.mxu0 %v5186
  %5964 = vmatpush1.bf16.msra.mxu0 %v5185
  %5965 = vmatprep.subr.bf16.mxu0 %v5192
  %5966 = vmatpush1.bf16.msra.mxu0 %v5191
  %5967 = vmatprep.subr.bf16.mxu0 %v5198
  %5968 = vmatpush1.bf16.msra.mxu0 %v5197
  %5969 = vmatprep.subr.bf16.mxu0 %v5204
  %5970 = vmatpush1.bf16.msra.mxu0 %v5203
  %5971 = vmatprep.subr.bf16.mxu0 %v5210
  %5972 = vmatpush1.bf16.msra.mxu0 %v5209
  %5973 = vmatprep.subr.bf16.mxu0 %v5216
  %5974 = vmatpush1.bf16.msra.mxu0 %v5215
  %5975 = vmatprep.mubr.bf16.mxu0 %v3929
  %5976 = vmatmul.mubr.bf16.gmra.mrb[0].mxu0 %v3928
  %v5977 = vpop.f32.mrb[0].mxu0
  %v5978 = vadd.f32 %v4246, %v5977
  %v5979 = vpop.f32.mrb[0].mxu0
  %v5980 = vadd.f32 %v4250, %v5979
  %v5981 = vpop.f32.mrb[0].mxu0
  %v5982 = vpop.f32.mrb[0].mxu0
  %5983 = vdwg.mxu0
  %5984 = vmatprep.subr.bf16.mxu0 %v5222
  %5985 = vmatpush1.bf16.msra.mxu0 %v5221
  %5986 = vmatprep.subr.bf16.mxu0 %v5228
  %5987 = vmatpush1.bf16.msra.mxu0 %v5227
  %5988 = vmatprep.subr.bf16.mxu0 %v5234
  %5989 = vmatpush1.bf16.msra.mxu0 %v5233
  %5990 = vmatprep.subr.bf16.mxu0 %v5240
  %5991 = vmatpush1.bf16.msra.mxu0 %v5239
  %5992 = vmatprep.subr.bf16.mxu0 %v5246
  %5993 = vmatpush1.bf16.msra.mxu0 %v5245
  %5994 = vmatprep.subr.bf16.mxu0 %v5252
  %5995 = vmatpush1.bf16.msra.mxu0 %v5251
  %5996 = vmatprep.subr.bf16.mxu0 %v5258
  %5997 = vmatpush1.bf16.msra.mxu0 %v5257
  %5998 = vmatprep.subr.bf16.mxu0 %v5264
  %5999 = vmatpush1.bf16.msra.mxu0 %v5263
  %6000 = vmatprep.subr.bf16.mxu0 %v5270
  %6001 = vmatpush1.bf16.msra.mxu0 %v5269
  %6002 = vmatprep.subr.bf16.mxu0 %v5276
  %6003 = vmatpush1.bf16.msra.mxu0 %v5275
  %6004 = vmatprep.subr.bf16.mxu0 %v5282
  %6005 = vmatpush1.bf16.msra.mxu0 %v5281
  %6006 = vmatprep.subr.bf16.mxu0 %v5288
  %6007 = vmatpush1.bf16.msra.mxu0 %v5287
  %6008 = vmatprep.subr.bf16.mxu0 %v5294
  %6009 = vmatpush1.bf16.msra.mxu0 %v5293
  %6010 = vmatprep.subr.bf16.mxu0 %v5300
  %6011 = vmatpush1.bf16.msra.mxu0 %v5299
  %6012 = vmatprep.subr.bf16.mxu0 %v5306
  %6013 = vmatpush1.bf16.msra.mxu0 %v5305
  %6014 = vmatprep.subr.bf16.mxu0 %v5312
  %6015 = vmatpush1.bf16.msra.mxu0 %v5311
  %6016 = vmatprep.mubr.bf16.mxu0 %v3931
  %6017 = vmatmul.mubr.bf16.gmra.mrb[0].mxu0 %v3930
  %v6018 = vpop.f32.mrb[0].mxu0
  %v6019 = vadd.f32 %v5978, %v6018
  %v6020 = vpop.f32.mrb[0].mxu0
  %v6021 = vadd.f32 %v5980, %v6020
  %v6022 = vpop.f32.mrb[0].mxu0
  %v6023 = vpop.f32.mrb[0].mxu0
  %6024 = vdwg.mxu0
  %6025 = vmatprep.subr.bf16.mxu0 %v5318
  %6026 = vmatpush1.bf16.msra.mxu0 %v5317
  %6027 = vmatprep.subr.bf16.mxu0 %v5324
  %6028 = vmatpush1.bf16.msra.mxu0 %v5323
  %6029 = vmatprep.subr.bf16.mxu0 %v5330
  %6030 = vmatpush1.bf16.msra.mxu0 %v5329
  %6031 = vmatprep.subr.bf16.mxu0 %v5336
  %6032 = vmatpush1.bf16.msra.mxu0 %v5335
  %6033 = vmatprep.subr.bf16.mxu0 %v5342
  %6034 = vmatpush1.bf16.msra.mxu0 %v5341
  %6035 = vmatprep.subr.bf16.mxu0 %v5348
  %6036 = vmatpush1.bf16.msra.mxu0 %v5347
  %6037 = vmatprep.subr.bf16.mxu0 %v5354
  %6038 = vmatpush1.bf16.msra.mxu0 %v5353
  %6039 = vmatprep.subr.bf16.mxu0 %v5360
  %6040 = vmatpush1.bf16.msra.mxu0 %v5359
  %6041 = vmatprep.subr.bf16.mxu0 %v5366
  %6042 = vmatpush1.bf16.msra.mxu0 %v5365
  %6043 = vmatprep.subr.bf16.mxu0 %v5372
  %6044 = vmatpush1.bf16.msra.mxu0 %v5371
  %6045 = vmatprep.subr.bf16.mxu0 %v5378
  %6046 = vmatpush1.bf16.msra.mxu0 %v5377
  %6047 = vmatprep.subr.bf16.mxu0 %v5384
  %6048 = vmatpush1.bf16.msra.mxu0 %v5383
  %6049 = vmatprep.subr.bf16.mxu0 %v5390
  %6050 = vmatpush1.bf16.msra.mxu0 %v5389
  %6051 = vmatprep.subr.bf16.mxu0 %v5396
  %6052 = vmatpush1.bf16.msra.mxu0 %v5395
  %6053 = vmatprep.subr.bf16.mxu0 %v5402
  %6054 = vmatpush1.bf16.msra.mxu0 %v5401
  %6055 = vmatprep.subr.bf16.mxu0 %v5408
  %6056 = vmatpush1.bf16.msra.mxu0 %v5407
  %6057 = vmatprep.mubr.bf16.mxu0 %v3933
  %6058 = vmatmul.mubr.bf16.gmra.mrb[0].mxu0 %v3932
  %v6059 = vpop.f32.mrb[0].mxu0
  %v6060 = vadd.f32 %v6019, %v6059
  %v6061 = vpop.f32.mrb[0].mxu0
  %v6062 = vadd.f32 %v6021, %v6061
  %v6063 = vpop.f32.mrb[0].mxu0
  %v6064 = vpop.f32.mrb[0].mxu0
  %6065 = vdwg.mxu0
  %v6072 = vcombine.low %v5814, %v5816
  %v6073 = vcombine.low %v5937, %v5939
  %v6075 = vunpack.c.l.s4 1983009808
  %v6076 = vunpack.c.0.s8 %v6075
  %v6077 = vlaneseq
  %v6078 = vshrl.u32 %v6077, 7
  %v6079 = vsub.s32 %v6076, %v6078
  %v6080 = vrot.slane %v6072, %v6079
  %v6082 = vunpack.c.l.s4 1983009808
  %v6083 = vunpack.c.0.s8 %v6082
  %v6084 = vlaneseq
  %v6085 = vshrl.u32 %v6084, 7
  %v6086 = vsub.s32 %v6083, %v6085
  %v6087 = vrot.slane %v6073, %v6086
  %v6088 = vcombine.low %v6080, %v6087
  %v6089 = vcombine.low %v6060, %v6062
  %v6091 = vunpack.c.l.s4 1983009808
  %v6092 = vunpack.c.0.s8 %v6091
  %v6093 = vlaneseq
  %v6094 = vshrl.u32 %v6093, 7
  %v6095 = vsub.s32 %v6092, %v6094
  %v6096 = vrot.slane %v6089, %v6095
  %6099 = vst [vmem:[%s7] sm:$0xff] %v6088
  %6100 = vst [vmem:[%s7 + $0x8] sm:$0xf] %v6096
  // Predicated region
  $region30: #{autoencoder_forward.1} parent=0 // pred_check
    _
  $region31: #{autoencoder_forward.1} parent=0 // pred_check_branch
    %6102 = sbr.rel (0) target = $region33
  $region32: #{autoencoder_forward.1} parent=0 // pred_region
    _
  $region33: #{autoencoder_forward.1} parent=0 // pred_fallthru
    _
  // Predicated region
  $region34: #{autoencoder_forward.1} parent=0 // pred_check
    _
  $region35: #{autoencoder_forward.1} parent=0 // pred_check_branch
    %6104 = sbr.rel (0) target = $region37
  $region36: #{autoencoder_forward.1} parent=0 // pred_region
    _
  $region37: #{autoencoder_forward.1} parent=0 // pred_fallthru
    _

</llo_original>
